<compile_context>
chip_gen: v7x
topology: tpu7x:2x2x1
jax: 0.10.0
libtpu: 0.0.40
codegen_flags: <defaults>
</compile_context>

<pallas_src>
import jax
import jax.numpy as jnp
from jax import lax
from jax.experimental import pallas as pl
from jax.experimental.pallas import tpu as pltpu

HP = 128  # padded hidden width: each LSTM gate gets its own 128-lane slot


def _vmem_spec():
    return pl.BlockSpec(memory_space=pltpu.MemorySpace.VMEM)


# ----------------------------------------------------------------------------------------
# Fused forward builder
# ----------------------------------------------------------------------------------------
def make_fused_forward(*, batch, input_size, seq_len, pred_len, label_len,
                       n_layer_lstm, num_direction, cnn_out_channel=128,
                       kernel_size=3, n_layer_cnn=2, hidden_size=48, time_feat_dim=7):
    B, S, P = batch, seq_len, pred_len
    Cin0, C, K = input_size, cnn_out_channel, kernel_size
    NC, NL, ND = n_layer_cnn, n_layer_lstm, num_direction
    H, H2, TF = hidden_size, hidden_size // 2, time_feat_dim
    Hp = HP
    pad = K // 2
    assert K % 2 == 1, "odd kernel_size required for 'same' conv padding"
    assert H <= Hp

    # number of weight arrays fed to the kernel (after x_in and time_feat)
    n_w = 2 + 4 * NC                                    # conv0 (w,b) + NC*(w,b,gamma,beta)
    for l in range(NL):
        n_w += ND * ((1 if l == 0 else ND) + 2)         # per dir: W_ih parts + W_hh + bias
    n_w += (ND + 1) + 5                                 # head: fc parts, b1, w2, b2, w3T, b3
    n_in = 2 + n_w

    def kernel(*args):
        ins = args[:n_in]
        o_ref = args[n_in]
        scr = args[n_in + 1:]
        xpad0, xpadC = scr[0], scr[1]
        xp_scr = list(scr[2:2 + ND])                    # per-direction hoisted gate inputs
        hout_scr = list(scr[2 + ND:2 + 2 * ND])         # per-direction h outputs (lane-padded)

        pos = [2]
        def nxt():
            r = ins[pos[0]]; pos[0] += 1
            return r

        x_ref, time_ref = ins[0], ins[1]

        # ------------------- CNN stack (batched M=B*S matmuls, fused LN+ReLU) ----------
        xpad0[...] = jnp.zeros(xpad0.shape, xpad0.dtype)     # pad rows stay zero afterwards
        xpadC[...] = jnp.zeros(xpadC.shape, xpadC.dtype)
        xpad0[:, pad:pad + S, :] = x_ref[...]

        def conv(pad_ref, w_ref, b_ref):
            acc = jnp.zeros((B * S, C), jnp.float32) + b_ref[...]
            for k in range(K):                               # static tap unroll
                xk = pad_ref[:, k:k + S, :].reshape(B * S, pad_ref.shape[-1])
                acc = acc + jnp.dot(xk, w_ref[k], preferred_element_type=jnp.float32)
            return acc

        y = conv(xpad0, nxt(), nxt())                        # (B*S, C)  -- conv1d (no LN)
        for _ in range(NC):
            w_i, b_i, g_i, be_i = nxt(), nxt(), nxt(), nxt()
            xpadC[:, pad:pad + S, :] = y.reshape(B, S, C)
            y = conv(xpadC, w_i, b_i)
            mean = jnp.mean(y, axis=-1, keepdims=True)
            var = jnp.mean(jnp.square(y - mean), axis=-1, keepdims=True)
            y = (y - mean) * lax.rsqrt(var + 1e-5) * g_i[...] + be_i[...]
            y = jnp.maximum(y, 0.0)

        # ------------------- (bi)LSTM stack --------------------------------------------
        x_parts = [y]                                        # list of (B*S, *) inputs
        for l in range(NL):
            n_parts = 1 if l == 0 else ND
            layer_w = []
            for d in range(ND):
                wih_parts = [nxt() for _ in range(n_parts)]
                whh, bias = nxt(), nxt()
                layer_w.append((wih_parts, whh, bias))

            # hoisted input projection: one big (B*S, Din) matmul per direction
            for d in range(ND):
                wih_parts, _, bias = layer_w[d]
                acc = jnp.zeros((B * S, 4 * Hp), jnp.float32) + bias[...]
                for xpart, wpart in zip(x_parts, wih_parts):
                    acc = acc + jnp.dot(xpart, wpart[...], preferred_element_type=jnp.float32)
                xp_scr[d][...] = acc.reshape(B, S, 4 * Hp)

            # serial recurrence; fwd/bwd share one loop, gates stay 128-lane aligned,
            # padded lanes provably stay exactly zero (zero weights/bias => h_pad == 0).
            def step(i, carry):
                new = []
                for d in range(ND):
                    h, c = carry[2 * d], carry[2 * d + 1]
                    t = i if d == 0 else (S - 1 - i)
                    g_in = xp_scr[d][:, pl.ds(t, 1), :].reshape(B, 4 * Hp)
                    gates = g_in + jnp.dot(h, layer_w[d][1][...],
                                           preferred_element_type=jnp.float32)
                    i_g = jax.nn.sigmoid(gates[:, 0 * Hp:1 * Hp])
                    f_g = jax.nn.sigmoid(gates[:, 1 * Hp:2 * Hp])
                    g_g = jnp.tanh(gates[:, 2 * Hp:3 * Hp])
                    o_g = jax.nn.sigmoid(gates[:, 3 * Hp:4 * Hp])
                    c = f_g * c + i_g * g_g
                    h = o_g * jnp.tanh(c)
                    hout_scr[d][:, pl.ds(t, 1), :] = h.reshape(B, 1, Hp)  # lane-dense store
                    new += [h, c]
                return tuple(new)

            init = tuple(jnp.zeros((B, Hp), jnp.float32) for _ in range(2 * ND))
            lax.fori_loop(0, S, step, init)
            x_parts = [hout_scr[d][...].reshape(B * S, Hp) for d in range(ND)]

        # ------------------- head: fc -> fc2 -> squeeze -> fc3 --------------------------
        w1_parts = [nxt() for _ in range(ND + 1)]            # [fwd, (bwd), time] slices of fc
        b1, w2, b2, w3T, b3 = nxt(), nxt(), nxt(), nxt(), nxt()
        feats = x_parts + [time_ref[...].reshape(B * S, TF)]
        z1 = jnp.zeros((B * S, H2), jnp.float32) + b1[...]
        for xpart, wpart in zip(feats, w1_parts):
            z1 = z1 + jnp.dot(xpart, wpart[...], preferred_element_type=jnp.float32)
        z2 = jnp.dot(z1, w2[...], preferred_element_type=jnp.float32) + b2[...]   # (B*S, 1)
        z2 = z2.reshape(B, S, 1)
        for bi in range(B):                                  # tiny static unroll over batch
            ob = jnp.sum(z2[bi] * w3T[...], axis=0, keepdims=True) + b3[...]       # (1, P)
            o_ref[pl.ds(bi, 1), :] = ob

    scratch_shapes = (
        [pltpu.VMEM((B, S + K - 1, Cin0), jnp.float32),
         pltpu.VMEM((B, S + K - 1, C), jnp.float32)]
        + [pltpu.VMEM((B, S, 4 * Hp), jnp.float32) for _ in range(ND)]
        + [pltpu.VMEM((B, S, Hp), jnp.float32) for _ in range(ND)]
    )

    fused = pl.pallas_call(
        kernel,
        out_shape=jax.ShapeDtypeStruct((B, P), jnp.float32),
        in_specs=[_vmem_spec() for _ in range(n_in)],
        out_specs=_vmem_spec(),
        scratch_shapes=scratch_shapes,
        compiler_params=pltpu.CompilerParams(vmem_limit_bytes=16 * 1024 * 1024),
    )

    @jax.jit
    def forward(flat_weights, seq_x, seq_xt, past_x, dec_input, seq_yt):
        del past_x, dec_input                                # unused, as in the PyTorch forward
        x_in = jnp.concatenate([seq_x, seq_xt], axis=-1)     # (B, S, input_size)
        look_yt = seq_yt[:, label_len:, :]
        look_xt = seq_xt[:, -P:, :]
        time_feat = jnp.concatenate([look_yt, look_xt], axis=1)
        if time_feat.shape[1] != S:
            raise ValueError("time_feat length must equal seq_len (needs 2*pred_len == seq_len)")
        return fused(x_in, time_feat, *flat_weights)

    return forward


# ----------------------------------------------------------------------------------------
# One-time weight preparation: transposes, bias fusion, 128-lane gate padding
# ----------------------------------------------------------------------------------------
def prepare_weights(p, *, pred_len, num_direction, n_layer_lstm, n_layer_cnn,
                    cnn_out_channel=128, hidden_size=48):
    C, H, Hp = cnn_out_channel, hidden_size, HP
    ND, NL, NC = num_direction, n_layer_lstm, n_layer_cnn
    H2, P = H // 2, pred_len

    flat = [jnp.transpose(p['conv1d_w'], (2, 1, 0)), p['conv1d_b'].reshape(1, C)]
    for i in range(NC):
        cw, cb = p['convs'][i]
        g, be = p['norms'][i]
        flat += [jnp.transpose(cw, (2, 1, 0)), cb.reshape(1, C),
                 g.reshape(1, C), be.reshape(1, C)]

    def pad_gates(mat, rows_real, rows_pad):
        # mat: (rows_real, 4H) -> (rows_pad, 4*Hp); each gate in its own 128-lane slot.
        out = jnp.zeros((rows_pad, 4 * Hp), jnp.float32)
        for g_ in range(4):
            out = out.at[:rows_real, g_ * Hp:g_ * Hp + H].set(mat[:, g_ * H:(g_ + 1) * H])
        return out

    dir_names = ['fwd', 'bwd'][:ND]
    for l in range(NL):
        dirs = p['lstm'][l]
        for name in dir_names:
            w_ih, w_hh, b_ih, b_hh = dirs[name]
            wihT = w_ih.T                                   # (Din, 4H), PyTorch gate order i,f,g,o
            if l == 0:
                flat.append(pad_gates(wihT, wihT.shape[0], wihT.shape[0]))
            else:
                for j in range(ND):                         # split over [h_fwd, h_bwd] inputs
                    flat.append(pad_gates(wihT[j * H:(j + 1) * H, :], H, Hp))
            flat.append(pad_gates(w_hh.T, H, Hp))
            flat.append(pad_gates((b_ih + b_hh).reshape(1, 4 * H), 1, 1))

    W1T = p['fc_w'].T                                       # (H*ND + 7, H2)
    for d in range(ND):
        flat.append(jnp.zeros((Hp, H2), jnp.float32).at[:H, :].set(W1T[d * H:(d + 1) * H, :]))
    flat.append(W1T[ND * H:, :])                            # time-feature slice (7, H2)
    flat.append(p['fc_b'].reshape(1, H2))
    flat.append(p['fc2_w'].T)                               # (H2, 1)
    flat.append(p['fc2_b'].reshape(1, 1))
    flat.append(p['fc3_w'].T)                               # (S, P)
    flat.append(p['fc3_b'].reshape(1, P))
    return flat


# ----------------------------------------------------------------------------------------
# Deterministic PyTorch-style parameter init (raw layout, prepared once above)
# ----------------------------------------------------------------------------------------
def init_params(key, input_size, seq_len, pred_len, n_layer_lstm, num_direction,
                cnn_out_channel=128, kernel_size=3, n_layer_cnn=2, hidden_size=48):
    keys = iter(jax.random.split(key, 64))

    def u(shape, fan_in):
        bound = float(1.0 / (fan_in ** 0.5))
        return jax.random.uniform(next(keys), shape, jnp.float32, -bound, bound)

    p = {}
    p['conv1d_w'] = u((cnn_out_channel, input_size, kernel_size), input_size * kernel_size)
    p['conv1d_b'] = u((cnn_out_channel,), input_size * kernel_size)
    p['convs'] = [
        (u((cnn_out_channel, cnn_out_channel, kernel_size), cnn_out_channel * kernel_size),
         u((cnn_out_channel,), cnn_out_channel * kernel_size))
        for _ in range(n_layer_cnn)]
    p['norms'] = [(jnp.ones((cnn_out_channel,), jnp.float32),
                   jnp.zeros((cnn_out_channel,), jnp.float32))
                  for _ in range(n_layer_cnn)]
    lstm = []
    for l in range(n_layer_lstm):
        din = cnn_out_channel if l == 0 else hidden_size * num_direction
        dirs = {}
        for d in (['fwd', 'bwd'] if num_direction == 2 else ['fwd']):
            dirs[d] = (u((4 * hidden_size, din), hidden_size),
                       u((4 * hidden_size, hidden_size), hidden_size),
                       u((4 * hidden_size,), hidden_size),
                       u((4 * hidden_size,), hidden_size))
        lstm.append(dirs)
    p['lstm'] = lstm
    fc_in = hidden_size * num_direction + 7
    p['fc_w'] = u((hidden_size // 2, fc_in), fc_in)
    p['fc_b'] = u((hidden_size // 2,), fc_in)
    p['fc2_w'] = u((1, hidden_size // 2), hidden_size // 2)
    p['fc2_b'] = u((1,), hidden_size // 2)
    p['fc3_w'] = u((pred_len, seq_len), seq_len)
    p['fc3_b'] = u((pred_len,), seq_len)
    return p


if __name__ == "__main__":
    B = 2
    seq_len, pred_len, label_len = 16, 8, 4
    enc_feat = 4
    time_feat_dim = 7
    input_size = enc_feat + time_feat_dim
    n_layer_lstm = 1
    bidirectional = True
    num_direction = 2 if bidirectional else 1
    n_layer_cnn = 2
    cnn_out_channel = 128
    hidden_size = 48
    kernel_size = 3

    key = jax.random.PRNGKey(0)
    kp, kx, kxt, kpx, kdi, kyt = jax.random.split(key, 6)
    params = init_params(kp, input_size, seq_len, pred_len, n_layer_lstm, num_direction,
                         cnn_out_channel, kernel_size, n_layer_cnn, hidden_size)
    flat_w = prepare_weights(params, pred_len=pred_len, num_direction=num_direction,
                             n_layer_lstm=n_layer_lstm, n_layer_cnn=n_layer_cnn,
                             cnn_out_channel=cnn_out_channel, hidden_size=hidden_size)

    seq_x = jax.random.normal(kx, (B, seq_len, enc_feat), jnp.float32)
    seq_xt = jax.random.normal(kxt, (B, seq_len, time_feat_dim), jnp.float32)
    past_x = jax.random.normal(kpx, (B, seq_len, enc_feat), jnp.float32)
    dec_input = jax.random.normal(kdi, (B, label_len + pred_len, enc_feat), jnp.float32)
    seq_yt = jax.random.normal(kyt, (B, label_len + pred_len, time_feat_dim), jnp.float32)

    forward = make_fused_forward(batch=B, input_size=input_size, seq_len=seq_len,
                                 pred_len=pred_len, label_len=label_len,
                                 n_layer_lstm=n_layer_lstm, num_direction=num_direction,
                                 cnn_out_channel=cnn_out_channel, kernel_size=kernel_size,
                                 n_layer_cnn=n_layer_cnn, hidden_size=hidden_size,
                                 time_feat_dim=time_feat_dim)

    out = forward(flat_w, seq_x, seq_xt, past_x, dec_input, seq_yt)
    jax.block_until_ready(out)
    assert out.shape == (B, pred_len), out.shape
    print("KERNEL_OK")
</pallas_src>

<mosaic_0001>
module attributes {stable_mosaic.version = 11 : i64} {
  func.func @kernel(%arg0: memref<2x16x11xf32, #tpu.memory_space<vmem>>, %arg1: memref<2x16x7xf32, #tpu.memory_space<vmem>>, %arg2: memref<3x11x128xf32, #tpu.memory_space<vmem>>, %arg3: memref<1x128xf32, #tpu.memory_space<vmem>>, %arg4: memref<3x128x128xf32, #tpu.memory_space<vmem>>, %arg5: memref<1x128xf32, #tpu.memory_space<vmem>>, %arg6: memref<1x128xf32, #tpu.memory_space<vmem>>, %arg7: memref<1x128xf32, #tpu.memory_space<vmem>>, %arg8: memref<3x128x128xf32, #tpu.memory_space<vmem>>, %arg9: memref<1x128xf32, #tpu.memory_space<vmem>>, %arg10: memref<1x128xf32, #tpu.memory_space<vmem>>, %arg11: memref<1x128xf32, #tpu.memory_space<vmem>>, %arg12: memref<128x512xf32, #tpu.memory_space<vmem>>, %arg13: memref<128x512xf32, #tpu.memory_space<vmem>>, %arg14: memref<1x512xf32, #tpu.memory_space<vmem>>, %arg15: memref<128x512xf32, #tpu.memory_space<vmem>>, %arg16: memref<128x512xf32, #tpu.memory_space<vmem>>, %arg17: memref<1x512xf32, #tpu.memory_space<vmem>>, %arg18: memref<128x24xf32, #tpu.memory_space<vmem>>, %arg19: memref<128x24xf32, #tpu.memory_space<vmem>>, %arg20: memref<7x24xf32, #tpu.memory_space<vmem>>, %arg21: memref<1x24xf32, #tpu.memory_space<vmem>>, %arg22: memref<24x1xf32, #tpu.memory_space<vmem>>, %arg23: memref<1x1xf32, #tpu.memory_space<vmem>>, %arg24: memref<16x8xf32, #tpu.memory_space<vmem>>, %arg25: memref<1x8xf32, #tpu.memory_space<vmem>>, %arg26: memref<2x8xf32, #tpu.memory_space<vmem>>, %arg27: memref<2x18x11xf32, #tpu.memory_space<vmem>>, %arg28: memref<2x18x128xf32, #tpu.memory_space<vmem>>, %arg29: memref<2x16x512xf32, #tpu.memory_space<vmem>>, %arg30: memref<2x16x512xf32, #tpu.memory_space<vmem>>, %arg31: memref<2x16x128xf32, #tpu.memory_space<vmem>>, %arg32: memref<2x16x128xf32, #tpu.memory_space<vmem>>) attributes {dimension_semantics = [], scalar_prefetch = 0 : i64, scratch_operands = 6 : i64, tpu.core_type = #tpu.core_type<tc>} {
    %cst = arith.constant 0.000000e+00 : f32
    %0 = vector.broadcast %cst : f32 to vector<2x18x11xf32>
    %c0 = arith.constant 0 : index
    %c0_0 = arith.constant 0 : index
    %c0_1 = arith.constant 0 : index
    %1 = vector.load %arg27[%c0, %c0_0, %c0_1] : memref<2x18x11xf32, #tpu.memory_space<vmem>>, vector<2x18x11xf32>
    tpu.vector_store %arg27[%c0, %c0_0, %c0_1], %0 {strides = array<i32>} : memref<2x18x11xf32, #tpu.memory_space<vmem>>, vector<2x18x11xf32>,
    %cst_2 = arith.constant 0.000000e+00 : f32
    %2 = vector.broadcast %cst_2 : f32 to vector<2x18x128xf32>
    %c0_3 = arith.constant 0 : index
    %c0_4 = arith.constant 0 : index
    %c0_5 = arith.constant 0 : index
    %3 = vector.load %arg28[%c0_3, %c0_4, %c0_5] : memref<2x18x128xf32, #tpu.memory_space<vmem>>, vector<2x18x128xf32>
    tpu.vector_store %arg28[%c0_3, %c0_4, %c0_5], %2 {strides = array<i32>} : memref<2x18x128xf32, #tpu.memory_space<vmem>>, vector<2x18x128xf32>,
    %c0_6 = arith.constant 0 : index
    %c0_7 = arith.constant 0 : index
    %c0_8 = arith.constant 0 : index
    %4 = vector.load %arg0[%c0_6, %c0_7, %c0_8] : memref<2x16x11xf32, #tpu.memory_space<vmem>>, vector<2x16x11xf32>
    %c0_9 = arith.constant 0 : index
    %c1 = arith.constant 1 : index
    %c0_10 = arith.constant 0 : index
    %5 = vector.load %arg27[%c0_9, %c1, %c0_10] : memref<2x18x11xf32, #tpu.memory_space<vmem>>, vector<2x16x11xf32>
    tpu.vector_store %arg27[%c0_9, %c1, %c0_10], %4 {strides = array<i32>} : memref<2x18x11xf32, #tpu.memory_space<vmem>>, vector<2x16x11xf32>,
    %cst_11 = arith.constant 0.000000e+00 : f32
    %6 = vector.broadcast %cst_11 : f32 to vector<32x128xf32>
    %c0_12 = arith.constant 0 : index
    %c0_13 = arith.constant 0 : index
    %7 = vector.load %arg3[%c0_12, %c0_13] : memref<1x128xf32, #tpu.memory_space<vmem>>, vector<1x128xf32>
    %8 = vector.broadcast %7 : vector<1x128xf32> to vector<32x128xf32>
    %9 = arith.addf %6, %8 : vector<32x128xf32>
    %c0_14 = arith.constant 0 : index
    %c0_15 = arith.constant 0 : index
    %c0_16 = arith.constant 0 : index
    %10 = vector.load %arg27[%c0_14, %c0_15, %c0_16] : memref<2x18x11xf32, #tpu.memory_space<vmem>>, vector<2x16x11xf32>
    %11 = vector.shape_cast %10 : vector<2x16x11xf32> to vector<32x11xf32>
    %c0_17 = arith.constant 0 : index
    %c0_18 = arith.constant 0 : index
    %c0_19 = arith.constant 0 : index
    %12 = vector.load %arg2[%c0_17, %c0_18, %c0_19] : memref<3x11x128xf32, #tpu.memory_space<vmem>>, vector<1x11x128xf32>
    %13 = vector.shape_cast %12 : vector<1x11x128xf32> to vector<11x128xf32>
    %cst_20 = arith.constant dense<0.000000e+00> : vector<32x128xf32>
    %14 = tpu.matmul %11, %13, %cst_20 {dimension_numbers = #tpu.dot_dimension_numbers<[1], [0], [0], [1], [0, 0, 1, 1], [], []>} : vector<32x11xf32>, vector<11x128xf32>, vector<32x128xf32> -> vector<32x128xf32>
    %15 = arith.addf %9, %14 : vector<32x128xf32>
    %c0_21 = arith.constant 0 : index
    %c1_22 = arith.constant 1 : index
    %c0_23 = arith.constant 0 : index
    %16 = vector.load %arg27[%c0_21, %c1_22, %c0_23] : memref<2x18x11xf32, #tpu.memory_space<vmem>>, vector<2x16x11xf32>
    %17 = vector.shape_cast %16 : vector<2x16x11xf32> to vector<32x11xf32>
    %c1_24 = arith.constant 1 : index
    %c0_25 = arith.constant 0 : index
    %c0_26 = arith.constant 0 : index
    %18 = vector.load %arg2[%c1_24, %c0_25, %c0_26] : memref<3x11x128xf32, #tpu.memory_space<vmem>>, vector<1x11x128xf32>
    %19 = vector.shape_cast %18 : vector<1x11x128xf32> to vector<11x128xf32>
    %cst_27 = arith.constant dense<0.000000e+00> : vector<32x128xf32>
    %20 = tpu.matmul %17, %19, %cst_27 {dimension_numbers = #tpu.dot_dimension_numbers<[1], [0], [0], [1], [0, 0, 1, 1], [], []>} : vector<32x11xf32>, vector<11x128xf32>, vector<32x128xf32> -> vector<32x128xf32>
    %21 = arith.addf %15, %20 : vector<32x128xf32>
    %c0_28 = arith.constant 0 : index
    %c2 = arith.constant 2 : index
    %c0_29 = arith.constant 0 : index
    %22 = vector.load %arg27[%c0_28, %c2, %c0_29] : memref<2x18x11xf32, #tpu.memory_space<vmem>>, vector<2x16x11xf32>
    %23 = vector.shape_cast %22 : vector<2x16x11xf32> to vector<32x11xf32>
    %c2_30 = arith.constant 2 : index
    %c0_31 = arith.constant 0 : index
    %c0_32 = arith.constant 0 : index
    %24 = vector.load %arg2[%c2_30, %c0_31, %c0_32] : memref<3x11x128xf32, #tpu.memory_space<vmem>>, vector<1x11x128xf32>
    %25 = vector.shape_cast %24 : vector<1x11x128xf32> to vector<11x128xf32>
    %cst_33 = arith.constant dense<0.000000e+00> : vector<32x128xf32>
    %26 = tpu.matmul %23, %25, %cst_33 {dimension_numbers = #tpu.dot_dimension_numbers<[1], [0], [0], [1], [0, 0, 1, 1], [], []>} : vector<32x11xf32>, vector<11x128xf32>, vector<32x128xf32> -> vector<32x128xf32>
    %27 = arith.addf %21, %26 : vector<32x128xf32>
    %28 = vector.shape_cast %27 : vector<32x128xf32> to vector<2x16x128xf32>
    %c0_34 = arith.constant 0 : index
    %c1_35 = arith.constant 1 : index
    %c0_36 = arith.constant 0 : index
    %29 = vector.load %arg28[%c0_34, %c1_35, %c0_36] : memref<2x18x128xf32, #tpu.memory_space<vmem>>, vector<2x16x128xf32>
    tpu.vector_store %arg28[%c0_34, %c1_35, %c0_36], %28 {strides = array<i32>} : memref<2x18x128xf32, #tpu.memory_space<vmem>>, vector<2x16x128xf32>,
    %cst_37 = arith.constant 0.000000e+00 : f32
    %30 = vector.broadcast %cst_37 : f32 to vector<32x128xf32>
    %c0_38 = arith.constant 0 : index
    %c0_39 = arith.constant 0 : index
    %31 = vector.load %arg5[%c0_38, %c0_39] : memref<1x128xf32, #tpu.memory_space<vmem>>, vector<1x128xf32>
    %32 = vector.broadcast %31 : vector<1x128xf32> to vector<32x128xf32>
    %33 = arith.addf %30, %32 : vector<32x128xf32>
    %c0_40 = arith.constant 0 : index
    %c0_41 = arith.constant 0 : index
    %c0_42 = arith.constant 0 : index
    %34 = vector.load %arg28[%c0_40, %c0_41, %c0_42] : memref<2x18x128xf32, #tpu.memory_space<vmem>>, vector<2x16x128xf32>
    %35 = vector.shape_cast %34 : vector<2x16x128xf32> to vector<32x128xf32>
    %c0_43 = arith.constant 0 : index
    %c0_44 = arith.constant 0 : index
    %c0_45 = arith.constant 0 : index
    %36 = vector.load %arg4[%c0_43, %c0_44, %c0_45] : memref<3x128x128xf32, #tpu.memory_space<vmem>>, vector<1x128x128xf32>
    %37 = vector.shape_cast %36 : vector<1x128x128xf32> to vector<128x128xf32>
    %cst_46 = arith.constant dense<0.000000e+00> : vector<32x128xf32>
    %38 = tpu.matmul %35, %37, %cst_46 {dimension_numbers = #tpu.dot_dimension_numbers<[1], [0], [0], [1], [0, 0, 1, 1], [], []>} : vector<32x128xf32>, vector<128x128xf32>, vector<32x128xf32> -> vector<32x128xf32>
    %39 = arith.addf %33, %38 : vector<32x128xf32>
    %c0_47 = arith.constant 0 : index
    %c1_48 = arith.constant 1 : index
    %c0_49 = arith.constant 0 : index
    %40 = vector.load %arg28[%c0_47, %c1_48, %c0_49] : memref<2x18x128xf32, #tpu.memory_space<vmem>>, vector<2x16x128xf32>
    %41 = vector.shape_cast %40 : vector<2x16x128xf32> to vector<32x128xf32>
    %c1_50 = arith.constant 1 : index
    %c0_51 = arith.constant 0 : index
    %c0_52 = arith.constant 0 : index
    %42 = vector.load %arg4[%c1_50, %c0_51, %c0_52] : memref<3x128x128xf32, #tpu.memory_space<vmem>>, vector<1x128x128xf32>
    %43 = vector.shape_cast %42 : vector<1x128x128xf32> to vector<128x128xf32>
    %cst_53 = arith.constant dense<0.000000e+00> : vector<32x128xf32>
    %44 = tpu.matmul %41, %43, %cst_53 {dimension_numbers = #tpu.dot_dimension_numbers<[1], [0], [0], [1], [0, 0, 1, 1], [], []>} : vector<32x128xf32>, vector<128x128xf32>, vector<32x128xf32> -> vector<32x128xf32>
    %45 = arith.addf %39, %44 : vector<32x128xf32>
    %c0_54 = arith.constant 0 : index
    %c2_55 = arith.constant 2 : index
    %c0_56 = arith.constant 0 : index
    %46 = vector.load %arg28[%c0_54, %c2_55, %c0_56] : memref<2x18x128xf32, #tpu.memory_space<vmem>>, vector<2x16x128xf32>
    %47 = vector.shape_cast %46 : vector<2x16x128xf32> to vector<32x128xf32>
    %c2_57 = arith.constant 2 : index
    %c0_58 = arith.constant 0 : index
    %c0_59 = arith.constant 0 : index
    %48 = vector.load %arg4[%c2_57, %c0_58, %c0_59] : memref<3x128x128xf32, #tpu.memory_space<vmem>>, vector<1x128x128xf32>
    %49 = vector.shape_cast %48 : vector<1x128x128xf32> to vector<128x128xf32>
    %cst_60 = arith.constant dense<0.000000e+00> : vector<32x128xf32>
    %50 = tpu.matmul %47, %49, %cst_60 {dimension_numbers = #tpu.dot_dimension_numbers<[1], [0], [0], [1], [0, 0, 1, 1], [], []>} : vector<32x128xf32>, vector<128x128xf32>, vector<32x128xf32> -> vector<32x128xf32>
    %51 = arith.addf %45, %50 : vector<32x128xf32>
    %cst_61 = arith.constant dense<0.000000e+00> : vector<32xf32>
    %52 = vector.multi_reduction <add>, %51, %cst_61 [1] : vector<32x128xf32> to vector<32xf32>
    %53 = vector.shape_cast %52 : vector<32xf32> to vector<32x1xf32>
    %cst_62 = arith.constant 1.280000e+02 : f32
    %54 = vector.broadcast %cst_62 : f32 to vector<32x1xf32>
    %55 = arith.divf %53, %54 : vector<32x1xf32>
    %56 = vector.broadcast %55 : vector<32x1xf32> to vector<32x128xf32>
    %57 = arith.subf %51, %56 : vector<32x128xf32>
    %58 = arith.mulf %57, %57 : vector<32x128xf32>
    %cst_63 = arith.constant dense<0.000000e+00> : vector<32xf32>
    %59 = vector.multi_reduction <add>, %58, %cst_63 [1] : vector<32x128xf32> to vector<32xf32>
    %60 = vector.shape_cast %59 : vector<32xf32> to vector<32x1xf32>
    %cst_64 = arith.constant 1.280000e+02 : f32
    %61 = vector.broadcast %cst_64 : f32 to vector<32x1xf32>
    %62 = arith.divf %60, %61 : vector<32x1xf32>
    %63 = vector.broadcast %55 : vector<32x1xf32> to vector<32x128xf32>
    %64 = arith.subf %51, %63 : vector<32x128xf32>
    %cst_65 = arith.constant 9.99999974E-6 : f32
    %65 = vector.broadcast %cst_65 : f32 to vector<32x1xf32>
    %66 = arith.addf %62, %65 : vector<32x1xf32>
    %67 = math.rsqrt %66 : vector<32x1xf32>
    %68 = vector.broadcast %67 : vector<32x1xf32> to vector<32x128xf32>
    %69 = arith.mulf %64, %68 : vector<32x128xf32>
    %c0_66 = arith.constant 0 : index
    %c0_67 = arith.constant 0 : index
    %70 = vector.load %arg6[%c0_66, %c0_67] : memref<1x128xf32, #tpu.memory_space<vmem>>, vector<1x128xf32>
    %71 = vector.broadcast %70 : vector<1x128xf32> to vector<32x128xf32>
    %72 = arith.mulf %69, %71 : vector<32x128xf32>
    %c0_68 = arith.constant 0 : index
    %c0_69 = arith.constant 0 : index
    %73 = vector.load %arg7[%c0_68, %c0_69] : memref<1x128xf32, #tpu.memory_space<vmem>>, vector<1x128xf32>
    %74 = vector.broadcast %73 : vector<1x128xf32> to vector<32x128xf32>
    %75 = arith.addf %72, %74 : vector<32x128xf32>
    %cst_70 = arith.constant 0.000000e+00 : f32
    %76 = vector.broadcast %cst_70 : f32 to vector<32x128xf32>
    %77 = arith.maximumf %75, %76 : vector<32x128xf32>
    %78 = vector.shape_cast %77 : vector<32x128xf32> to vector<2x16x128xf32>
    %c0_71 = arith.constant 0 : index
    %c1_72 = arith.constant 1 : index
    %c0_73 = arith.constant 0 : index
    %79 = vector.load %arg28[%c0_71, %c1_72, %c0_73] : memref<2x18x128xf32, #tpu.memory_space<vmem>>, vector<2x16x128xf32>
    tpu.vector_store %arg28[%c0_71, %c1_72, %c0_73], %78 {strides = array<i32>} : memref<2x18x128xf32, #tpu.memory_space<vmem>>, vector<2x16x128xf32>,
    %cst_74 = arith.constant 0.000000e+00 : f32
    %80 = vector.broadcast %cst_74 : f32 to vector<32x128xf32>
    %c0_75 = arith.constant 0 : index
    %c0_76 = arith.constant 0 : index
    %81 = vector.load %arg9[%c0_75, %c0_76] : memref<1x128xf32, #tpu.memory_space<vmem>>, vector<1x128xf32>
    %82 = vector.broadcast %81 : vector<1x128xf32> to vector<32x128xf32>
    %83 = arith.addf %80, %82 : vector<32x128xf32>
    %c0_77 = arith.constant 0 : index
    %c0_78 = arith.constant 0 : index
    %c0_79 = arith.constant 0 : index
    %84 = vector.load %arg28[%c0_77, %c0_78, %c0_79] : memref<2x18x128xf32, #tpu.memory_space<vmem>>, vector<2x16x128xf32>
    %85 = vector.shape_cast %84 : vector<2x16x128xf32> to vector<32x128xf32>
    %c0_80 = arith.constant 0 : index
    %c0_81 = arith.constant 0 : index
    %c0_82 = arith.constant 0 : index
    %86 = vector.load %arg8[%c0_80, %c0_81, %c0_82] : memref<3x128x128xf32, #tpu.memory_space<vmem>>, vector<1x128x128xf32>
    %87 = vector.shape_cast %86 : vector<1x128x128xf32> to vector<128x128xf32>
    %cst_83 = arith.constant dense<0.000000e+00> : vector<32x128xf32>
    %88 = tpu.matmul %85, %87, %cst_83 {dimension_numbers = #tpu.dot_dimension_numbers<[1], [0], [0], [1], [0, 0, 1, 1], [], []>} : vector<32x128xf32>, vector<128x128xf32>, vector<32x128xf32> -> vector<32x128xf32>
    %89 = arith.addf %83, %88 : vector<32x128xf32>
    %c0_84 = arith.constant 0 : index
    %c1_85 = arith.constant 1 : index
    %c0_86 = arith.constant 0 : index
    %90 = vector.load %arg28[%c0_84, %c1_85, %c0_86] : memref<2x18x128xf32, #tpu.memory_space<vmem>>, vector<2x16x128xf32>
    %91 = vector.shape_cast %90 : vector<2x16x128xf32> to vector<32x128xf32>
    %c1_87 = arith.constant 1 : index
    %c0_88 = arith.constant 0 : index
    %c0_89 = arith.constant 0 : index
    %92 = vector.load %arg8[%c1_87, %c0_88, %c0_89] : memref<3x128x128xf32, #tpu.memory_space<vmem>>, vector<1x128x128xf32>
    %93 = vector.shape_cast %92 : vector<1x128x128xf32> to vector<128x128xf32>
    %cst_90 = arith.constant dense<0.000000e+00> : vector<32x128xf32>
    %94 = tpu.matmul %91, %93, %cst_90 {dimension_numbers = #tpu.dot_dimension_numbers<[1], [0], [0], [1], [0, 0, 1, 1], [], []>} : vector<32x128xf32>, vector<128x128xf32>, vector<32x128xf32> -> vector<32x128xf32>
    %95 = arith.addf %89, %94 : vector<32x128xf32>
    %c0_91 = arith.constant 0 : index
    %c2_92 = arith.constant 2 : index
    %c0_93 = arith.constant 0 : index
    %96 = vector.load %arg28[%c0_91, %c2_92, %c0_93] : memref<2x18x128xf32, #tpu.memory_space<vmem>>, vector<2x16x128xf32>
    %97 = vector.shape_cast %96 : vector<2x16x128xf32> to vector<32x128xf32>
    %c2_94 = arith.constant 2 : index
    %c0_95 = arith.constant 0 : index
    %c0_96 = arith.constant 0 : index
    %98 = vector.load %arg8[%c2_94, %c0_95, %c0_96] : memref<3x128x128xf32, #tpu.memory_space<vmem>>, vector<1x128x128xf32>
    %99 = vector.shape_cast %98 : vector<1x128x128xf32> to vector<128x128xf32>
    %cst_97 = arith.constant dense<0.000000e+00> : vector<32x128xf32>
    %100 = tpu.matmul %97, %99, %cst_97 {dimension_numbers = #tpu.dot_dimension_numbers<[1], [0], [0], [1], [0, 0, 1, 1], [], []>} : vector<32x128xf32>, vector<128x128xf32>, vector<32x128xf32> -> vector<32x128xf32>
    %101 = arith.addf %95, %100 : vector<32x128xf32>
    %cst_98 = arith.constant dense<0.000000e+00> : vector<32xf32>
    %102 = vector.multi_reduction <add>, %101, %cst_98 [1] : vector<32x128xf32> to vector<32xf32>
    %103 = vector.shape_cast %102 : vector<32xf32> to vector<32x1xf32>
    %cst_99 = arith.constant 1.280000e+02 : f32
    %104 = vector.broadcast %cst_99 : f32 to vector<32x1xf32>
    %105 = arith.divf %103, %104 : vector<32x1xf32>
    %106 = vector.broadcast %105 : vector<32x1xf32> to vector<32x128xf32>
    %107 = arith.subf %101, %106 : vector<32x128xf32>
    %108 = arith.mulf %107, %107 : vector<32x128xf32>
    %cst_100 = arith.constant dense<0.000000e+00> : vector<32xf32>
    %109 = vector.multi_reduction <add>, %108, %cst_100 [1] : vector<32x128xf32> to vector<32xf32>
    %110 = vector.shape_cast %109 : vector<32xf32> to vector<32x1xf32>
    %cst_101 = arith.constant 1.280000e+02 : f32
    %111 = vector.broadcast %cst_101 : f32 to vector<32x1xf32>
    %112 = arith.divf %110, %111 : vector<32x1xf32>
    %113 = vector.broadcast %105 : vector<32x1xf32> to vector<32x128xf32>
    %114 = arith.subf %101, %113 : vector<32x128xf32>
    %cst_102 = arith.constant 9.99999974E-6 : f32
    %115 = vector.broadcast %cst_102 : f32 to vector<32x1xf32>
    %116 = arith.addf %112, %115 : vector<32x1xf32>
    %117 = math.rsqrt %116 : vector<32x1xf32>
    %118 = vector.broadcast %117 : vector<32x1xf32> to vector<32x128xf32>
    %119 = arith.mulf %114, %118 : vector<32x128xf32>
    %c0_103 = arith.constant 0 : index
    %c0_104 = arith.constant 0 : index
    %120 = vector.load %arg10[%c0_103, %c0_104] : memref<1x128xf32, #tpu.memory_space<vmem>>, vector<1x128xf32>
    %121 = vector.broadcast %120 : vector<1x128xf32> to vector<32x128xf32>
    %122 = arith.mulf %119, %121 : vector<32x128xf32>
    %c0_105 = arith.constant 0 : index
    %c0_106 = arith.constant 0 : index
    %123 = vector.load %arg11[%c0_105, %c0_106] : memref<1x128xf32, #tpu.memory_space<vmem>>, vector<1x128xf32>
    %124 = vector.broadcast %123 : vector<1x128xf32> to vector<32x128xf32>
    %125 = arith.addf %122, %124 : vector<32x128xf32>
    %cst_107 = arith.constant 0.000000e+00 : f32
    %126 = vector.broadcast %cst_107 : f32 to vector<32x128xf32>
    %127 = arith.maximumf %125, %126 : vector<32x128xf32>
    %cst_108 = arith.constant 0.000000e+00 : f32
    %128 = vector.broadcast %cst_108 : f32 to vector<32x512xf32>
    %c0_109 = arith.constant 0 : index
    %c0_110 = arith.constant 0 : index
    %129 = vector.load %arg14[%c0_109, %c0_110] : memref<1x512xf32, #tpu.memory_space<vmem>>, vector<1x512xf32>
    %130 = vector.broadcast %129 : vector<1x512xf32> to vector<32x512xf32>
    %131 = arith.addf %128, %130 : vector<32x512xf32>
    %c0_111 = arith.constant 0 : index
    %c0_112 = arith.constant 0 : index
    %132 = vector.load %arg12[%c0_111, %c0_112] : memref<128x512xf32, #tpu.memory_space<vmem>>, vector<128x512xf32>
    %cst_113 = arith.constant dense<0.000000e+00> : vector<32x512xf32>
    %133 = tpu.matmul %127, %132, %cst_113 {dimension_numbers = #tpu.dot_dimension_numbers<[1], [0], [0], [1], [0, 0, 1, 1], [], []>} : vector<32x128xf32>, vector<128x512xf32>, vector<32x512xf32> -> vector<32x512xf32>
    %134 = arith.addf %131, %133 : vector<32x512xf32>
    %135 = vector.shape_cast %134 : vector<32x512xf32> to vector<2x16x512xf32>
    %c0_114 = arith.constant 0 : index
    %c0_115 = arith.constant 0 : index
    %c0_116 = arith.constant 0 : index
    %136 = vector.load %arg29[%c0_114, %c0_115, %c0_116] : memref<2x16x512xf32, #tpu.memory_space<vmem>>, vector<2x16x512xf32>
    tpu.vector_store %arg29[%c0_114, %c0_115, %c0_116], %135 {strides = array<i32>} : memref<2x16x512xf32, #tpu.memory_space<vmem>>, vector<2x16x512xf32>,
    %cst_117 = arith.constant 0.000000e+00 : f32
    %137 = vector.broadcast %cst_117 : f32 to vector<32x512xf32>
    %c0_118 = arith.constant 0 : index
    %c0_119 = arith.constant 0 : index
    %138 = vector.load %arg17[%c0_118, %c0_119] : memref<1x512xf32, #tpu.memory_space<vmem>>, vector<1x512xf32>
    %139 = vector.broadcast %138 : vector<1x512xf32> to vector<32x512xf32>
    %140 = arith.addf %137, %139 : vector<32x512xf32>
    %c0_120 = arith.constant 0 : index
    %c0_121 = arith.constant 0 : index
    %141 = vector.load %arg15[%c0_120, %c0_121] : memref<128x512xf32, #tpu.memory_space<vmem>>, vector<128x512xf32>
    %cst_122 = arith.constant dense<0.000000e+00> : vector<32x512xf32>
    %142 = tpu.matmul %127, %141, %cst_122 {dimension_numbers = #tpu.dot_dimension_numbers<[1], [0], [0], [1], [0, 0, 1, 1], [], []>} : vector<32x128xf32>, vector<128x512xf32>, vector<32x512xf32> -> vector<32x512xf32>
    %143 = arith.addf %140, %142 : vector<32x512xf32>
    %144 = vector.shape_cast %143 : vector<32x512xf32> to vector<2x16x512xf32>
    %c0_123 = arith.constant 0 : index
    %c0_124 = arith.constant 0 : index
    %c0_125 = arith.constant 0 : index
    %145 = vector.load %arg30[%c0_123, %c0_124, %c0_125] : memref<2x16x512xf32, #tpu.memory_space<vmem>>, vector<2x16x512xf32>
    tpu.vector_store %arg30[%c0_123, %c0_124, %c0_125], %144 {strides = array<i32>} : memref<2x16x512xf32, #tpu.memory_space<vmem>>, vector<2x16x512xf32>,
    %cst_126 = arith.constant 0.000000e+00 : f32
    %146 = vector.broadcast %cst_126 : f32 to vector<2x128xf32>
    %cst_127 = arith.constant 0.000000e+00 : f32
    %147 = vector.broadcast %cst_127 : f32 to vector<2x128xf32>
    %cst_128 = arith.constant 0.000000e+00 : f32
    %148 = vector.broadcast %cst_128 : f32 to vector<2x128xf32>
    %cst_129 = arith.constant 0.000000e+00 : f32
    %149 = vector.broadcast %cst_129 : f32 to vector<2x128xf32>
    %c0_i32 = arith.constant 0 : i32
    %c16_i32 = arith.constant 16 : i32
    %150 = arith.addi %c0_i32, %c16_i32 : i32
    %c1_i32 = arith.constant 1 : i32
    %151:4 = scf.for %arg33 = %c0_i32 to %150 step %c1_i32 iter_args(%arg34 = %146, %arg35 = %147, %arg36 = %148, %arg37 = %149) -> (vector<2x128xf32>, vector<2x128xf32>, vector<2x128xf32>, vector<2x128xf32>)  : i32 {
      %c0_171 = arith.constant 0 : index
      %197 = arith.index_cast %arg33 : i32 to index
      %c0_172 = arith.constant 0 : index
      %198 = vector.load %arg29[%c0_171, %197, %c0_172] : memref<2x16x512xf32, #tpu.memory_space<vmem>>, vector<2x1x512xf32>
      %199 = vector.shape_cast %198 : vector<2x1x512xf32> to vector<2x512xf32>
      %c0_173 = arith.constant 0 : index
      %c0_174 = arith.constant 0 : index
      %200 = vector.load %arg13[%c0_173, %c0_174] : memref<128x512xf32, #tpu.memory_space<vmem>>, vector<128x512xf32>
      %cst_175 = arith.constant dense<0.000000e+00> : vector<2x512xf32>
      %201 = tpu.matmul %arg34, %200, %cst_175 {dimension_numbers = #tpu.dot_dimension_numbers<[1], [0], [0], [1], [0, 0, 1, 1], [], []>} : vector<2x128xf32>, vector<128x512xf32>, vector<2x512xf32> -> vector<2x512xf32>
      %202 = arith.addf %199, %201 : vector<2x512xf32>
      %203 = vector.extract_strided_slice %202 {offsets = [0, 0], sizes = [2, 128], strides = [1, 1]} : vector<2x512xf32> to vector<2x128xf32>
      %204 = arith.negf %203 : vector<2x128xf32>
      %205 = math.exp %204 : vector<2x128xf32>
      %cst_176 = arith.constant 1.000000e+00 : f32
      %206 = vector.broadcast %cst_176 : f32 to vector<2x128xf32>
      %207 = arith.addf %206, %205 : vector<2x128xf32>
      %208 = arith.divf %206, %207 : vector<2x128xf32>
      %209 = vector.extract_strided_slice %202 {offsets = [0, 128], sizes = [2, 128], strides = [1, 1]} : vector<2x512xf32> to vector<2x128xf32>
      %210 = arith.negf %209 : vector<2x128xf32>
      %211 = math.exp %210 : vector<2x128xf32>
      %cst_177 = arith.constant 1.000000e+00 : f32
      %212 = vector.broadcast %cst_177 : f32 to vector<2x128xf32>
      %213 = arith.addf %212, %211 : vector<2x128xf32>
      %214 = arith.divf %212, %213 : vector<2x128xf32>
      %215 = vector.extract_strided_slice %202 {offsets = [0, 256], sizes = [2, 128], strides = [1, 1]} : vector<2x512xf32> to vector<2x128xf32>
      %216 = math.tanh %215 : vector<2x128xf32>
      %217 = vector.extract_strided_slice %202 {offsets = [0, 384], sizes = [2, 128], strides = [1, 1]} : vector<2x512xf32> to vector<2x128xf32>
      %218 = arith.negf %217 : vector<2x128xf32>
      %219 = math.exp %218 : vector<2x128xf32>
      %cst_178 = arith.constant 1.000000e+00 : f32
      %220 = vector.broadcast %cst_178 : f32 to vector<2x128xf32>
      %221 = arith.addf %220, %219 : vector<2x128xf32>
      %222 = arith.divf %220, %221 : vector<2x128xf32>
      %223 = arith.mulf %214, %arg35 : vector<2x128xf32>
      %224 = arith.mulf %208, %216 : vector<2x128xf32>
      %225 = arith.addf %223, %224 : vector<2x128xf32>
      %226 = math.tanh %225 : vector<2x128xf32>
      %227 = arith.mulf %222, %226 : vector<2x128xf32>
      %228 = vector.shape_cast %227 : vector<2x128xf32> to vector<2x1x128xf32>
      %c0_179 = arith.constant 0 : index
      %229 = arith.index_cast %arg33 : i32 to index
      %c0_180 = arith.constant 0 : index
      %230 = vector.load %arg31[%c0_179, %229, %c0_180] : memref<2x16x128xf32, #tpu.memory_space<vmem>>, vector<2x1x128xf32>
      tpu.vector_store %arg31[%c0_179, %229, %c0_180], %228 {strides = array<i32>} : memref<2x16x128xf32, #tpu.memory_space<vmem>>, vector<2x1x128xf32>,
      %c15_i32 = arith.constant 15 : i32
      %231 = arith.subi %c15_i32, %arg33 : i32
      %c0_181 = arith.constant 0 : index
      %232 = arith.index_cast %231 : i32 to index
      %c0_182 = arith.constant 0 : index
      %233 = vector.load %arg30[%c0_181, %232, %c0_182] : memref<2x16x512xf32, #tpu.memory_space<vmem>>, vector<2x1x512xf32>
      %234 = vector.shape_cast %233 : vector<2x1x512xf32> to vector<2x512xf32>
      %c0_183 = arith.constant 0 : index
      %c0_184 = arith.constant 0 : index
      %235 = vector.load %arg16[%c0_183, %c0_184] : memref<128x512xf32, #tpu.memory_space<vmem>>, vector<128x512xf32>
      %cst_185 = arith.constant dense<0.000000e+00> : vector<2x512xf32>
      %236 = tpu.matmul %arg36, %235, %cst_185 {dimension_numbers = #tpu.dot_dimension_numbers<[1], [0], [0], [1], [0, 0, 1, 1], [], []>} : vector<2x128xf32>, vector<128x512xf32>, vector<2x512xf32> -> vector<2x512xf32>
      %237 = arith.addf %234, %236 : vector<2x512xf32>
      %238 = vector.extract_strided_slice %237 {offsets = [0, 0], sizes = [2, 128], strides = [1, 1]} : vector<2x512xf32> to vector<2x128xf32>
      %239 = arith.negf %238 : vector<2x128xf32>
      %240 = math.exp %239 : vector<2x128xf32>
      %cst_186 = arith.constant 1.000000e+00 : f32
      %241 = vector.broadcast %cst_186 : f32 to vector<2x128xf32>
      %242 = arith.addf %241, %240 : vector<2x128xf32>
      %243 = arith.divf %241, %242 : vector<2x128xf32>
      %244 = vector.extract_strided_slice %237 {offsets = [0, 128], sizes = [2, 128], strides = [1, 1]} : vector<2x512xf32> to vector<2x128xf32>
      %245 = arith.negf %244 : vector<2x128xf32>
      %246 = math.exp %245 : vector<2x128xf32>
      %cst_187 = arith.constant 1.000000e+00 : f32
      %247 = vector.broadcast %cst_187 : f32 to vector<2x128xf32>
      %248 = arith.addf %247, %246 : vector<2x128xf32>
      %249 = arith.divf %247, %248 : vector<2x128xf32>
      %250 = vector.extract_strided_slice %237 {offsets = [0, 256], sizes = [2, 128], strides = [1, 1]} : vector<2x512xf32> to vector<2x128xf32>
      %251 = math.tanh %250 : vector<2x128xf32>
      %252 = vector.extract_strided_slice %237 {offsets = [0, 384], sizes = [2, 128], strides = [1, 1]} : vector<2x512xf32> to vector<2x128xf32>
      %253 = arith.negf %252 : vector<2x128xf32>
      %254 = math.exp %253 : vector<2x128xf32>
      %cst_188 = arith.constant 1.000000e+00 : f32
      %255 = vector.broadcast %cst_188 : f32 to vector<2x128xf32>
      %256 = arith.addf %255, %254 : vector<2x128xf32>
      %257 = arith.divf %255, %256 : vector<2x128xf32>
      %258 = arith.mulf %249, %arg37 : vector<2x128xf32>
      %259 = arith.mulf %243, %251 : vector<2x128xf32>
      %260 = arith.addf %258, %259 : vector<2x128xf32>
      %261 = math.tanh %260 : vector<2x128xf32>
      %262 = arith.mulf %257, %261 : vector<2x128xf32>
      %263 = vector.shape_cast %262 : vector<2x128xf32> to vector<2x1x128xf32>
      %c0_189 = arith.constant 0 : index
      %264 = arith.index_cast %231 : i32 to index
      %c0_190 = arith.constant 0 : index
      %265 = vector.load %arg32[%c0_189, %264, %c0_190] : memref<2x16x128xf32, #tpu.memory_space<vmem>>, vector<2x1x128xf32>
      tpu.vector_store %arg32[%c0_189, %264, %c0_190], %263 {strides = array<i32>} : memref<2x16x128xf32, #tpu.memory_space<vmem>>, vector<2x1x128xf32>,
      scf.yield %227, %225, %262, %260 : vector<2x128xf32>, vector<2x128xf32>, vector<2x128xf32>, vector<2x128xf32>
    }
    %c16_i32_130 = arith.constant 16 : i32
    %c0_131 = arith.constant 0 : index
    %c0_132 = arith.constant 0 : index
    %c0_133 = arith.constant 0 : index
    %152 = vector.load %arg31[%c0_131, %c0_132, %c0_133] : memref<2x16x128xf32, #tpu.memory_space<vmem>>, vector<2x16x128xf32>
    %153 = vector.shape_cast %152 : vector<2x16x128xf32> to vector<32x128xf32>
    %c0_134 = arith.constant 0 : index
    %c0_135 = arith.constant 0 : index
    %c0_136 = arith.constant 0 : index
    %154 = vector.load %arg32[%c0_134, %c0_135, %c0_136] : memref<2x16x128xf32, #tpu.memory_space<vmem>>, vector<2x16x128xf32>
    %155 = vector.shape_cast %154 : vector<2x16x128xf32> to vector<32x128xf32>
    %c0_137 = arith.constant 0 : index
    %c0_138 = arith.constant 0 : index
    %c0_139 = arith.constant 0 : index
    %156 = vector.load %arg1[%c0_137, %c0_138, %c0_139] : memref<2x16x7xf32, #tpu.memory_space<vmem>>, vector<2x16x7xf32>
    %157 = vector.shape_cast %156 : vector<2x16x7xf32> to vector<32x7xf32>
    %cst_140 = arith.constant 0.000000e+00 : f32
    %158 = vector.broadcast %cst_140 : f32 to vector<32x24xf32>
    %c0_141 = arith.constant 0 : index
    %c0_142 = arith.constant 0 : index
    %159 = vector.load %arg21[%c0_141, %c0_142] : memref<1x24xf32, #tpu.memory_space<vmem>>, vector<1x24xf32>
    %160 = vector.broadcast %159 : vector<1x24xf32> to vector<32x24xf32>
    %161 = arith.addf %158, %160 : vector<32x24xf32>
    %c0_143 = arith.constant 0 : index
    %c0_144 = arith.constant 0 : index
    %162 = vector.load %arg18[%c0_143, %c0_144] : memref<128x24xf32, #tpu.memory_space<vmem>>, vector<128x24xf32>
    %cst_145 = arith.constant dense<0.000000e+00> : vector<32x24xf32>
    %163 = tpu.matmul %153, %162, %cst_145 {dimension_numbers = #tpu.dot_dimension_numbers<[1], [0], [0], [1], [0, 0, 1, 1], [], []>} : vector<32x128xf32>, vector<128x24xf32>, vector<32x24xf32> -> vector<32x24xf32>
    %164 = arith.addf %161, %163 : vector<32x24xf32>
    %c0_146 = arith.constant 0 : index
    %c0_147 = arith.constant 0 : index
    %165 = vector.load %arg19[%c0_146, %c0_147] : memref<128x24xf32, #tpu.memory_space<vmem>>, vector<128x24xf32>
    %cst_148 = arith.constant dense<0.000000e+00> : vector<32x24xf32>
    %166 = tpu.matmul %155, %165, %cst_148 {dimension_numbers = #tpu.dot_dimension_numbers<[1], [0], [0], [1], [0, 0, 1, 1], [], []>} : vector<32x128xf32>, vector<128x24xf32>, vector<32x24xf32> -> vector<32x24xf32>
    %167 = arith.addf %164, %166 : vector<32x24xf32>
    %c0_149 = arith.constant 0 : index
    %c0_150 = arith.constant 0 : index
    %168 = vector.load %arg20[%c0_149, %c0_150] : memref<7x24xf32, #tpu.memory_space<vmem>>, vector<7x24xf32>
    %cst_151 = arith.constant dense<0.000000e+00> : vector<32x24xf32>
    %169 = tpu.matmul %157, %168, %cst_151 {dimension_numbers = #tpu.dot_dimension_numbers<[1], [0], [0], [1], [0, 0, 1, 1], [], []>} : vector<32x7xf32>, vector<7x24xf32>, vector<32x24xf32> -> vector<32x24xf32>
    %170 = arith.addf %167, %169 : vector<32x24xf32>
    %c0_152 = arith.constant 0 : index
    %c0_153 = arith.constant 0 : index
    %171 = vector.load %arg22[%c0_152, %c0_153] : memref<24x1xf32, #tpu.memory_space<vmem>>, vector<24x1xf32>
    %cst_154 = arith.constant dense<0.000000e+00> : vector<32x1xf32>
    %172 = tpu.matmul %170, %171, %cst_154 {dimension_numbers = #tpu.dot_dimension_numbers<[1], [0], [0], [1], [0, 0, 1, 1], [], []>} : vector<32x24xf32>, vector<24x1xf32>, vector<32x1xf32> -> vector<32x1xf32>
    %c0_155 = arith.constant 0 : index
    %c0_156 = arith.constant 0 : index
    %173 = vector.load %arg23[%c0_155, %c0_156] : memref<1x1xf32, #tpu.memory_space<vmem>>, vector<1x1xf32>
    %174 = vector.broadcast %173 : vector<1x1xf32> to vector<32x1xf32>
    %175 = arith.addf %172, %174 : vector<32x1xf32>
    %176 = vector.shape_cast %175 : vector<32x1xf32> to vector<2x16x1xf32>
    %177 = vector.extract_strided_slice %176 {offsets = [0, 0, 0], sizes = [1, 16, 1], strides = [1, 1, 1]} : vector<2x16x1xf32> to vector<1x16x1xf32>
    %178 = vector.shape_cast %177 : vector<1x16x1xf32> to vector<16x1xf32>
    %c0_157 = arith.constant 0 : index
    %c0_158 = arith.constant 0 : index
    %179 = vector.load %arg24[%c0_157, %c0_158] : memref<16x8xf32, #tpu.memory_space<vmem>>, vector<16x8xf32>
    %180 = vector.broadcast %178 : vector<16x1xf32> to vector<16x8xf32>
    %181 = arith.mulf %180, %179 : vector<16x8xf32>
    %cst_159 = arith.constant dense<0.000000e+00> : vector<8xf32>
    %182 = vector.multi_reduction <add>, %181, %cst_159 [0] : vector<16x8xf32> to vector<8xf32>
    %183 = vector.shape_cast %182 : vector<8xf32> to vector<1x8xf32>
    %c0_160 = arith.constant 0 : index
    %c0_161 = arith.constant 0 : index
    %184 = vector.load %arg25[%c0_160, %c0_161] : memref<1x8xf32, #tpu.memory_space<vmem>>, vector<1x8xf32>
    %185 = arith.addf %183, %184 : vector<1x8xf32>
    %c0_162 = arith.constant 0 : index
    %c0_163 = arith.constant 0 : index
    %186 = vector.load %arg26[%c0_162, %c0_163] : memref<2x8xf32, #tpu.memory_space<vmem>>, vector<1x8xf32>
    tpu.vector_store %arg26[%c0_162, %c0_163], %185 {strides = array<i32>} : memref<2x8xf32, #tpu.memory_space<vmem>>, vector<1x8xf32>,
    %187 = vector.extract_strided_slice %176 {offsets = [1, 0, 0], sizes = [1, 16, 1], strides = [1, 1, 1]} : vector<2x16x1xf32> to vector<1x16x1xf32>
    %188 = vector.shape_cast %187 : vector<1x16x1xf32> to vector<16x1xf32>
    %c0_164 = arith.constant 0 : index
    %c0_165 = arith.constant 0 : index
    %189 = vector.load %arg24[%c0_164, %c0_165] : memref<16x8xf32, #tpu.memory_space<vmem>>, vector<16x8xf32>
    %190 = vector.broadcast %188 : vector<16x1xf32> to vector<16x8xf32>
    %191 = arith.mulf %190, %189 : vector<16x8xf32>
    %cst_166 = arith.constant dense<0.000000e+00> : vector<8xf32>
    %192 = vector.multi_reduction <add>, %191, %cst_166 [0] : vector<16x8xf32> to vector<8xf32>
    %193 = vector.shape_cast %192 : vector<8xf32> to vector<1x8xf32>
    %c0_167 = arith.constant 0 : index
    %c0_168 = arith.constant 0 : index
    %194 = vector.load %arg25[%c0_167, %c0_168] : memref<1x8xf32, #tpu.memory_space<vmem>>, vector<1x8xf32>
    %195 = arith.addf %193, %194 : vector<1x8xf32>
    %c1_169 = arith.constant 1 : index
    %c0_170 = arith.constant 0 : index
    %196 = vector.load %arg26[%c1_169, %c0_170] : memref<2x8xf32, #tpu.memory_space<vmem>>, vector<1x8xf32>
    tpu.vector_store %arg26[%c1_169, %c0_170], %195 {strides = array<i32>} : memref<2x8xf32, #tpu.memory_space<vmem>>, vector<1x8xf32>,
    return
  }
}

</mosaic_0001>

<llo_original>
// kernel: forward.1
$region0: #{forward.1}
  #allocation0 [shape = 'u32[]', space=smem, size = 0x4, offset = 0x4, fixed_abs, tag = 'smem constant byte address 0x4 - core index']
  #allocation1 [shape = 'u32[144,128]{1,0:T(1,128)}', space=vmem, size = 0x12000, scoped, tag = 'internal scratch']
  #allocation2 [shape = 'f32[2,18,11]{2,1,0:T(8,128)}', space=vmem, size = 0x6000, scoped, tag = 'scratch operand']
  #allocation3 [shape = 'f32[2,18,128]{2,1,0:T(8,128)}', space=vmem, size = 0x6000, scoped, tag = 'scratch operand']
  #allocation4 [shape = 'f32[2,16,512]{2,1,0:T(8,128)}', space=vmem, size = 0x10000, scoped, tag = 'scratch operand']
  #allocation5 [shape = 'f32[2,16,512]{2,1,0:T(8,128)}', space=vmem, size = 0x10000, scoped, tag = 'scratch operand']
  #allocation6 [shape = 'f32[2,16,128]{2,1,0:T(8,128)}', space=vmem, size = 0x4000, scoped, tag = 'scratch operand']
  #allocation7 [shape = 'f32[2,16,128]{2,1,0:T(8,128)}', space=vmem, size = 0x4000, scoped, tag = 'scratch operand']
  #allocation8 [shape = 'f32[1,1]{1,0:T(1,128)S(1)}', space=vmem, size = 0x200, scoped, tag = 'scoped memory for forward.1']
  %s0 = inlined_call_operand.vmem [shape: f32[2,16,11], index: 0, kind: input, shape index: {}]
  %s1 = inlined_call_operand.vmem [shape: f32[2,16,7], index: 1, kind: input, shape index: {}]
  %s2 = inlined_call_operand.vmem [shape: f32[3,11,128], index: 2, kind: input, shape index: {}]
  %s3 = inlined_call_operand.vmem [shape: f32[1,128], index: 3, kind: input, shape index: {}]
  %s4 = inlined_call_operand.hbm [shape: f32[3,128,128], index: 4, kind: input, shape index: {}]
  %s5 = inlined_call_operand.vmem [shape: f32[1,128], index: 5, kind: input, shape index: {}]
  %s6 = inlined_call_operand.vmem [shape: f32[1,128], index: 6, kind: input, shape index: {}]
  %s7 = inlined_call_operand.vmem [shape: f32[1,128], index: 7, kind: input, shape index: {}]
  %s8 = inlined_call_operand.hbm [shape: f32[3,128,128], index: 8, kind: input, shape index: {}]
  %s9 = inlined_call_operand.vmem [shape: f32[1,128], index: 9, kind: input, shape index: {}]
  %s10 = inlined_call_operand.vmem [shape: f32[1,128], index: 10, kind: input, shape index: {}]
  %s11 = inlined_call_operand.vmem [shape: f32[1,128], index: 11, kind: input, shape index: {}]
  %s12 = inlined_call_operand.vmem [shape: f32[128,512], index: 12, kind: input, shape index: {}]
  %s13 = inlined_call_operand.hbm [shape: f32[128,512], index: 13, kind: input, shape index: {}]
  %s14 = inlined_call_operand.vmem [shape: f32[1,512], index: 14, kind: input, shape index: {}]
  %s15 = inlined_call_operand.hbm [shape: f32[128,512], index: 15, kind: input, shape index: {}]
  %s16 = inlined_call_operand.hbm [shape: f32[128,512], index: 16, kind: input, shape index: {}]
  %s17 = inlined_call_operand.vmem [shape: f32[1,512], index: 17, kind: input, shape index: {}]
  %s18 = inlined_call_operand.vmem [shape: f32[128,24], index: 18, kind: input, shape index: {}]
  %s19 = inlined_call_operand.vmem [shape: f32[128,24], index: 19, kind: input, shape index: {}]
  %s20 = inlined_call_operand.vmem [shape: f32[7,24], index: 20, kind: input, shape index: {}]
  %s21 = inlined_call_operand.vmem [shape: f32[1,24], index: 21, kind: input, shape index: {}]
  %s22 = inlined_call_operand.vmem [shape: f32[24,1], index: 22, kind: input, shape index: {}]
  %s23 = inlined_call_operand.<no memory space> [shape: f32[1,1], index: 23, kind: input, shape index: {}]
  %s24 = inlined_call_operand.vmem [shape: f32[16,8], index: 24, kind: input, shape index: {}]
  %s25 = inlined_call_operand.vmem [shape: f32[1,8], index: 25, kind: input, shape index: {}]
  %s26 = inlined_call_operand.hbm [shape: f32[2,8], index: 26, kind: output, shape index: {}]
  %s27 = sld [smem:[#allocation0]]
  $region141: #{forward.1} parent=0
    _
  %s29 = ssub.s32 1, %s27
  %s30 = scalar_select 0, %s29, %s27
  %v31 = vstv %s23
  %32 = vst [vmem:[#allocation8] sm:$0x1] %v31
  $region1: #{forward.1} parent=0
    #allocation9 [shape = 'u8[196608]{0}', space=vmem, size = 0x30000, scoped, tag = 'input window, operand 4, single buffered']
    #allocation10 [shape = 's32[1]{0}', space=sflag, size = 0x4, scoped, tag = 'scoped memory for forward.1']
    #allocation11 [shape = 's32[1]{0}', space=sflag, size = 0x4, scoped, tag = 'scoped memory for forward.1']
    #allocation12 [shape = 'u8[196608]{0}', space=vmem, size = 0x30000, scoped, tag = 'input window, operand 8, single buffered']
    #allocation13 [shape = 's32[1]{0}', space=sflag, size = 0x4, scoped, tag = 'scoped memory for forward.1']
    #allocation14 [shape = 'u8[262144]{0}', space=vmem, size = 0x40000, scoped, tag = 'input window, operand 13, single buffered']
    #allocation15 [shape = 'u8[262144]{0}', space=vmem, size = 0x40000, scoped, tag = 'input window, operand 15, single buffered']
    #allocation16 [shape = 's32[1]{0}', space=sflag, size = 0x4, scoped, tag = 'scoped memory for forward.1']
    #allocation17 [shape = 'u8[262144]{0}', space=vmem, size = 0x40000, scoped, tag = 'input window, operand 16, single buffered']
    #allocation18 [shape = 'u8[1024]{0}', space=vmem, size = 0x400, scoped, tag = 'output window, operand 0, single buffered']
    %33 = vsyncpa [#allocation10], 0
    %34 = vsyncpa [#allocation13], 0
    %35 = vsyncpa [#allocation16], 0
    %36 = vsyncpa [#allocation11], 0
    // Predicated region
    $region2: #{forward.1} parent=1 // pred_check
      _
    $region3: #{forward.1} parent=1 // pred_check_branch
      %38 = sbr.rel (0) target = $region5
    $region4: #{forward.1} parent=1 // pred_region
      _
    $region5: #{forward.1} parent=1 // pred_fallthru
      _
    // Predicated region
    $region6: #{forward.1} parent=1 // pred_check
      _
    $region7: #{forward.1} parent=1 // pred_check_branch
      %40 = sbr.rel (0) target = $region9
    $region8: #{forward.1} parent=1 // pred_region
      _
    $region9: #{forward.1} parent=1 // pred_fallthru
      _
    // Predicated region
    $region10: #{forward.1} parent=1 // pred_check
      _
    $region11: #{forward.1} parent=1 // pred_check_branch
      %42 = sbr.rel (0) target = $region13
    $region12: #{forward.1} parent=1 // pred_region
      _
    $region13: #{forward.1} parent=1 // pred_fallthru
      _
    // Predicated region
    $region14: #{forward.1} parent=1 // pred_check
      _
    $region15: #{forward.1} parent=1 // pred_check_branch
      %44 = sbr.rel (0) target = $region17
    $region16: #{forward.1} parent=1 // pred_region
      _
    $region17: #{forward.1} parent=1 // pred_fallthru
      _
    // Predicated region
    $region18: #{forward.1} parent=1 // pred_check
      _
    $region19: #{forward.1} parent=1 // pred_check_branch
      %46 = sbr.rel (0) target = $region21
    $region20: #{forward.1} parent=1 // pred_region
      %s48 = ssub.s32 6144, 6144
      %49 = vsyncadd [#allocation10], %s48
      %s50 = sshll.u32 [#allocation9], 4
      %s51 = int_to_ptr.vmem [resolvable:$true] %s50
      %56 = dma.hbm_to_vmem [thread:$0]  %s4, 6144, %s51, [#allocation10], 128, 128, 8
    $region21: #{forward.1} parent=1 // pred_fallthru
      _
    // Predicated region
    $region22: #{forward.1} parent=1 // pred_check
      _
    $region23: #{forward.1} parent=1 // pred_check_branch
      %58 = sbr.rel (0) target = $region25
    $region24: #{forward.1} parent=1 // pred_region
      _
    $region25: #{forward.1} parent=1 // pred_fallthru
      _
    // Predicated region
    $region26: #{forward.1} parent=1 // pred_check
      _
    $region27: #{forward.1} parent=1 // pred_check_branch
      %60 = sbr.rel (0) target = $region29
    $region28: #{forward.1} parent=1 // pred_region
      _
    $region29: #{forward.1} parent=1 // pred_fallthru
      _
    // Predicated region
    $region30: #{forward.1} parent=1 // pred_check
      _
    $region31: #{forward.1} parent=1 // pred_check_branch
      %62 = sbr.rel (0) target = $region33
    $region32: #{forward.1} parent=1 // pred_region
      _
    $region33: #{forward.1} parent=1 // pred_fallthru
      _
    // Predicated region
    $region34: #{forward.1} parent=1 // pred_check
      _
    $region35: #{forward.1} parent=1 // pred_check_branch
      %64 = sbr.rel (0) target = $region37
    $region36: #{forward.1} parent=1 // pred_region
      %s66 = ssub.s32 6144, 6144
      %67 = vsyncadd [#allocation13], %s66
      %s68 = sshll.u32 [#allocation12], 4
      %s69 = int_to_ptr.vmem [resolvable:$true] %s68
      %74 = dma.hbm_to_vmem [thread:$0]  %s8, 6144, %s69, [#allocation13], 128, 128, 8
    $region37: #{forward.1} parent=1 // pred_fallthru
      _
    // Predicated region
    $region38: #{forward.1} parent=1 // pred_check
      _
    $region39: #{forward.1} parent=1 // pred_check_branch
      %76 = sbr.rel (0) target = $region41
    $region40: #{forward.1} parent=1 // pred_region
      _
    $region41: #{forward.1} parent=1 // pred_fallthru
      _
    // Predicated region
    $region42: #{forward.1} parent=1 // pred_check
      _
    $region43: #{forward.1} parent=1 // pred_check_branch
      %78 = sbr.rel (0) target = $region45
    $region44: #{forward.1} parent=1 // pred_region
      _
    $region45: #{forward.1} parent=1 // pred_fallthru
      _
    // Predicated region
    $region46: #{forward.1} parent=1 // pred_check
      _
    $region47: #{forward.1} parent=1 // pred_check_branch
      %80 = sbr.rel (0) target = $region49
    $region48: #{forward.1} parent=1 // pred_region
      _
    $region49: #{forward.1} parent=1 // pred_fallthru
      _
    // Predicated region
    $region50: #{forward.1} parent=1 // pred_check
      _
    $region51: #{forward.1} parent=1 // pred_check_branch
      %82 = sbr.rel (0) target = $region53
    $region52: #{forward.1} parent=1 // pred_region
      _
    $region53: #{forward.1} parent=1 // pred_fallthru
      _
    // Predicated region
    $region54: #{forward.1} parent=1 // pred_check
      _
    $region55: #{forward.1} parent=1 // pred_check_branch
      %84 = sbr.rel (0) target = $region57
    $region56: #{forward.1} parent=1 // pred_region
      %s86 = ssub.s32 8192, 8192
      %87 = vsyncadd [#allocation13], %s86
      %s88 = sshll.u32 [#allocation14], 4
      %s89 = int_to_ptr.vmem [resolvable:$true] %s88
      %94 = dma.hbm_to_vmem [thread:$0]  %s13, 8192, %s89, [#allocation13], 512, 512, 32
    $region57: #{forward.1} parent=1 // pred_fallthru
      _
    // Predicated region
    $region58: #{forward.1} parent=1 // pred_check
      _
    $region59: #{forward.1} parent=1 // pred_check_branch
      %96 = sbr.rel (0) target = $region61
    $region60: #{forward.1} parent=1 // pred_region
      _
    $region61: #{forward.1} parent=1 // pred_fallthru
      _
    // Predicated region
    $region62: #{forward.1} parent=1 // pred_check
      _
    $region63: #{forward.1} parent=1 // pred_check_branch
      %98 = sbr.rel (0) target = $region65
    $region64: #{forward.1} parent=1 // pred_region
      %s100 = ssub.s32 8192, 8192
      %101 = vsyncadd [#allocation16], %s100
      %s102 = sshll.u32 [#allocation15], 4
      %s103 = int_to_ptr.vmem [resolvable:$true] %s102
      %108 = dma.hbm_to_vmem [thread:$0]  %s15, 8192, %s103, [#allocation16], 512, 512, 32
    $region65: #{forward.1} parent=1 // pred_fallthru
      _
    // Predicated region
    $region66: #{forward.1} parent=1 // pred_check
      _
    $region67: #{forward.1} parent=1 // pred_check_branch
      %110 = sbr.rel (0) target = $region69
    $region68: #{forward.1} parent=1 // pred_region
      %s112 = ssub.s32 8192, 8192
      %113 = vsyncadd [#allocation16], %s112
      %s114 = sshll.u32 [#allocation17], 4
      %s115 = int_to_ptr.vmem [resolvable:$true] %s114
      %120 = dma.hbm_to_vmem [thread:$0]  %s16, 8192, %s115, [#allocation16], 512, 512, 32
    $region69: #{forward.1} parent=1 // pred_fallthru
      _
    // Predicated region
    $region70: #{forward.1} parent=1 // pred_check
      _
    $region71: #{forward.1} parent=1 // pred_check_branch
      %122 = sbr.rel (0) target = $region73
    $region72: #{forward.1} parent=1 // pred_region
      _
    $region73: #{forward.1} parent=1 // pred_fallthru
      _
    // Predicated region
    $region74: #{forward.1} parent=1 // pred_check
      _
    $region75: #{forward.1} parent=1 // pred_check_branch
      %124 = sbr.rel (0) target = $region77
    $region76: #{forward.1} parent=1 // pred_region
      _
    $region77: #{forward.1} parent=1 // pred_fallthru
      _
    // Predicated region
    $region78: #{forward.1} parent=1 // pred_check
      _
    $region79: #{forward.1} parent=1 // pred_check_branch
      %126 = sbr.rel (0) target = $region81
    $region80: #{forward.1} parent=1 // pred_region
      _
    $region81: #{forward.1} parent=1 // pred_fallthru
      _
    // Predicated region
    $region82: #{forward.1} parent=1 // pred_check
      _
    $region83: #{forward.1} parent=1 // pred_check_branch
      %128 = sbr.rel (0) target = $region85
    $region84: #{forward.1} parent=1 // pred_region
      _
    $region85: #{forward.1} parent=1 // pred_fallthru
      _
    // Predicated region
    $region86: #{forward.1} parent=1 // pred_check
      _
    $region87: #{forward.1} parent=1 // pred_check_branch
      %130 = sbr.rel (0) target = $region89
    $region88: #{forward.1} parent=1 // pred_region
      _
    $region89: #{forward.1} parent=1 // pred_fallthru
      _
    // Predicated region
    $region90: #{forward.1} parent=1 // pred_check
      _
    $region91: #{forward.1} parent=1 // pred_check_branch
      %132 = sbr.rel (0) target = $region93
    $region92: #{forward.1} parent=1 // pred_region
      _
    $region93: #{forward.1} parent=1 // pred_fallthru
      _
    // Predicated region
    $region94: #{forward.1} parent=1 // pred_check
      _
    $region95: #{forward.1} parent=1 // pred_check_branch
      %134 = sbr.rel (0) target = $region97
    $region96: #{forward.1} parent=1 // pred_region
      _
    $region97: #{forward.1} parent=1 // pred_fallthru
      _
    // Predicated region
    $region98: #{forward.1} parent=1 // pred_check
      _
    $region99: #{forward.1} parent=1 // pred_check_branch
      %136 = sbr.rel (0) target = $region101
    $region100: #{forward.1} parent=1 // pred_region
      _
    $region101: #{forward.1} parent=1 // pred_fallthru
      _
    // Predicated region
    $region102: #{forward.1} parent=1 // pred_check
      _
    $region103: #{forward.1} parent=1 // pred_check_branch
      %138 = sbr.rel (0) target = $region105
    $region104: #{forward.1} parent=1 // pred_region
      _
    $region105: #{forward.1} parent=1 // pred_fallthru
      _
    // Predicated region
    $region106: #{forward.1} parent=1 // pred_check
      _
    $region107: #{forward.1} parent=1 // pred_check_branch
      %140 = sbr.rel (0) target = $region109
    $region108: #{forward.1} parent=1 // pred_region
      %141 = dma.done [#allocation10], 6144
    $region109: #{forward.1} parent=1 // pred_fallthru
      _
    // Predicated region
    $region110: #{forward.1} parent=1 // pred_check
      _
    $region111: #{forward.1} parent=1 // pred_check_branch
      %143 = sbr.rel (0) target = $region113
    $region112: #{forward.1} parent=1 // pred_region
      %144 = dma.done [#allocation13], 6144
    $region113: #{forward.1} parent=1 // pred_fallthru
      _
    // Predicated region
    $region114: #{forward.1} parent=1 // pred_check
      _
    $region115: #{forward.1} parent=1 // pred_check_branch
      %146 = sbr.rel (0) target = $region117
    $region116: #{forward.1} parent=1 // pred_region
      %147 = dma.done [#allocation13], 8192
    $region117: #{forward.1} parent=1 // pred_fallthru
      _
    // Predicated region
    $region118: #{forward.1} parent=1 // pred_check
      _
    $region119: #{forward.1} parent=1 // pred_check_branch
      %149 = sbr.rel (0) target = $region121
    $region120: #{forward.1} parent=1 // pred_region
      %150 = dma.done [#allocation16], 8192
    $region121: #{forward.1} parent=1 // pred_fallthru
      _
    // Predicated region
    $region122: #{forward.1} parent=1 // pred_check
      _
    $region123: #{forward.1} parent=1 // pred_check_branch
      %152 = sbr.rel (0) target = $region125
    $region124: #{forward.1} parent=1 // pred_region
      %153 = dma.done [#allocation16], 8192
    $region125: #{forward.1} parent=1 // pred_fallthru
      _
    %vm154 = vcmask 89088
    %155 = vst.msk [vmem:[#allocation2] sm:$0xff] %vm154, 0.0
    %156 = vst.msk [vmem:[#allocation2 + $0x8] sm:$0xff] %vm154, 0.0
    %vm157 = vcmask 82944
    %158 = vst.msk [vmem:[#allocation2 + $0x10] sm:$0x3] %vm157, 0.0
    %159 = vst.msk [vmem:[#allocation2 + $0x18] sm:$0xff] %vm154, 0.0
    %160 = vst.msk [vmem:[#allocation2 + $0x20] sm:$0xff] %vm154, 0.0
    %161 = vst.msk [vmem:[#allocation2 + $0x28] sm:$0x3] %vm157, 0.0
    %162 = vst [vmem:[#allocation3] sm:$0xff] 0.0
    %163 = vst [vmem:[#allocation3 + $0x8] sm:$0xff] 0.0
    %164 = vst [vmem:[#allocation3 + $0x10] sm:$0x3] 0.0
    %165 = vst [vmem:[#allocation3 + $0x18] sm:$0xff] 0.0
    %166 = vst [vmem:[#allocation3 + $0x20] sm:$0xff] 0.0
    %167 = vst [vmem:[#allocation3 + $0x28] sm:$0x3] 0.0
    %v168 = vld [vmem:[%s0] sm:$0xff]
    %v169 = vld [vmem:[%s0 + $0x8] sm:$0xff]
    %v170 = vld [vmem:[%s0 + $0x10] sm:$0xff]
    %v171 = vld [vmem:[%s0 + $0x18] sm:$0xff]
    %172 = vst.msk [vmem:[#allocation2 + $0x1] sm:$0xff] %vm154, %v168
    %173 = vst.msk [vmem:[#allocation2 + $0x9] sm:$0xff] %vm154, %v169
    %174 = vst.msk [vmem:[#allocation2 + $0x19] sm:$0xff] %vm154, %v170
    %175 = vst.msk [vmem:[#allocation2 + $0x21] sm:$0xff] %vm154, %v171
    %v176 = vld [vmem:[%s3] sm:$0x1]
    %v178 = vlaneseq
    %v179 = vshrl.u32 %v178, 7
    %v180 = vsub.s32 0, %v179
    %v181 = vrot.slane %v176, %v180
    %v183 = vadd.f32 %v181, 0.0
    %v184 = vld [vmem:[#allocation2] sm:$0xff]
    %v185 = vld [vmem:[#allocation2 + $0x8] sm:$0xff]
    %v186 = vld [vmem:[#allocation2 + $0x18] sm:$0xff]
    %v187 = vld [vmem:[#allocation2 + $0x20] sm:$0xff]
    %v188 = vld [vmem:[%s2] sm:$0xff]
    %v189 = vld [vmem:[%s2 + $0x8] sm:$0x7]
    %v191 = vsel %vm154, %v184, 0
    %v194 = vsel %vm154, %v185, 0
    %v197 = vsel %vm154, %v186, 0
    %v200 = vsel %vm154, %v187, 0
    %vm202 = vcmask 1042432
    %v204 = vsel %vm202, %v189, 0
    %206 = vmatprep.subr.mxu0 0.0
    %207 = vmatpush1.msra.mxu0 %v188
    %208 = vmatprep.subr.mxu0 0.0
    %209 = vmatpush1.msra.mxu0 %v204
    %210 = vmatprep.subr.mxu0 0.0
    %211 = vmatpush1.msra.mxu0 0.0
    %212 = vmatprep.subr.mxu0 0.0
    %213 = vmatpush1.msra.mxu0 0.0
    %214 = vmatprep.subr.mxu0 0.0
    %215 = vmatpush1.msra.mxu0 0.0
    %216 = vmatprep.subr.mxu0 0.0
    %217 = vmatpush1.msra.mxu0 0.0
    %218 = vmatprep.subr.mxu0 0.0
    %219 = vmatpush1.msra.mxu0 0.0
    %220 = vmatprep.subr.mxu0 0.0
    %221 = vmatpush1.msra.mxu0 0.0
    %222 = vmatprep.subr.mxu0 0.0
    %223 = vmatpush1.msra.mxu0 0.0
    %224 = vmatprep.subr.mxu0 0.0
    %225 = vmatpush1.msra.mxu0 0.0
    %226 = vmatprep.subr.mxu0 0.0
    %227 = vmatpush1.msra.mxu0 0.0
    %228 = vmatprep.subr.mxu0 0.0
    %229 = vmatpush1.msra.mxu0 0.0
    %230 = vmatprep.subr.mxu0 0.0
    %231 = vmatpush1.msra.mxu0 0.0
    %232 = vmatprep.subr.mxu0 0.0
    %233 = vmatpush1.msra.mxu0 0.0
    %234 = vmatprep.subr.mxu0 0.0
    %235 = vmatpush1.msra.mxu0 0.0
    %236 = vmatprep.subr.mxu0 0.0
    %237 = vmatpush1.msra.mxu0 0.0
    %238 = vmatprep.subr.mxu0 0.0
    %239 = vmatpush1.msra.mxu0 0.0
    %240 = vmatprep.subr.mxu0 0.0
    %241 = vmatpush1.msra.mxu0 0.0
    %242 = vmatprep.subr.mxu0 0.0
    %243 = vmatpush1.msra.mxu0 0.0
    %244 = vmatprep.subr.mxu0 0.0
    %245 = vmatpush1.msra.mxu0 0.0
    %246 = vmatprep.subr.mxu0 0.0
    %247 = vmatpush1.msra.mxu0 0.0
    %248 = vmatprep.subr.mxu0 0.0
    %249 = vmatpush1.msra.mxu0 0.0
    %250 = vmatprep.subr.mxu0 0.0
    %251 = vmatpush1.msra.mxu0 0.0
    %252 = vmatprep.subr.mxu0 0.0
    %253 = vmatpush1.msra.mxu0 0.0
    %254 = vmatprep.subr.mxu0 0.0
    %255 = vmatpush1.msra.mxu0 0.0
    %256 = vmatprep.subr.mxu0 0.0
    %257 = vmatpush1.msra.mxu0 0.0
    %258 = vmatprep.subr.mxu0 0.0
    %259 = vmatpush1.msra.mxu0 0.0
    %260 = vmatprep.subr.mxu0 0.0
    %261 = vmatpush1.msra.mxu0 0.0
    %262 = vmatprep.subr.mxu0 0.0
    %263 = vmatpush1.msra.mxu0 0.0
    %264 = vmatprep.subr.mxu0 0.0
    %265 = vmatpush1.msra.mxu0 0.0
    %266 = vmatprep.subr.mxu0 0.0
    %267 = vmatpush1.msra.mxu0 0.0
    %268 = vmatprep.subr.mxu0 0.0
    %269 = vmatpush1.msra.mxu0 0.0
    %270 = vmatprep.mubr.f32.mxu0 0.0
    %271 = vmatmul.mubr.f32.gmra.mrb[0].mxu0 %v191
    %v272 = vpop.f32.mrb[0].mxu0
    %v273 = vadd.f32 0.0, %v272
    %v274 = vpop.f32.mrb[0].mxu0
    %275 = vmatprep.mubr.f32.mxu0 0.0
    %276 = vmatmul.mubr.f32.gmra.mrb[0].mxu0 %v194
    %v277 = vpop.f32.mrb[0].mxu0
    %v278 = vadd.f32 0.0, %v277
    %v279 = vpop.f32.mrb[0].mxu0
    %280 = vmatprep.mubr.f32.mxu0 0.0
    %281 = vmatmul.mubr.f32.gmra.mrb[0].mxu0 %v197
    %v282 = vpop.f32.mrb[0].mxu0
    %v283 = vadd.f32 0.0, %v282
    %v284 = vpop.f32.mrb[0].mxu0
    %285 = vmatprep.mubr.f32.mxu0 0.0
    %286 = vmatmul.mubr.f32.gmra.mrb[0].mxu0 %v200
    %v287 = vpop.f32.mrb[0].mxu0
    %v288 = vadd.f32 0.0, %v287
    %v289 = vpop.f32.mrb[0].mxu0
    %290 = vdwg.mxu0
    %v291 = vadd.f32 %v183, %v273
    %v292 = vadd.f32 %v183, %v278
    %v293 = vadd.f32 %v183, %v283
    %v294 = vadd.f32 %v183, %v288
    %v295 = vld [vmem:[#allocation2 + $0x1] sm:$0xff]
    %v296 = vld [vmem:[#allocation2 + $0x9] sm:$0xff]
    %v297 = vld [vmem:[#allocation2 + $0x19] sm:$0xff]
    %v298 = vld [vmem:[#allocation2 + $0x21] sm:$0xff]
    %s299 = scalar_lea.vmem %s2, 16
    %v300 = vld [vmem:[%s299] sm:$0xff]
    %v301 = vld [vmem:[%s299 + $0x8] sm:$0x7]
    %v303 = vsel %vm154, %v295, 0
    %v306 = vsel %vm154, %v296, 0
    %v309 = vsel %vm154, %v297, 0
    %v312 = vsel %vm154, %v298, 0
    %v315 = vsel %vm202, %v301, 0
    %317 = vmatprep.subr.mxu0 0.0
    %318 = vmatpush1.msra.mxu0 %v300
    %319 = vmatprep.subr.mxu0 0.0
    %320 = vmatpush1.msra.mxu0 %v315
    %321 = vmatprep.subr.mxu0 0.0
    %322 = vmatpush1.msra.mxu0 0.0
    %323 = vmatprep.subr.mxu0 0.0
    %324 = vmatpush1.msra.mxu0 0.0
    %325 = vmatprep.subr.mxu0 0.0
    %326 = vmatpush1.msra.mxu0 0.0
    %327 = vmatprep.subr.mxu0 0.0
    %328 = vmatpush1.msra.mxu0 0.0
    %329 = vmatprep.subr.mxu0 0.0
    %330 = vmatpush1.msra.mxu0 0.0
    %331 = vmatprep.subr.mxu0 0.0
    %332 = vmatpush1.msra.mxu0 0.0
    %333 = vmatprep.subr.mxu0 0.0
    %334 = vmatpush1.msra.mxu0 0.0
    %335 = vmatprep.subr.mxu0 0.0
    %336 = vmatpush1.msra.mxu0 0.0
    %337 = vmatprep.subr.mxu0 0.0
    %338 = vmatpush1.msra.mxu0 0.0
    %339 = vmatprep.subr.mxu0 0.0
    %340 = vmatpush1.msra.mxu0 0.0
    %341 = vmatprep.subr.mxu0 0.0
    %342 = vmatpush1.msra.mxu0 0.0
    %343 = vmatprep.subr.mxu0 0.0
    %344 = vmatpush1.msra.mxu0 0.0
    %345 = vmatprep.subr.mxu0 0.0
    %346 = vmatpush1.msra.mxu0 0.0
    %347 = vmatprep.subr.mxu0 0.0
    %348 = vmatpush1.msra.mxu0 0.0
    %349 = vmatprep.subr.mxu0 0.0
    %350 = vmatpush1.msra.mxu0 0.0
    %351 = vmatprep.subr.mxu0 0.0
    %352 = vmatpush1.msra.mxu0 0.0
    %353 = vmatprep.subr.mxu0 0.0
    %354 = vmatpush1.msra.mxu0 0.0
    %355 = vmatprep.subr.mxu0 0.0
    %356 = vmatpush1.msra.mxu0 0.0
    %357 = vmatprep.subr.mxu0 0.0
    %358 = vmatpush1.msra.mxu0 0.0
    %359 = vmatprep.subr.mxu0 0.0
    %360 = vmatpush1.msra.mxu0 0.0
    %361 = vmatprep.subr.mxu0 0.0
    %362 = vmatpush1.msra.mxu0 0.0
    %363 = vmatprep.subr.mxu0 0.0
    %364 = vmatpush1.msra.mxu0 0.0
    %365 = vmatprep.subr.mxu0 0.0
    %366 = vmatpush1.msra.mxu0 0.0
    %367 = vmatprep.subr.mxu0 0.0
    %368 = vmatpush1.msra.mxu0 0.0
    %369 = vmatprep.subr.mxu0 0.0
    %370 = vmatpush1.msra.mxu0 0.0
    %371 = vmatprep.subr.mxu0 0.0
    %372 = vmatpush1.msra.mxu0 0.0
    %373 = vmatprep.subr.mxu0 0.0
    %374 = vmatpush1.msra.mxu0 0.0
    %375 = vmatprep.subr.mxu0 0.0
    %376 = vmatpush1.msra.mxu0 0.0
    %377 = vmatprep.subr.mxu0 0.0
    %378 = vmatpush1.msra.mxu0 0.0
    %379 = vmatprep.subr.mxu0 0.0
    %380 = vmatpush1.msra.mxu0 0.0
    %381 = vmatprep.mubr.f32.mxu0 0.0
    %382 = vmatmul.mubr.f32.gmra.mrb[0].mxu0 %v303
    %v383 = vpop.f32.mrb[0].mxu0
    %v384 = vadd.f32 0.0, %v383
    %v385 = vpop.f32.mrb[0].mxu0
    %386 = vmatprep.mubr.f32.mxu0 0.0
    %387 = vmatmul.mubr.f32.gmra.mrb[0].mxu0 %v306
    %v388 = vpop.f32.mrb[0].mxu0
    %v389 = vadd.f32 0.0, %v388
    %v390 = vpop.f32.mrb[0].mxu0
    %391 = vmatprep.mubr.f32.mxu0 0.0
    %392 = vmatmul.mubr.f32.gmra.mrb[0].mxu0 %v309
    %v393 = vpop.f32.mrb[0].mxu0
    %v394 = vadd.f32 0.0, %v393
    %v395 = vpop.f32.mrb[0].mxu0
    %396 = vmatprep.mubr.f32.mxu0 0.0
    %397 = vmatmul.mubr.f32.gmra.mrb[0].mxu0 %v312
    %v398 = vpop.f32.mrb[0].mxu0
    %v399 = vadd.f32 0.0, %v398
    %v400 = vpop.f32.mrb[0].mxu0
    %401 = vdwg.mxu0
    %v402 = vadd.f32 %v291, %v384
    %v403 = vadd.f32 %v292, %v389
    %v404 = vadd.f32 %v293, %v394
    %v405 = vadd.f32 %v294, %v399
    %v406 = vld [vmem:[#allocation2 + $0x2] sm:$0xff]
    %v407 = vld [vmem:[#allocation2 + $0xa] sm:$0xff]
    %v408 = vld [vmem:[#allocation2 + $0x1a] sm:$0xff]
    %v409 = vld [vmem:[#allocation2 + $0x22] sm:$0xff]
    %s410 = scalar_lea.vmem %s2, 32
    %v411 = vld [vmem:[%s410] sm:$0xff]
    %v412 = vld [vmem:[%s410 + $0x8] sm:$0x7]
    %v414 = vsel %vm154, %v406, 0
    %v417 = vsel %vm154, %v407, 0
    %v420 = vsel %vm154, %v408, 0
    %v423 = vsel %vm154, %v409, 0
    %v426 = vsel %vm202, %v412, 0
    %428 = vmatprep.subr.mxu0 0.0
    %429 = vmatpush1.msra.mxu0 %v411
    %430 = vmatprep.subr.mxu0 0.0
    %431 = vmatpush1.msra.mxu0 %v426
    %432 = vmatprep.subr.mxu0 0.0
    %433 = vmatpush1.msra.mxu0 0.0
    %434 = vmatprep.subr.mxu0 0.0
    %435 = vmatpush1.msra.mxu0 0.0
    %436 = vmatprep.subr.mxu0 0.0
    %437 = vmatpush1.msra.mxu0 0.0
    %438 = vmatprep.subr.mxu0 0.0
    %439 = vmatpush1.msra.mxu0 0.0
    %440 = vmatprep.subr.mxu0 0.0
    %441 = vmatpush1.msra.mxu0 0.0
    %442 = vmatprep.subr.mxu0 0.0
    %443 = vmatpush1.msra.mxu0 0.0
    %444 = vmatprep.subr.mxu0 0.0
    %445 = vmatpush1.msra.mxu0 0.0
    %446 = vmatprep.subr.mxu0 0.0
    %447 = vmatpush1.msra.mxu0 0.0
    %448 = vmatprep.subr.mxu0 0.0
    %449 = vmatpush1.msra.mxu0 0.0
    %450 = vmatprep.subr.mxu0 0.0
    %451 = vmatpush1.msra.mxu0 0.0
    %452 = vmatprep.subr.mxu0 0.0
    %453 = vmatpush1.msra.mxu0 0.0
    %454 = vmatprep.subr.mxu0 0.0
    %455 = vmatpush1.msra.mxu0 0.0
    %456 = vmatprep.subr.mxu0 0.0
    %457 = vmatpush1.msra.mxu0 0.0
    %458 = vmatprep.subr.mxu0 0.0
    %459 = vmatpush1.msra.mxu0 0.0
    %460 = vmatprep.subr.mxu0 0.0
    %461 = vmatpush1.msra.mxu0 0.0
    %462 = vmatprep.subr.mxu0 0.0
    %463 = vmatpush1.msra.mxu0 0.0
    %464 = vmatprep.subr.mxu0 0.0
    %465 = vmatpush1.msra.mxu0 0.0
    %466 = vmatprep.subr.mxu0 0.0
    %467 = vmatpush1.msra.mxu0 0.0
    %468 = vmatprep.subr.mxu0 0.0
    %469 = vmatpush1.msra.mxu0 0.0
    %470 = vmatprep.subr.mxu0 0.0
    %471 = vmatpush1.msra.mxu0 0.0
    %472 = vmatprep.subr.mxu0 0.0
    %473 = vmatpush1.msra.mxu0 0.0
    %474 = vmatprep.subr.mxu0 0.0
    %475 = vmatpush1.msra.mxu0 0.0
    %476 = vmatprep.subr.mxu0 0.0
    %477 = vmatpush1.msra.mxu0 0.0
    %478 = vmatprep.subr.mxu0 0.0
    %479 = vmatpush1.msra.mxu0 0.0
    %480 = vmatprep.subr.mxu0 0.0
    %481 = vmatpush1.msra.mxu0 0.0
    %482 = vmatprep.subr.mxu0 0.0
    %483 = vmatpush1.msra.mxu0 0.0
    %484 = vmatprep.subr.mxu0 0.0
    %485 = vmatpush1.msra.mxu0 0.0
    %486 = vmatprep.subr.mxu0 0.0
    %487 = vmatpush1.msra.mxu0 0.0
    %488 = vmatprep.subr.mxu0 0.0
    %489 = vmatpush1.msra.mxu0 0.0
    %490 = vmatprep.subr.mxu0 0.0
    %491 = vmatpush1.msra.mxu0 0.0
    %492 = vmatprep.mubr.f32.mxu0 0.0
    %493 = vmatmul.mubr.f32.gmra.mrb[0].mxu0 %v414
    %v494 = vpop.f32.mrb[0].mxu0
    %v495 = vadd.f32 0.0, %v494
    %v496 = vpop.f32.mrb[0].mxu0
    %497 = vmatprep.mubr.f32.mxu0 0.0
    %498 = vmatmul.mubr.f32.gmra.mrb[0].mxu0 %v417
    %v499 = vpop.f32.mrb[0].mxu0
    %v500 = vadd.f32 0.0, %v499
    %v501 = vpop.f32.mrb[0].mxu0
    %502 = vmatprep.mubr.f32.mxu0 0.0
    %503 = vmatmul.mubr.f32.gmra.mrb[0].mxu0 %v420
    %v504 = vpop.f32.mrb[0].mxu0
    %v505 = vadd.f32 0.0, %v504
    %v506 = vpop.f32.mrb[0].mxu0
    %507 = vmatprep.mubr.f32.mxu0 0.0
    %508 = vmatmul.mubr.f32.gmra.mrb[0].mxu0 %v423
    %v509 = vpop.f32.mrb[0].mxu0
    %v510 = vadd.f32 0.0, %v509
    %v511 = vpop.f32.mrb[0].mxu0
    %512 = vdwg.mxu0
    %v513 = vadd.f32 %v402, %v495
    %v514 = vadd.f32 %v403, %v500
    %v515 = vadd.f32 %v404, %v505
    %v516 = vadd.f32 %v405, %v510
    %517 = vst [vmem:[#allocation3 + $0x1] sm:$0xff] %v513
    %518 = vst [vmem:[#allocation3 + $0x9] sm:$0xff] %v514
    %519 = vst [vmem:[#allocation3 + $0x19] sm:$0xff] %v515
    %520 = vst [vmem:[#allocation3 + $0x21] sm:$0xff] %v516
    %v521 = vld [vmem:[%s5] sm:$0x1]
    %v523 = vlaneseq
    %v524 = vshrl.u32 %v523, 7
    %v525 = vsub.s32 0, %v524
    %v526 = vrot.slane %v521, %v525
    %v528 = vadd.f32 %v526, 0.0
    %v529 = vld [vmem:[#allocation3] sm:$0xff]
    %v530 = vld [vmem:[#allocation3 + $0x8] sm:$0xff]
    %v531 = vld [vmem:[#allocation3 + $0x18] sm:$0xff]
    %v532 = vld [vmem:[#allocation3 + $0x20] sm:$0xff]
    %v533 = vld [vmem:[#allocation9] sm:$0xff]
    %v534 = vld [vmem:[#allocation9 + $0x8] sm:$0xff]
    %v535 = vld [vmem:[#allocation9 + $0x10] sm:$0xff]
    %v536 = vld [vmem:[#allocation9 + $0x18] sm:$0xff]
    %v537 = vld [vmem:[#allocation9 + $0x20] sm:$0xff]
    %v538 = vld [vmem:[#allocation9 + $0x28] sm:$0xff]
    %v539 = vld [vmem:[#allocation9 + $0x30] sm:$0xff]
    %v540 = vld [vmem:[#allocation9 + $0x38] sm:$0xff]
    %v541 = vld [vmem:[#allocation9 + $0x40] sm:$0xff]
    %v542 = vld [vmem:[#allocation9 + $0x48] sm:$0xff]
    %v543 = vld [vmem:[#allocation9 + $0x50] sm:$0xff]
    %v544 = vld [vmem:[#allocation9 + $0x58] sm:$0xff]
    %v545 = vld [vmem:[#allocation9 + $0x60] sm:$0xff]
    %v546 = vld [vmem:[#allocation9 + $0x68] sm:$0xff]
    %v547 = vld [vmem:[#allocation9 + $0x70] sm:$0xff]
    %v548 = vld [vmem:[#allocation9 + $0x78] sm:$0xff]
    %549 = vmatprep.subr.mxu0 0.0
    %550 = vmatpush1.msra.mxu0 %v533
    %551 = vmatprep.subr.mxu0 0.0
    %552 = vmatpush1.msra.mxu0 %v534
    %553 = vmatprep.subr.mxu0 0.0
    %554 = vmatpush1.msra.mxu0 %v535
    %555 = vmatprep.subr.mxu0 0.0
    %556 = vmatpush1.msra.mxu0 %v536
    %557 = vmatprep.subr.mxu0 0.0
    %558 = vmatpush1.msra.mxu0 %v537
    %559 = vmatprep.subr.mxu0 0.0
    %560 = vmatpush1.msra.mxu0 %v538
    %561 = vmatprep.subr.mxu0 0.0
    %562 = vmatpush1.msra.mxu0 %v539
    %563 = vmatprep.subr.mxu0 0.0
    %564 = vmatpush1.msra.mxu0 %v540
    %565 = vmatprep.subr.mxu0 0.0
    %566 = vmatpush1.msra.mxu0 %v541
    %567 = vmatprep.subr.mxu0 0.0
    %568 = vmatpush1.msra.mxu0 %v542
    %569 = vmatprep.subr.mxu0 0.0
    %570 = vmatpush1.msra.mxu0 %v543
    %571 = vmatprep.subr.mxu0 0.0
    %572 = vmatpush1.msra.mxu0 %v544
    %573 = vmatprep.subr.mxu0 0.0
    %574 = vmatpush1.msra.mxu0 %v545
    %575 = vmatprep.subr.mxu0 0.0
    %576 = vmatpush1.msra.mxu0 %v546
    %577 = vmatprep.subr.mxu0 0.0
    %578 = vmatpush1.msra.mxu0 %v547
    %579 = vmatprep.subr.mxu0 0.0
    %580 = vmatpush1.msra.mxu0 %v548
    %581 = vmatprep.subr.mxu0 0.0
    %582 = vmatpush1.msra.mxu0 0.0
    %583 = vmatprep.subr.mxu0 0.0
    %584 = vmatpush1.msra.mxu0 0.0
    %585 = vmatprep.subr.mxu0 0.0
    %586 = vmatpush1.msra.mxu0 0.0
    %587 = vmatprep.subr.mxu0 0.0
    %588 = vmatpush1.msra.mxu0 0.0
    %589 = vmatprep.subr.mxu0 0.0
    %590 = vmatpush1.msra.mxu0 0.0
    %591 = vmatprep.subr.mxu0 0.0
    %592 = vmatpush1.msra.mxu0 0.0
    %593 = vmatprep.subr.mxu0 0.0
    %594 = vmatpush1.msra.mxu0 0.0
    %595 = vmatprep.subr.mxu0 0.0
    %596 = vmatpush1.msra.mxu0 0.0
    %597 = vmatprep.subr.mxu0 0.0
    %598 = vmatpush1.msra.mxu0 0.0
    %599 = vmatprep.subr.mxu0 0.0
    %600 = vmatpush1.msra.mxu0 0.0
    %601 = vmatprep.subr.mxu0 0.0
    %602 = vmatpush1.msra.mxu0 0.0
    %603 = vmatprep.subr.mxu0 0.0
    %604 = vmatpush1.msra.mxu0 0.0
    %605 = vmatprep.subr.mxu0 0.0
    %606 = vmatpush1.msra.mxu0 0.0
    %607 = vmatprep.subr.mxu0 0.0
    %608 = vmatpush1.msra.mxu0 0.0
    %609 = vmatprep.subr.mxu0 0.0
    %610 = vmatpush1.msra.mxu0 0.0
    %611 = vmatprep.subr.mxu0 0.0
    %612 = vmatpush1.msra.mxu0 0.0
    %613 = vmatprep.mubr.f32.mxu0 0.0
    %614 = vmatmul.mubr.f32.gmra.mrb[0].mxu0 %v529
    %v615 = vpop.f32.mrb[0].mxu0
    %v616 = vadd.f32 0.0, %v615
    %v617 = vpop.f32.mrb[0].mxu0
    %618 = vmatprep.mubr.f32.mxu0 0.0
    %619 = vmatmul.mubr.f32.gmra.mrb[0].mxu0 %v530
    %v620 = vpop.f32.mrb[0].mxu0
    %v621 = vadd.f32 0.0, %v620
    %v622 = vpop.f32.mrb[0].mxu0
    %623 = vmatprep.mubr.f32.mxu0 0.0
    %624 = vmatmul.mubr.f32.gmra.mrb[0].mxu0 %v531
    %v625 = vpop.f32.mrb[0].mxu0
    %v626 = vadd.f32 0.0, %v625
    %v627 = vpop.f32.mrb[0].mxu0
    %628 = vmatprep.mubr.f32.mxu0 0.0
    %629 = vmatmul.mubr.f32.gmra.mrb[0].mxu0 %v532
    %v630 = vpop.f32.mrb[0].mxu0
    %v631 = vadd.f32 0.0, %v630
    %v632 = vpop.f32.mrb[0].mxu0
    %633 = vdwg.mxu0
    %v634 = vadd.f32 %v528, %v616
    %v635 = vadd.f32 %v528, %v621
    %v636 = vadd.f32 %v528, %v626
    %v637 = vadd.f32 %v528, %v631
    %v638 = vld [vmem:[#allocation3 + $0x1] sm:$0xff]
    %v639 = vld [vmem:[#allocation3 + $0x9] sm:$0xff]
    %v640 = vld [vmem:[#allocation3 + $0x19] sm:$0xff]
    %v641 = vld [vmem:[#allocation3 + $0x21] sm:$0xff]
    %s642 = scalar_lea.vmem [#allocation9], 128
    %v643 = vld [vmem:[%s642] sm:$0xff]
    %v644 = vld [vmem:[%s642 + $0x8] sm:$0xff]
    %v645 = vld [vmem:[%s642 + $0x10] sm:$0xff]
    %v646 = vld [vmem:[%s642 + $0x18] sm:$0xff]
    %v647 = vld [vmem:[%s642 + $0x20] sm:$0xff]
    %v648 = vld [vmem:[%s642 + $0x28] sm:$0xff]
    %v649 = vld [vmem:[%s642 + $0x30] sm:$0xff]
    %v650 = vld [vmem:[%s642 + $0x38] sm:$0xff]
    %v651 = vld [vmem:[%s642 + $0x40] sm:$0xff]
    %v652 = vld [vmem:[%s642 + $0x48] sm:$0xff]
    %v653 = vld [vmem:[%s642 + $0x50] sm:$0xff]
    %v654 = vld [vmem:[%s642 + $0x58] sm:$0xff]
    %v655 = vld [vmem:[%s642 + $0x60] sm:$0xff]
    %v656 = vld [vmem:[%s642 + $0x68] sm:$0xff]
    %v657 = vld [vmem:[%s642 + $0x70] sm:$0xff]
    %v658 = vld [vmem:[%s642 + $0x78] sm:$0xff]
    %659 = vmatprep.subr.mxu0 0.0
    %660 = vmatpush1.msra.mxu0 %v643
    %661 = vmatprep.subr.mxu0 0.0
    %662 = vmatpush1.msra.mxu0 %v644
    %663 = vmatprep.subr.mxu0 0.0
    %664 = vmatpush1.msra.mxu0 %v645
    %665 = vmatprep.subr.mxu0 0.0
    %666 = vmatpush1.msra.mxu0 %v646
    %667 = vmatprep.subr.mxu0 0.0
    %668 = vmatpush1.msra.mxu0 %v647
    %669 = vmatprep.subr.mxu0 0.0
    %670 = vmatpush1.msra.mxu0 %v648
    %671 = vmatprep.subr.mxu0 0.0
    %672 = vmatpush1.msra.mxu0 %v649
    %673 = vmatprep.subr.mxu0 0.0
    %674 = vmatpush1.msra.mxu0 %v650
    %675 = vmatprep.subr.mxu0 0.0
    %676 = vmatpush1.msra.mxu0 %v651
    %677 = vmatprep.subr.mxu0 0.0
    %678 = vmatpush1.msra.mxu0 %v652
    %679 = vmatprep.subr.mxu0 0.0
    %680 = vmatpush1.msra.mxu0 %v653
    %681 = vmatprep.subr.mxu0 0.0
    %682 = vmatpush1.msra.mxu0 %v654
    %683 = vmatprep.subr.mxu0 0.0
    %684 = vmatpush1.msra.mxu0 %v655
    %685 = vmatprep.subr.mxu0 0.0
    %686 = vmatpush1.msra.mxu0 %v656
    %687 = vmatprep.subr.mxu0 0.0
    %688 = vmatpush1.msra.mxu0 %v657
    %689 = vmatprep.subr.mxu0 0.0
    %690 = vmatpush1.msra.mxu0 %v658
    %691 = vmatprep.subr.mxu0 0.0
    %692 = vmatpush1.msra.mxu0 0.0
    %693 = vmatprep.subr.mxu0 0.0
    %694 = vmatpush1.msra.mxu0 0.0
    %695 = vmatprep.subr.mxu0 0.0
    %696 = vmatpush1.msra.mxu0 0.0
    %697 = vmatprep.subr.mxu0 0.0
    %698 = vmatpush1.msra.mxu0 0.0
    %699 = vmatprep.subr.mxu0 0.0
    %700 = vmatpush1.msra.mxu0 0.0
    %701 = vmatprep.subr.mxu0 0.0
    %702 = vmatpush1.msra.mxu0 0.0
    %703 = vmatprep.subr.mxu0 0.0
    %704 = vmatpush1.msra.mxu0 0.0
    %705 = vmatprep.subr.mxu0 0.0
    %706 = vmatpush1.msra.mxu0 0.0
    %707 = vmatprep.subr.mxu0 0.0
    %708 = vmatpush1.msra.mxu0 0.0
    %709 = vmatprep.subr.mxu0 0.0
    %710 = vmatpush1.msra.mxu0 0.0
    %711 = vmatprep.subr.mxu0 0.0
    %712 = vmatpush1.msra.mxu0 0.0
    %713 = vmatprep.subr.mxu0 0.0
    %714 = vmatpush1.msra.mxu0 0.0
    %715 = vmatprep.subr.mxu0 0.0
    %716 = vmatpush1.msra.mxu0 0.0
    %717 = vmatprep.subr.mxu0 0.0
    %718 = vmatpush1.msra.mxu0 0.0
    %719 = vmatprep.subr.mxu0 0.0
    %720 = vmatpush1.msra.mxu0 0.0
    %721 = vmatprep.subr.mxu0 0.0
    %722 = vmatpush1.msra.mxu0 0.0
    %723 = vmatprep.mubr.f32.mxu0 0.0
    %724 = vmatmul.mubr.f32.gmra.mrb[0].mxu0 %v638
    %v725 = vpop.f32.mrb[0].mxu0
    %v726 = vadd.f32 0.0, %v725
    %v727 = vpop.f32.mrb[0].mxu0
    %728 = vmatprep.mubr.f32.mxu0 0.0
    %729 = vmatmul.mubr.f32.gmra.mrb[0].mxu0 %v639
    %v730 = vpop.f32.mrb[0].mxu0
    %v731 = vadd.f32 0.0, %v730
    %v732 = vpop.f32.mrb[0].mxu0
    %733 = vmatprep.mubr.f32.mxu0 0.0
    %734 = vmatmul.mubr.f32.gmra.mrb[0].mxu0 %v640
    %v735 = vpop.f32.mrb[0].mxu0
    %v736 = vadd.f32 0.0, %v735
    %v737 = vpop.f32.mrb[0].mxu0
    %738 = vmatprep.mubr.f32.mxu0 0.0
    %739 = vmatmul.mubr.f32.gmra.mrb[0].mxu0 %v641
    %v740 = vpop.f32.mrb[0].mxu0
    %v741 = vadd.f32 0.0, %v740
    %v742 = vpop.f32.mrb[0].mxu0
    %743 = vdwg.mxu0
    %v744 = vadd.f32 %v634, %v726
    %v745 = vadd.f32 %v635, %v731
    %v746 = vadd.f32 %v636, %v736
    %v747 = vadd.f32 %v637, %v741
    %v748 = vld [vmem:[#allocation3 + $0x2] sm:$0xff]
    %v749 = vld [vmem:[#allocation3 + $0xa] sm:$0xff]
    %v750 = vld [vmem:[#allocation3 + $0x1a] sm:$0xff]
    %v751 = vld [vmem:[#allocation3 + $0x22] sm:$0xff]
    %s752 = scalar_lea.vmem [#allocation9], 256
    %v753 = vld [vmem:[%s752] sm:$0xff]
    %v754 = vld [vmem:[%s752 + $0x8] sm:$0xff]
    %v755 = vld [vmem:[%s752 + $0x10] sm:$0xff]
    %v756 = vld [vmem:[%s752 + $0x18] sm:$0xff]
    %v757 = vld [vmem:[%s752 + $0x20] sm:$0xff]
    %v758 = vld [vmem:[%s752 + $0x28] sm:$0xff]
    %v759 = vld [vmem:[%s752 + $0x30] sm:$0xff]
    %v760 = vld [vmem:[%s752 + $0x38] sm:$0xff]
    %v761 = vld [vmem:[%s752 + $0x40] sm:$0xff]
    %v762 = vld [vmem:[%s752 + $0x48] sm:$0xff]
    %v763 = vld [vmem:[%s752 + $0x50] sm:$0xff]
    %v764 = vld [vmem:[%s752 + $0x58] sm:$0xff]
    %v765 = vld [vmem:[%s752 + $0x60] sm:$0xff]
    %v766 = vld [vmem:[%s752 + $0x68] sm:$0xff]
    %v767 = vld [vmem:[%s752 + $0x70] sm:$0xff]
    %v768 = vld [vmem:[%s752 + $0x78] sm:$0xff]
    %769 = vmatprep.subr.mxu0 0.0
    %770 = vmatpush1.msra.mxu0 %v753
    %771 = vmatprep.subr.mxu0 0.0
    %772 = vmatpush1.msra.mxu0 %v754
    %773 = vmatprep.subr.mxu0 0.0
    %774 = vmatpush1.msra.mxu0 %v755
    %775 = vmatprep.subr.mxu0 0.0
    %776 = vmatpush1.msra.mxu0 %v756
    %777 = vmatprep.subr.mxu0 0.0
    %778 = vmatpush1.msra.mxu0 %v757
    %779 = vmatprep.subr.mxu0 0.0
    %780 = vmatpush1.msra.mxu0 %v758
    %781 = vmatprep.subr.mxu0 0.0
    %782 = vmatpush1.msra.mxu0 %v759
    %783 = vmatprep.subr.mxu0 0.0
    %784 = vmatpush1.msra.mxu0 %v760
    %785 = vmatprep.subr.mxu0 0.0
    %786 = vmatpush1.msra.mxu0 %v761
    %787 = vmatprep.subr.mxu0 0.0
    %788 = vmatpush1.msra.mxu0 %v762
    %789 = vmatprep.subr.mxu0 0.0
    %790 = vmatpush1.msra.mxu0 %v763
    %791 = vmatprep.subr.mxu0 0.0
    %792 = vmatpush1.msra.mxu0 %v764
    %793 = vmatprep.subr.mxu0 0.0
    %794 = vmatpush1.msra.mxu0 %v765
    %795 = vmatprep.subr.mxu0 0.0
    %796 = vmatpush1.msra.mxu0 %v766
    %797 = vmatprep.subr.mxu0 0.0
    %798 = vmatpush1.msra.mxu0 %v767
    %799 = vmatprep.subr.mxu0 0.0
    %800 = vmatpush1.msra.mxu0 %v768
    %801 = vmatprep.subr.mxu0 0.0
    %802 = vmatpush1.msra.mxu0 0.0
    %803 = vmatprep.subr.mxu0 0.0
    %804 = vmatpush1.msra.mxu0 0.0
    %805 = vmatprep.subr.mxu0 0.0
    %806 = vmatpush1.msra.mxu0 0.0
    %807 = vmatprep.subr.mxu0 0.0
    %808 = vmatpush1.msra.mxu0 0.0
    %809 = vmatprep.subr.mxu0 0.0
    %810 = vmatpush1.msra.mxu0 0.0
    %811 = vmatprep.subr.mxu0 0.0
    %812 = vmatpush1.msra.mxu0 0.0
    %813 = vmatprep.subr.mxu0 0.0
    %814 = vmatpush1.msra.mxu0 0.0
    %815 = vmatprep.subr.mxu0 0.0
    %816 = vmatpush1.msra.mxu0 0.0
    %817 = vmatprep.subr.mxu0 0.0
    %818 = vmatpush1.msra.mxu0 0.0
    %819 = vmatprep.subr.mxu0 0.0
    %820 = vmatpush1.msra.mxu0 0.0
    %821 = vmatprep.subr.mxu0 0.0
    %822 = vmatpush1.msra.mxu0 0.0
    %823 = vmatprep.subr.mxu0 0.0
    %824 = vmatpush1.msra.mxu0 0.0
    %825 = vmatprep.subr.mxu0 0.0
    %826 = vmatpush1.msra.mxu0 0.0
    %827 = vmatprep.subr.mxu0 0.0
    %828 = vmatpush1.msra.mxu0 0.0
    %829 = vmatprep.subr.mxu0 0.0
    %830 = vmatpush1.msra.mxu0 0.0
    %831 = vmatprep.subr.mxu0 0.0
    %832 = vmatpush1.msra.mxu0 0.0
    %833 = vmatprep.mubr.f32.mxu0 0.0
    %834 = vmatmul.mubr.f32.gmra.mrb[0].mxu0 %v748
    %v835 = vpop.f32.mrb[0].mxu0
    %v836 = vadd.f32 0.0, %v835
    %v837 = vpop.f32.mrb[0].mxu0
    %838 = vmatprep.mubr.f32.mxu0 0.0
    %839 = vmatmul.mubr.f32.gmra.mrb[0].mxu0 %v749
    %v840 = vpop.f32.mrb[0].mxu0
    %v841 = vadd.f32 0.0, %v840
    %v842 = vpop.f32.mrb[0].mxu0
    %843 = vmatprep.mubr.f32.mxu0 0.0
    %844 = vmatmul.mubr.f32.gmra.mrb[0].mxu0 %v750
    %v845 = vpop.f32.mrb[0].mxu0
    %v846 = vadd.f32 0.0, %v845
    %v847 = vpop.f32.mrb[0].mxu0
    %848 = vmatprep.mubr.f32.mxu0 0.0
    %849 = vmatmul.mubr.f32.gmra.mrb[0].mxu0 %v751
    %v850 = vpop.f32.mrb[0].mxu0
    %v851 = vadd.f32 0.0, %v850
    %v852 = vpop.f32.mrb[0].mxu0
    %853 = vdwg.mxu0
    %v854 = vadd.f32 %v744, %v836
    %v855 = vadd.f32 %v745, %v841
    %v856 = vadd.f32 %v746, %v846
    %v857 = vadd.f32 %v747, %v851
    %858 = vadd.xlane.f32.xlu0 %v854
    %v859 = vpop.xlane.xlu0 %858
    %860 = vadd.xlane.f32.xlu0 %v855
    %v861 = vpop.xlane.xlu0 %860
    %862 = vadd.xlane.f32.xlu0 %v856
    %v863 = vpop.xlane.xlu0 %862
    %864 = vadd.xlane.f32.xlu0 %v857
    %v865 = vpop.xlane.xlu0 %864
    %v866 = vrcp.pop 128.0
    %v867 = vmul.f32 %v859, %v866
    %v868 = vmul.f32 %v861, %v866
    %v869 = vmul.f32 %v863, %v866
    %v870 = vmul.f32 %v865, %v866
    %v871 = vsub.f32 %v854, %v867
    %v872 = vsub.f32 %v855, %v868
    %v873 = vsub.f32 %v856, %v869
    %v874 = vsub.f32 %v857, %v870
    %v875 = vmul.f32 %v871, %v871
    %v876 = vmul.f32 %v872, %v872
    %v877 = vmul.f32 %v873, %v873
    %v878 = vmul.f32 %v874, %v874
    %879 = vadd.xlane.f32.xlu0 %v875
    %v880 = vpop.xlane.xlu0 %879
    %881 = vadd.xlane.f32.xlu0 %v876
    %v882 = vpop.xlane.xlu0 %881
    %883 = vadd.xlane.f32.xlu0 %v877
    %v884 = vpop.xlane.xlu0 %883
    %885 = vadd.xlane.f32.xlu0 %v878
    %v886 = vpop.xlane.xlu0 %885
    %v887 = vmul.f32 %v880, %v866
    %v888 = vmul.f32 %v882, %v866
    %v889 = vmul.f32 %v884, %v866
    %v890 = vmul.f32 %v886, %v866
    %v891 = vadd.f32 %v887, 1e-05
    %v892 = vadd.f32 %v888, 1e-05
    %v893 = vadd.f32 %v889, 1e-05
    %v894 = vadd.f32 %v890, 1e-05
    %v895 = vrsqrt.pop %v891
    %v896 = vrsqrt.pop %v892
    %v897 = vrsqrt.pop %v893
    %v898 = vrsqrt.pop %v894
    %v899 = vmul.f32 %v871, %v895
    %v900 = vmul.f32 %v872, %v896
    %v901 = vmul.f32 %v873, %v897
    %v902 = vmul.f32 %v874, %v898
    %v903 = vld [vmem:[%s6] sm:$0x1]
    %v905 = vlaneseq
    %v906 = vshrl.u32 %v905, 7
    %v907 = vsub.s32 0, %v906
    %v908 = vrot.slane %v903, %v907
    %v910 = vmul.f32 %v899, %v908
    %v911 = vmul.f32 %v900, %v908
    %v912 = vmul.f32 %v901, %v908
    %v913 = vmul.f32 %v902, %v908
    %v914 = vld [vmem:[%s7] sm:$0x1]
    %v916 = vlaneseq
    %v917 = vshrl.u32 %v916, 7
    %v918 = vsub.s32 0, %v917
    %v919 = vrot.slane %v914, %v918
    %v921 = vadd.f32 %v910, %v919
    %v922 = vadd.f32 %v911, %v919
    %v923 = vadd.f32 %v912, %v919
    %v924 = vadd.f32 %v913, %v919
    %v925 = vmax.f32 %v921, 0.0
    %v926 = vmax.f32 %v922, 0.0
    %v927 = vmax.f32 %v923, 0.0
    %v928 = vmax.f32 %v924, 0.0
    %929 = vst [vmem:[#allocation3 + $0x1] sm:$0xff] %v925
    %930 = vst [vmem:[#allocation3 + $0x9] sm:$0xff] %v926
    %931 = vst [vmem:[#allocation3 + $0x19] sm:$0xff] %v927
    %932 = vst [vmem:[#allocation3 + $0x21] sm:$0xff] %v928
    %v933 = vld [vmem:[%s9] sm:$0x1]
    %v935 = vlaneseq
    %v936 = vshrl.u32 %v935, 7
    %v937 = vsub.s32 0, %v936
    %v938 = vrot.slane %v933, %v937
    %v940 = vadd.f32 %v938, 0.0
    %v941 = vld [vmem:[#allocation3] sm:$0xff]
    %v942 = vld [vmem:[#allocation3 + $0x8] sm:$0xff]
    %v943 = vld [vmem:[#allocation3 + $0x18] sm:$0xff]
    %v944 = vld [vmem:[#allocation3 + $0x20] sm:$0xff]
    %v945 = vld [vmem:[#allocation12] sm:$0xff]
    %v946 = vld [vmem:[#allocation12 + $0x8] sm:$0xff]
    %v947 = vld [vmem:[#allocation12 + $0x10] sm:$0xff]
    %v948 = vld [vmem:[#allocation12 + $0x18] sm:$0xff]
    %v949 = vld [vmem:[#allocation12 + $0x20] sm:$0xff]
    %v950 = vld [vmem:[#allocation12 + $0x28] sm:$0xff]
    %v951 = vld [vmem:[#allocation12 + $0x30] sm:$0xff]
    %v952 = vld [vmem:[#allocation12 + $0x38] sm:$0xff]
    %v953 = vld [vmem:[#allocation12 + $0x40] sm:$0xff]
    %v954 = vld [vmem:[#allocation12 + $0x48] sm:$0xff]
    %v955 = vld [vmem:[#allocation12 + $0x50] sm:$0xff]
    %v956 = vld [vmem:[#allocation12 + $0x58] sm:$0xff]
    %v957 = vld [vmem:[#allocation12 + $0x60] sm:$0xff]
    %v958 = vld [vmem:[#allocation12 + $0x68] sm:$0xff]
    %v959 = vld [vmem:[#allocation12 + $0x70] sm:$0xff]
    %v960 = vld [vmem:[#allocation12 + $0x78] sm:$0xff]
    %961 = vmatprep.subr.mxu0 0.0
    %962 = vmatpush1.msra.mxu0 %v945
    %963 = vmatprep.subr.mxu0 0.0
    %964 = vmatpush1.msra.mxu0 %v946
    %965 = vmatprep.subr.mxu0 0.0
    %966 = vmatpush1.msra.mxu0 %v947
    %967 = vmatprep.subr.mxu0 0.0
    %968 = vmatpush1.msra.mxu0 %v948
    %969 = vmatprep.subr.mxu0 0.0
    %970 = vmatpush1.msra.mxu0 %v949
    %971 = vmatprep.subr.mxu0 0.0
    %972 = vmatpush1.msra.mxu0 %v950
    %973 = vmatprep.subr.mxu0 0.0
    %974 = vmatpush1.msra.mxu0 %v951
    %975 = vmatprep.subr.mxu0 0.0
    %976 = vmatpush1.msra.mxu0 %v952
    %977 = vmatprep.subr.mxu0 0.0
    %978 = vmatpush1.msra.mxu0 %v953
    %979 = vmatprep.subr.mxu0 0.0
    %980 = vmatpush1.msra.mxu0 %v954
    %981 = vmatprep.subr.mxu0 0.0
    %982 = vmatpush1.msra.mxu0 %v955
    %983 = vmatprep.subr.mxu0 0.0
    %984 = vmatpush1.msra.mxu0 %v956
    %985 = vmatprep.subr.mxu0 0.0
    %986 = vmatpush1.msra.mxu0 %v957
    %987 = vmatprep.subr.mxu0 0.0
    %988 = vmatpush1.msra.mxu0 %v958
    %989 = vmatprep.subr.mxu0 0.0
    %990 = vmatpush1.msra.mxu0 %v959
    %991 = vmatprep.subr.mxu0 0.0
    %992 = vmatpush1.msra.mxu0 %v960
    %993 = vmatprep.subr.mxu0 0.0
    %994 = vmatpush1.msra.mxu0 0.0
    %995 = vmatprep.subr.mxu0 0.0
    %996 = vmatpush1.msra.mxu0 0.0
    %997 = vmatprep.subr.mxu0 0.0
    %998 = vmatpush1.msra.mxu0 0.0
    %999 = vmatprep.subr.mxu0 0.0
    %1000 = vmatpush1.msra.mxu0 0.0
    %1001 = vmatprep.subr.mxu0 0.0
    %1002 = vmatpush1.msra.mxu0 0.0
    %1003 = vmatprep.subr.mxu0 0.0
    %1004 = vmatpush1.msra.mxu0 0.0
    %1005 = vmatprep.subr.mxu0 0.0
    %1006 = vmatpush1.msra.mxu0 0.0
    %1007 = vmatprep.subr.mxu0 0.0
    %1008 = vmatpush1.msra.mxu0 0.0
    %1009 = vmatprep.subr.mxu0 0.0
    %1010 = vmatpush1.msra.mxu0 0.0
    %1011 = vmatprep.subr.mxu0 0.0
    %1012 = vmatpush1.msra.mxu0 0.0
    %1013 = vmatprep.subr.mxu0 0.0
    %1014 = vmatpush1.msra.mxu0 0.0
    %1015 = vmatprep.subr.mxu0 0.0
    %1016 = vmatpush1.msra.mxu0 0.0
    %1017 = vmatprep.subr.mxu0 0.0
    %1018 = vmatpush1.msra.mxu0 0.0
    %1019 = vmatprep.subr.mxu0 0.0
    %1020 = vmatpush1.msra.mxu0 0.0
    %1021 = vmatprep.subr.mxu0 0.0
    %1022 = vmatpush1.msra.mxu0 0.0
    %1023 = vmatprep.subr.mxu0 0.0
    %1024 = vmatpush1.msra.mxu0 0.0
    %1025 = vmatprep.mubr.f32.mxu0 0.0
    %1026 = vmatmul.mubr.f32.gmra.mrb[0].mxu0 %v941
    %v1027 = vpop.f32.mrb[0].mxu0
    %v1028 = vadd.f32 0.0, %v1027
    %v1029 = vpop.f32.mrb[0].mxu0
    %1030 = vmatprep.mubr.f32.mxu0 0.0
    %1031 = vmatmul.mubr.f32.gmra.mrb[0].mxu0 %v942
    %v1032 = vpop.f32.mrb[0].mxu0
    %v1033 = vadd.f32 0.0, %v1032
    %v1034 = vpop.f32.mrb[0].mxu0
    %1035 = vmatprep.mubr.f32.mxu0 0.0
    %1036 = vmatmul.mubr.f32.gmra.mrb[0].mxu0 %v943
    %v1037 = vpop.f32.mrb[0].mxu0
    %v1038 = vadd.f32 0.0, %v1037
    %v1039 = vpop.f32.mrb[0].mxu0
    %1040 = vmatprep.mubr.f32.mxu0 0.0
    %1041 = vmatmul.mubr.f32.gmra.mrb[0].mxu0 %v944
    %v1042 = vpop.f32.mrb[0].mxu0
    %v1043 = vadd.f32 0.0, %v1042
    %v1044 = vpop.f32.mrb[0].mxu0
    %1045 = vdwg.mxu0
    %v1046 = vadd.f32 %v940, %v1028
    %v1047 = vadd.f32 %v940, %v1033
    %v1048 = vadd.f32 %v940, %v1038
    %v1049 = vadd.f32 %v940, %v1043
    %v1050 = vld [vmem:[#allocation3 + $0x1] sm:$0xff]
    %v1051 = vld [vmem:[#allocation3 + $0x9] sm:$0xff]
    %v1052 = vld [vmem:[#allocation3 + $0x19] sm:$0xff]
    %v1053 = vld [vmem:[#allocation3 + $0x21] sm:$0xff]
    %s1054 = scalar_lea.vmem [#allocation12], 128
    %v1055 = vld [vmem:[%s1054] sm:$0xff]
    %v1056 = vld [vmem:[%s1054 + $0x8] sm:$0xff]
    %v1057 = vld [vmem:[%s1054 + $0x10] sm:$0xff]
    %v1058 = vld [vmem:[%s1054 + $0x18] sm:$0xff]
    %v1059 = vld [vmem:[%s1054 + $0x20] sm:$0xff]
    %v1060 = vld [vmem:[%s1054 + $0x28] sm:$0xff]
    %v1061 = vld [vmem:[%s1054 + $0x30] sm:$0xff]
    %v1062 = vld [vmem:[%s1054 + $0x38] sm:$0xff]
    %v1063 = vld [vmem:[%s1054 + $0x40] sm:$0xff]
    %v1064 = vld [vmem:[%s1054 + $0x48] sm:$0xff]
    %v1065 = vld [vmem:[%s1054 + $0x50] sm:$0xff]
    %v1066 = vld [vmem:[%s1054 + $0x58] sm:$0xff]
    %v1067 = vld [vmem:[%s1054 + $0x60] sm:$0xff]
    %v1068 = vld [vmem:[%s1054 + $0x68] sm:$0xff]
    %v1069 = vld [vmem:[%s1054 + $0x70] sm:$0xff]
    %v1070 = vld [vmem:[%s1054 + $0x78] sm:$0xff]
    %1071 = vmatprep.subr.mxu0 0.0
    %1072 = vmatpush1.msra.mxu0 %v1055
    %1073 = vmatprep.subr.mxu0 0.0
    %1074 = vmatpush1.msra.mxu0 %v1056
    %1075 = vmatprep.subr.mxu0 0.0
    %1076 = vmatpush1.msra.mxu0 %v1057
    %1077 = vmatprep.subr.mxu0 0.0
    %1078 = vmatpush1.msra.mxu0 %v1058
    %1079 = vmatprep.subr.mxu0 0.0
    %1080 = vmatpush1.msra.mxu0 %v1059
    %1081 = vmatprep.subr.mxu0 0.0
    %1082 = vmatpush1.msra.mxu0 %v1060
    %1083 = vmatprep.subr.mxu0 0.0
    %1084 = vmatpush1.msra.mxu0 %v1061
    %1085 = vmatprep.subr.mxu0 0.0
    %1086 = vmatpush1.msra.mxu0 %v1062
    %1087 = vmatprep.subr.mxu0 0.0
    %1088 = vmatpush1.msra.mxu0 %v1063
    %1089 = vmatprep.subr.mxu0 0.0
    %1090 = vmatpush1.msra.mxu0 %v1064
    %1091 = vmatprep.subr.mxu0 0.0
    %1092 = vmatpush1.msra.mxu0 %v1065
    %1093 = vmatprep.subr.mxu0 0.0
    %1094 = vmatpush1.msra.mxu0 %v1066
    %1095 = vmatprep.subr.mxu0 0.0
    %1096 = vmatpush1.msra.mxu0 %v1067
    %1097 = vmatprep.subr.mxu0 0.0
    %1098 = vmatpush1.msra.mxu0 %v1068
    %1099 = vmatprep.subr.mxu0 0.0
    %1100 = vmatpush1.msra.mxu0 %v1069
    %1101 = vmatprep.subr.mxu0 0.0
    %1102 = vmatpush1.msra.mxu0 %v1070
    %1103 = vmatprep.subr.mxu0 0.0
    %1104 = vmatpush1.msra.mxu0 0.0
    %1105 = vmatprep.subr.mxu0 0.0
    %1106 = vmatpush1.msra.mxu0 0.0
    %1107 = vmatprep.subr.mxu0 0.0
    %1108 = vmatpush1.msra.mxu0 0.0
    %1109 = vmatprep.subr.mxu0 0.0
    %1110 = vmatpush1.msra.mxu0 0.0
    %1111 = vmatprep.subr.mxu0 0.0
    %1112 = vmatpush1.msra.mxu0 0.0
    %1113 = vmatprep.subr.mxu0 0.0
    %1114 = vmatpush1.msra.mxu0 0.0
    %1115 = vmatprep.subr.mxu0 0.0
    %1116 = vmatpush1.msra.mxu0 0.0
    %1117 = vmatprep.subr.mxu0 0.0
    %1118 = vmatpush1.msra.mxu0 0.0
    %1119 = vmatprep.subr.mxu0 0.0
    %1120 = vmatpush1.msra.mxu0 0.0
    %1121 = vmatprep.subr.mxu0 0.0
    %1122 = vmatpush1.msra.mxu0 0.0
    %1123 = vmatprep.subr.mxu0 0.0
    %1124 = vmatpush1.msra.mxu0 0.0
    %1125 = vmatprep.subr.mxu0 0.0
    %1126 = vmatpush1.msra.mxu0 0.0
    %1127 = vmatprep.subr.mxu0 0.0
    %1128 = vmatpush1.msra.mxu0 0.0
    %1129 = vmatprep.subr.mxu0 0.0
    %1130 = vmatpush1.msra.mxu0 0.0
    %1131 = vmatprep.subr.mxu0 0.0
    %1132 = vmatpush1.msra.mxu0 0.0
    %1133 = vmatprep.subr.mxu0 0.0
    %1134 = vmatpush1.msra.mxu0 0.0
    %1135 = vmatprep.mubr.f32.mxu0 0.0
    %1136 = vmatmul.mubr.f32.gmra.mrb[0].mxu0 %v1050
    %v1137 = vpop.f32.mrb[0].mxu0
    %v1138 = vadd.f32 0.0, %v1137
    %v1139 = vpop.f32.mrb[0].mxu0
    %1140 = vmatprep.mubr.f32.mxu0 0.0
    %1141 = vmatmul.mubr.f32.gmra.mrb[0].mxu0 %v1051
    %v1142 = vpop.f32.mrb[0].mxu0
    %v1143 = vadd.f32 0.0, %v1142
    %v1144 = vpop.f32.mrb[0].mxu0
    %1145 = vmatprep.mubr.f32.mxu0 0.0
    %1146 = vmatmul.mubr.f32.gmra.mrb[0].mxu0 %v1052
    %v1147 = vpop.f32.mrb[0].mxu0
    %v1148 = vadd.f32 0.0, %v1147
    %v1149 = vpop.f32.mrb[0].mxu0
    %1150 = vmatprep.mubr.f32.mxu0 0.0
    %1151 = vmatmul.mubr.f32.gmra.mrb[0].mxu0 %v1053
    %v1152 = vpop.f32.mrb[0].mxu0
    %v1153 = vadd.f32 0.0, %v1152
    %v1154 = vpop.f32.mrb[0].mxu0
    %1155 = vdwg.mxu0
    %v1156 = vadd.f32 %v1046, %v1138
    %v1157 = vadd.f32 %v1047, %v1143
    %v1158 = vadd.f32 %v1048, %v1148
    %v1159 = vadd.f32 %v1049, %v1153
    %v1160 = vld [vmem:[#allocation3 + $0x2] sm:$0xff]
    %v1161 = vld [vmem:[#allocation3 + $0xa] sm:$0xff]
    %v1162 = vld [vmem:[#allocation3 + $0x1a] sm:$0xff]
    %v1163 = vld [vmem:[#allocation3 + $0x22] sm:$0xff]
    %s1164 = scalar_lea.vmem [#allocation12], 256
    %v1165 = vld [vmem:[%s1164] sm:$0xff]
    %v1166 = vld [vmem:[%s1164 + $0x8] sm:$0xff]
    %v1167 = vld [vmem:[%s1164 + $0x10] sm:$0xff]
    %v1168 = vld [vmem:[%s1164 + $0x18] sm:$0xff]
    %v1169 = vld [vmem:[%s1164 + $0x20] sm:$0xff]
    %v1170 = vld [vmem:[%s1164 + $0x28] sm:$0xff]
    %v1171 = vld [vmem:[%s1164 + $0x30] sm:$0xff]
    %v1172 = vld [vmem:[%s1164 + $0x38] sm:$0xff]
    %v1173 = vld [vmem:[%s1164 + $0x40] sm:$0xff]
    %v1174 = vld [vmem:[%s1164 + $0x48] sm:$0xff]
    %v1175 = vld [vmem:[%s1164 + $0x50] sm:$0xff]
    %v1176 = vld [vmem:[%s1164 + $0x58] sm:$0xff]
    %v1177 = vld [vmem:[%s1164 + $0x60] sm:$0xff]
    %v1178 = vld [vmem:[%s1164 + $0x68] sm:$0xff]
    %v1179 = vld [vmem:[%s1164 + $0x70] sm:$0xff]
    %v1180 = vld [vmem:[%s1164 + $0x78] sm:$0xff]
    %1181 = vmatprep.subr.mxu0 0.0
    %1182 = vmatpush1.msra.mxu0 %v1165
    %1183 = vmatprep.subr.mxu0 0.0
    %1184 = vmatpush1.msra.mxu0 %v1166
    %1185 = vmatprep.subr.mxu0 0.0
    %1186 = vmatpush1.msra.mxu0 %v1167
    %1187 = vmatprep.subr.mxu0 0.0
    %1188 = vmatpush1.msra.mxu0 %v1168
    %1189 = vmatprep.subr.mxu0 0.0
    %1190 = vmatpush1.msra.mxu0 %v1169
    %1191 = vmatprep.subr.mxu0 0.0
    %1192 = vmatpush1.msra.mxu0 %v1170
    %1193 = vmatprep.subr.mxu0 0.0
    %1194 = vmatpush1.msra.mxu0 %v1171
    %1195 = vmatprep.subr.mxu0 0.0
    %1196 = vmatpush1.msra.mxu0 %v1172
    %1197 = vmatprep.subr.mxu0 0.0
    %1198 = vmatpush1.msra.mxu0 %v1173
    %1199 = vmatprep.subr.mxu0 0.0
    %1200 = vmatpush1.msra.mxu0 %v1174
    %1201 = vmatprep.subr.mxu0 0.0
    %1202 = vmatpush1.msra.mxu0 %v1175
    %1203 = vmatprep.subr.mxu0 0.0
    %1204 = vmatpush1.msra.mxu0 %v1176
    %1205 = vmatprep.subr.mxu0 0.0
    %1206 = vmatpush1.msra.mxu0 %v1177
    %1207 = vmatprep.subr.mxu0 0.0
    %1208 = vmatpush1.msra.mxu0 %v1178
    %1209 = vmatprep.subr.mxu0 0.0
    %1210 = vmatpush1.msra.mxu0 %v1179
    %1211 = vmatprep.subr.mxu0 0.0
    %1212 = vmatpush1.msra.mxu0 %v1180
    %1213 = vmatprep.subr.mxu0 0.0
    %1214 = vmatpush1.msra.mxu0 0.0
    %1215 = vmatprep.subr.mxu0 0.0
    %1216 = vmatpush1.msra.mxu0 0.0
    %1217 = vmatprep.subr.mxu0 0.0
    %1218 = vmatpush1.msra.mxu0 0.0
    %1219 = vmatprep.subr.mxu0 0.0
    %1220 = vmatpush1.msra.mxu0 0.0
    %1221 = vmatprep.subr.mxu0 0.0
    %1222 = vmatpush1.msra.mxu0 0.0
    %1223 = vmatprep.subr.mxu0 0.0
    %1224 = vmatpush1.msra.mxu0 0.0
    %1225 = vmatprep.subr.mxu0 0.0
    %1226 = vmatpush1.msra.mxu0 0.0
    %1227 = vmatprep.subr.mxu0 0.0
    %1228 = vmatpush1.msra.mxu0 0.0
    %1229 = vmatprep.subr.mxu0 0.0
    %1230 = vmatpush1.msra.mxu0 0.0
    %1231 = vmatprep.subr.mxu0 0.0
    %1232 = vmatpush1.msra.mxu0 0.0
    %1233 = vmatprep.subr.mxu0 0.0
    %1234 = vmatpush1.msra.mxu0 0.0
    %1235 = vmatprep.subr.mxu0 0.0
    %1236 = vmatpush1.msra.mxu0 0.0
    %1237 = vmatprep.subr.mxu0 0.0
    %1238 = vmatpush1.msra.mxu0 0.0
    %1239 = vmatprep.subr.mxu0 0.0
    %1240 = vmatpush1.msra.mxu0 0.0
    %1241 = vmatprep.subr.mxu0 0.0
    %1242 = vmatpush1.msra.mxu0 0.0
    %1243 = vmatprep.subr.mxu0 0.0
    %1244 = vmatpush1.msra.mxu0 0.0
    %1245 = vmatprep.mubr.f32.mxu0 0.0
    %1246 = vmatmul.mubr.f32.gmra.mrb[0].mxu0 %v1160
    %v1247 = vpop.f32.mrb[0].mxu0
    %v1248 = vadd.f32 0.0, %v1247
    %v1249 = vpop.f32.mrb[0].mxu0
    %1250 = vmatprep.mubr.f32.mxu0 0.0
    %1251 = vmatmul.mubr.f32.gmra.mrb[0].mxu0 %v1161
    %v1252 = vpop.f32.mrb[0].mxu0
    %v1253 = vadd.f32 0.0, %v1252
    %v1254 = vpop.f32.mrb[0].mxu0
    %1255 = vmatprep.mubr.f32.mxu0 0.0
    %1256 = vmatmul.mubr.f32.gmra.mrb[0].mxu0 %v1162
    %v1257 = vpop.f32.mrb[0].mxu0
    %v1258 = vadd.f32 0.0, %v1257
    %v1259 = vpop.f32.mrb[0].mxu0
    %1260 = vmatprep.mubr.f32.mxu0 0.0
    %1261 = vmatmul.mubr.f32.gmra.mrb[0].mxu0 %v1163
    %v1262 = vpop.f32.mrb[0].mxu0
    %v1263 = vadd.f32 0.0, %v1262
    %v1264 = vpop.f32.mrb[0].mxu0
    %1265 = vdwg.mxu0
    %v1266 = vadd.f32 %v1156, %v1248
    %v1267 = vadd.f32 %v1157, %v1253
    %v1268 = vadd.f32 %v1158, %v1258
    %v1269 = vadd.f32 %v1159, %v1263
    %1270 = vadd.xlane.f32.xlu0 %v1266
    %v1271 = vpop.xlane.xlu0 %1270
    %1272 = vadd.xlane.f32.xlu0 %v1267
    %v1273 = vpop.xlane.xlu0 %1272
    %1274 = vadd.xlane.f32.xlu0 %v1268
    %v1275 = vpop.xlane.xlu0 %1274
    %1276 = vadd.xlane.f32.xlu0 %v1269
    %v1277 = vpop.xlane.xlu0 %1276
    %v1278 = vmul.f32 %v1271, %v866
    %v1279 = vmul.f32 %v1273, %v866
    %v1280 = vmul.f32 %v1275, %v866
    %v1281 = vmul.f32 %v1277, %v866
    %v1282 = vsub.f32 %v1266, %v1278
    %v1283 = vsub.f32 %v1267, %v1279
    %v1284 = vsub.f32 %v1268, %v1280
    %v1285 = vsub.f32 %v1269, %v1281
    %v1286 = vmul.f32 %v1282, %v1282
    %v1287 = vmul.f32 %v1283, %v1283
    %v1288 = vmul.f32 %v1284, %v1284
    %v1289 = vmul.f32 %v1285, %v1285
    %1290 = vadd.xlane.f32.xlu0 %v1286
    %v1291 = vpop.xlane.xlu0 %1290
    %1292 = vadd.xlane.f32.xlu0 %v1287
    %v1293 = vpop.xlane.xlu0 %1292
    %1294 = vadd.xlane.f32.xlu0 %v1288
    %v1295 = vpop.xlane.xlu0 %1294
    %1296 = vadd.xlane.f32.xlu0 %v1289
    %v1297 = vpop.xlane.xlu0 %1296
    %v1298 = vmul.f32 %v1291, %v866
    %v1299 = vmul.f32 %v1293, %v866
    %v1300 = vmul.f32 %v1295, %v866
    %v1301 = vmul.f32 %v1297, %v866
    %v1302 = vadd.f32 %v1298, 1e-05
    %v1303 = vadd.f32 %v1299, 1e-05
    %v1304 = vadd.f32 %v1300, 1e-05
    %v1305 = vadd.f32 %v1301, 1e-05
    %v1306 = vrsqrt.pop %v1302
    %v1307 = vrsqrt.pop %v1303
    %v1308 = vrsqrt.pop %v1304
    %v1309 = vrsqrt.pop %v1305
    %v1310 = vmul.f32 %v1282, %v1306
    %v1311 = vmul.f32 %v1283, %v1307
    %v1312 = vmul.f32 %v1284, %v1308
    %v1313 = vmul.f32 %v1285, %v1309
    %v1314 = vld [vmem:[%s10] sm:$0x1]
    %v1316 = vlaneseq
    %v1317 = vshrl.u32 %v1316, 7
    %v1318 = vsub.s32 0, %v1317
    %v1319 = vrot.slane %v1314, %v1318
    %v1321 = vmul.f32 %v1310, %v1319
    %v1322 = vmul.f32 %v1311, %v1319
    %v1323 = vmul.f32 %v1312, %v1319
    %v1324 = vmul.f32 %v1313, %v1319
    %v1325 = vld [vmem:[%s11] sm:$0x1]
    %v1327 = vlaneseq
    %v1328 = vshrl.u32 %v1327, 7
    %v1329 = vsub.s32 0, %v1328
    %v1330 = vrot.slane %v1325, %v1329
    %v1332 = vadd.f32 %v1321, %v1330
    %v1333 = vadd.f32 %v1322, %v1330
    %v1334 = vadd.f32 %v1323, %v1330
    %v1335 = vadd.f32 %v1324, %v1330
    %v1336 = vmax.f32 %v1332, 0.0
    %v1337 = vmax.f32 %v1333, 0.0
    %v1338 = vmax.f32 %v1334, 0.0
    %v1339 = vmax.f32 %v1335, 0.0
    %v1340 = vld [vmem:[%s14] sm:$0xf]
    %v1342 = vlaneseq
    %v1343 = vshrl.u32 %v1342, 7
    %v1344 = vsub.s32 0, %v1343
    %v1345 = vrot.slane %v1340, %v1344
    %v1346 = vlaneseq
    %v1347 = vshrl.u32 %v1346, 7
    %v1348 = vsub.s32 1, %v1347
    %v1349 = vrot.slane %v1340, %v1348
    %v1350 = vlaneseq
    %v1351 = vshrl.u32 %v1350, 7
    %v1352 = vsub.s32 2, %v1351
    %v1353 = vrot.slane %v1340, %v1352
    %v1354 = vlaneseq
    %v1355 = vshrl.u32 %v1354, 7
    %v1356 = vsub.s32 3, %v1355
    %v1357 = vrot.slane %v1340, %v1356
    %v1362 = vadd.f32 %v1345, 0.0
    %v1363 = vadd.f32 %v1349, 0.0
    %v1364 = vadd.f32 %v1353, 0.0
    %v1365 = vadd.f32 %v1357, 0.0
    %v1366 = vld [vmem:[%s12] sm:$0xff]
    %v1367 = vld [vmem:[%s12 + $0x8] sm:$0xff]
    %v1368 = vld [vmem:[%s12 + $0x10] sm:$0xff]
    %v1369 = vld [vmem:[%s12 + $0x18] sm:$0xff]
    %v1370 = vld [vmem:[%s12 + $0x20] sm:$0xff]
    %v1371 = vld [vmem:[%s12 + $0x28] sm:$0xff]
    %v1372 = vld [vmem:[%s12 + $0x30] sm:$0xff]
    %v1373 = vld [vmem:[%s12 + $0x38] sm:$0xff]
    %v1374 = vld [vmem:[%s12 + $0x40] sm:$0xff]
    %v1375 = vld [vmem:[%s12 + $0x48] sm:$0xff]
    %v1376 = vld [vmem:[%s12 + $0x50] sm:$0xff]
    %v1377 = vld [vmem:[%s12 + $0x58] sm:$0xff]
    %v1378 = vld [vmem:[%s12 + $0x60] sm:$0xff]
    %v1379 = vld [vmem:[%s12 + $0x68] sm:$0xff]
    %v1380 = vld [vmem:[%s12 + $0x70] sm:$0xff]
    %v1381 = vld [vmem:[%s12 + $0x78] sm:$0xff]
    %v1382 = vld [vmem:[%s12 + $0x80] sm:$0xff]
    %v1383 = vld [vmem:[%s12 + $0x88] sm:$0xff]
    %v1384 = vld [vmem:[%s12 + $0x90] sm:$0xff]
    %v1385 = vld [vmem:[%s12 + $0x98] sm:$0xff]
    %v1386 = vld [vmem:[%s12 + $0xa0] sm:$0xff]
    %v1387 = vld [vmem:[%s12 + $0xa8] sm:$0xff]
    %v1388 = vld [vmem:[%s12 + $0xb0] sm:$0xff]
    %v1389 = vld [vmem:[%s12 + $0xb8] sm:$0xff]
    %v1390 = vld [vmem:[%s12 + $0xc0] sm:$0xff]
    %v1391 = vld [vmem:[%s12 + $0xc8] sm:$0xff]
    %v1392 = vld [vmem:[%s12 + $0xd0] sm:$0xff]
    %v1393 = vld [vmem:[%s12 + $0xd8] sm:$0xff]
    %v1394 = vld [vmem:[%s12 + $0xe0] sm:$0xff]
    %v1395 = vld [vmem:[%s12 + $0xe8] sm:$0xff]
    %v1396 = vld [vmem:[%s12 + $0xf0] sm:$0xff]
    %v1397 = vld [vmem:[%s12 + $0xf8] sm:$0xff]
    %v1398 = vld [vmem:[%s12 + $0x100] sm:$0xff]
    %v1399 = vld [vmem:[%s12 + $0x108] sm:$0xff]
    %v1400 = vld [vmem:[%s12 + $0x110] sm:$0xff]
    %v1401 = vld [vmem:[%s12 + $0x118] sm:$0xff]
    %v1402 = vld [vmem:[%s12 + $0x120] sm:$0xff]
    %v1403 = vld [vmem:[%s12 + $0x128] sm:$0xff]
    %v1404 = vld [vmem:[%s12 + $0x130] sm:$0xff]
    %v1405 = vld [vmem:[%s12 + $0x138] sm:$0xff]
    %v1406 = vld [vmem:[%s12 + $0x140] sm:$0xff]
    %v1407 = vld [vmem:[%s12 + $0x148] sm:$0xff]
    %v1408 = vld [vmem:[%s12 + $0x150] sm:$0xff]
    %v1409 = vld [vmem:[%s12 + $0x158] sm:$0xff]
    %v1410 = vld [vmem:[%s12 + $0x160] sm:$0xff]
    %v1411 = vld [vmem:[%s12 + $0x168] sm:$0xff]
    %v1412 = vld [vmem:[%s12 + $0x170] sm:$0xff]
    %v1413 = vld [vmem:[%s12 + $0x178] sm:$0xff]
    %v1414 = vld [vmem:[%s12 + $0x180] sm:$0xff]
    %v1415 = vld [vmem:[%s12 + $0x188] sm:$0xff]
    %v1416 = vld [vmem:[%s12 + $0x190] sm:$0xff]
    %v1417 = vld [vmem:[%s12 + $0x198] sm:$0xff]
    %v1418 = vld [vmem:[%s12 + $0x1a0] sm:$0xff]
    %v1419 = vld [vmem:[%s12 + $0x1a8] sm:$0xff]
    %v1420 = vld [vmem:[%s12 + $0x1b0] sm:$0xff]
    %v1421 = vld [vmem:[%s12 + $0x1b8] sm:$0xff]
    %v1422 = vld [vmem:[%s12 + $0x1c0] sm:$0xff]
    %v1423 = vld [vmem:[%s12 + $0x1c8] sm:$0xff]
    %v1424 = vld [vmem:[%s12 + $0x1d0] sm:$0xff]
    %v1425 = vld [vmem:[%s12 + $0x1d8] sm:$0xff]
    %v1426 = vld [vmem:[%s12 + $0x1e0] sm:$0xff]
    %v1427 = vld [vmem:[%s12 + $0x1e8] sm:$0xff]
    %v1428 = vld [vmem:[%s12 + $0x1f0] sm:$0xff]
    %v1429 = vld [vmem:[%s12 + $0x1f8] sm:$0xff]
    %1430 = vmatprep.subr.mxu0 %v1367
    %1431 = vmatpush1.msra.mxu0 %v1366
    %1432 = vmatprep.subr.mxu0 %v1371
    %1433 = vmatpush1.msra.mxu0 %v1370
    %1434 = vmatprep.subr.mxu0 %v1375
    %1435 = vmatpush1.msra.mxu0 %v1374
    %1436 = vmatprep.subr.mxu0 %v1379
    %1437 = vmatpush1.msra.mxu0 %v1378
    %1438 = vmatprep.subr.mxu0 %v1383
    %1439 = vmatpush1.msra.mxu0 %v1382
    %1440 = vmatprep.subr.mxu0 %v1387
    %1441 = vmatpush1.msra.mxu0 %v1386
    %1442 = vmatprep.subr.mxu0 %v1391
    %1443 = vmatpush1.msra.mxu0 %v1390
    %1444 = vmatprep.subr.mxu0 %v1395
    %1445 = vmatpush1.msra.mxu0 %v1394
    %1446 = vmatprep.subr.mxu0 %v1399
    %1447 = vmatpush1.msra.mxu0 %v1398
    %1448 = vmatprep.subr.mxu0 %v1403
    %1449 = vmatpush1.msra.mxu0 %v1402
    %1450 = vmatprep.subr.mxu0 %v1407
    %1451 = vmatpush1.msra.mxu0 %v1406
    %1452 = vmatprep.subr.mxu0 %v1411
    %1453 = vmatpush1.msra.mxu0 %v1410
    %1454 = vmatprep.subr.mxu0 %v1415
    %1455 = vmatpush1.msra.mxu0 %v1414
    %1456 = vmatprep.subr.mxu0 %v1419
    %1457 = vmatpush1.msra.mxu0 %v1418
    %1458 = vmatprep.subr.mxu0 %v1423
    %1459 = vmatpush1.msra.mxu0 %v1422
    %1460 = vmatprep.subr.mxu0 %v1427
    %1461 = vmatpush1.msra.mxu0 %v1426
    %1462 = vmatprep.subr.mxu0 0.0
    %1463 = vmatpush1.msra.mxu0 0.0
    %1464 = vmatprep.subr.mxu0 0.0
    %1465 = vmatpush1.msra.mxu0 0.0
    %1466 = vmatprep.subr.mxu0 0.0
    %1467 = vmatpush1.msra.mxu0 0.0
    %1468 = vmatprep.subr.mxu0 0.0
    %1469 = vmatpush1.msra.mxu0 0.0
    %1470 = vmatprep.subr.mxu0 0.0
    %1471 = vmatpush1.msra.mxu0 0.0
    %1472 = vmatprep.subr.mxu0 0.0
    %1473 = vmatpush1.msra.mxu0 0.0
    %1474 = vmatprep.subr.mxu0 0.0
    %1475 = vmatpush1.msra.mxu0 0.0
    %1476 = vmatprep.subr.mxu0 0.0
    %1477 = vmatpush1.msra.mxu0 0.0
    %1478 = vmatprep.subr.mxu0 0.0
    %1479 = vmatpush1.msra.mxu0 0.0
    %1480 = vmatprep.subr.mxu0 0.0
    %1481 = vmatpush1.msra.mxu0 0.0
    %1482 = vmatprep.subr.mxu0 0.0
    %1483 = vmatpush1.msra.mxu0 0.0
    %1484 = vmatprep.subr.mxu0 0.0
    %1485 = vmatpush1.msra.mxu0 0.0
    %1486 = vmatprep.subr.mxu0 0.0
    %1487 = vmatpush1.msra.mxu0 0.0
    %1488 = vmatprep.subr.mxu0 0.0
    %1489 = vmatpush1.msra.mxu0 0.0
    %1490 = vmatprep.subr.mxu0 0.0
    %1491 = vmatpush1.msra.mxu0 0.0
    %1492 = vmatprep.subr.mxu0 0.0
    %1493 = vmatpush1.msra.mxu0 0.0
    %1494 = vmatprep.mubr.f32.mxu0 0.0
    %1495 = vmatmul.mubr.f32.gmra.mrb[0].mxu0 %v1336
    %v1496 = vpop.f32.mrb[0].mxu0
    %v1497 = vadd.f32 0.0, %v1496
    %v1498 = vpop.f32.mrb[0].mxu0
    %v1499 = vadd.f32 0.0, %v1498
    %1500 = vmatprep.mubr.f32.mxu0 0.0
    %1501 = vmatmul.mubr.f32.gmra.mrb[0].mxu0 %v1337
    %v1502 = vpop.f32.mrb[0].mxu0
    %v1503 = vadd.f32 0.0, %v1502
    %v1504 = vpop.f32.mrb[0].mxu0
    %v1505 = vadd.f32 0.0, %v1504
    %1506 = vmatprep.mubr.f32.mxu0 0.0
    %1507 = vmatmul.mubr.f32.gmra.mrb[0].mxu0 %v1338
    %v1508 = vpop.f32.mrb[0].mxu0
    %v1509 = vadd.f32 0.0, %v1508
    %v1510 = vpop.f32.mrb[0].mxu0
    %v1511 = vadd.f32 0.0, %v1510
    %1512 = vmatprep.mubr.f32.mxu0 0.0
    %1513 = vmatmul.mubr.f32.gmra.mrb[0].mxu0 %v1339
    %v1514 = vpop.f32.mrb[0].mxu0
    %v1515 = vadd.f32 0.0, %v1514
    %v1516 = vpop.f32.mrb[0].mxu0
    %v1517 = vadd.f32 0.0, %v1516
    %1518 = vdwg.mxu0
    %1519 = vmatprep.subr.mxu0 %v1369
    %1520 = vmatpush1.msra.mxu0 %v1368
    %1521 = vmatprep.subr.mxu0 %v1373
    %1522 = vmatpush1.msra.mxu0 %v1372
    %1523 = vmatprep.subr.mxu0 %v1377
    %1524 = vmatpush1.msra.mxu0 %v1376
    %1525 = vmatprep.subr.mxu0 %v1381
    %1526 = vmatpush1.msra.mxu0 %v1380
    %1527 = vmatprep.subr.mxu0 %v1385
    %1528 = vmatpush1.msra.mxu0 %v1384
    %1529 = vmatprep.subr.mxu0 %v1389
    %1530 = vmatpush1.msra.mxu0 %v1388
    %1531 = vmatprep.subr.mxu0 %v1393
    %1532 = vmatpush1.msra.mxu0 %v1392
    %1533 = vmatprep.subr.mxu0 %v1397
    %1534 = vmatpush1.msra.mxu0 %v1396
    %1535 = vmatprep.subr.mxu0 %v1401
    %1536 = vmatpush1.msra.mxu0 %v1400
    %1537 = vmatprep.subr.mxu0 %v1405
    %1538 = vmatpush1.msra.mxu0 %v1404
    %1539 = vmatprep.subr.mxu0 %v1409
    %1540 = vmatpush1.msra.mxu0 %v1408
    %1541 = vmatprep.subr.mxu0 %v1413
    %1542 = vmatpush1.msra.mxu0 %v1412
    %1543 = vmatprep.subr.mxu0 %v1417
    %1544 = vmatpush1.msra.mxu0 %v1416
    %1545 = vmatprep.subr.mxu0 %v1421
    %1546 = vmatpush1.msra.mxu0 %v1420
    %1547 = vmatprep.subr.mxu0 %v1425
    %1548 = vmatpush1.msra.mxu0 %v1424
    %1549 = vmatprep.subr.mxu0 %v1429
    %1550 = vmatpush1.msra.mxu0 %v1428
    %1551 = vmatprep.subr.mxu0 0.0
    %1552 = vmatpush1.msra.mxu0 0.0
    %1553 = vmatprep.subr.mxu0 0.0
    %1554 = vmatpush1.msra.mxu0 0.0
    %1555 = vmatprep.subr.mxu0 0.0
    %1556 = vmatpush1.msra.mxu0 0.0
    %1557 = vmatprep.subr.mxu0 0.0
    %1558 = vmatpush1.msra.mxu0 0.0
    %1559 = vmatprep.subr.mxu0 0.0
    %1560 = vmatpush1.msra.mxu0 0.0
    %1561 = vmatprep.subr.mxu0 0.0
    %1562 = vmatpush1.msra.mxu0 0.0
    %1563 = vmatprep.subr.mxu0 0.0
    %1564 = vmatpush1.msra.mxu0 0.0
    %1565 = vmatprep.subr.mxu0 0.0
    %1566 = vmatpush1.msra.mxu0 0.0
    %1567 = vmatprep.subr.mxu0 0.0
    %1568 = vmatpush1.msra.mxu0 0.0
    %1569 = vmatprep.subr.mxu0 0.0
    %1570 = vmatpush1.msra.mxu0 0.0
    %1571 = vmatprep.subr.mxu0 0.0
    %1572 = vmatpush1.msra.mxu0 0.0
    %1573 = vmatprep.subr.mxu0 0.0
    %1574 = vmatpush1.msra.mxu0 0.0
    %1575 = vmatprep.subr.mxu0 0.0
    %1576 = vmatpush1.msra.mxu0 0.0
    %1577 = vmatprep.subr.mxu0 0.0
    %1578 = vmatpush1.msra.mxu0 0.0
    %1579 = vmatprep.subr.mxu0 0.0
    %1580 = vmatpush1.msra.mxu0 0.0
    %1581 = vmatprep.subr.mxu0 0.0
    %1582 = vmatpush1.msra.mxu0 0.0
    %1583 = vmatprep.mubr.f32.mxu0 0.0
    %1584 = vmatmul.mubr.f32.gmra.mrb[0].mxu0 %v1336
    %v1585 = vpop.f32.mrb[0].mxu0
    %v1586 = vadd.f32 0.0, %v1585
    %v1587 = vpop.f32.mrb[0].mxu0
    %v1588 = vadd.f32 0.0, %v1587
    %1589 = vmatprep.mubr.f32.mxu0 0.0
    %1590 = vmatmul.mubr.f32.gmra.mrb[0].mxu0 %v1337
    %v1591 = vpop.f32.mrb[0].mxu0
    %v1592 = vadd.f32 0.0, %v1591
    %v1593 = vpop.f32.mrb[0].mxu0
    %v1594 = vadd.f32 0.0, %v1593
    %1595 = vmatprep.mubr.f32.mxu0 0.0
    %1596 = vmatmul.mubr.f32.gmra.mrb[0].mxu0 %v1338
    %v1597 = vpop.f32.mrb[0].mxu0
    %v1598 = vadd.f32 0.0, %v1597
    %v1599 = vpop.f32.mrb[0].mxu0
    %v1600 = vadd.f32 0.0, %v1599
    %1601 = vmatprep.mubr.f32.mxu0 0.0
    %1602 = vmatmul.mubr.f32.gmra.mrb[0].mxu0 %v1339
    %v1603 = vpop.f32.mrb[0].mxu0
    %v1604 = vadd.f32 0.0, %v1603
    %v1605 = vpop.f32.mrb[0].mxu0
    %v1606 = vadd.f32 0.0, %v1605
    %1607 = vdwg.mxu0
    %v1608 = vadd.f32 %v1362, %v1497
    %v1609 = vadd.f32 %v1363, %v1499
    %v1610 = vadd.f32 %v1364, %v1586
    %v1611 = vadd.f32 %v1365, %v1588
    %v1612 = vadd.f32 %v1362, %v1503
    %v1613 = vadd.f32 %v1363, %v1505
    %v1614 = vadd.f32 %v1364, %v1592
    %v1615 = vadd.f32 %v1365, %v1594
    %v1616 = vadd.f32 %v1362, %v1509
    %v1617 = vadd.f32 %v1363, %v1511
    %v1618 = vadd.f32 %v1364, %v1598
    %v1619 = vadd.f32 %v1365, %v1600
    %v1620 = vadd.f32 %v1362, %v1515
    %v1621 = vadd.f32 %v1363, %v1517
    %v1622 = vadd.f32 %v1364, %v1604
    %v1623 = vadd.f32 %v1365, %v1606
    %1624 = vst [vmem:[#allocation4] sm:$0xff] %v1608
    %1625 = vst [vmem:[#allocation4 + $0x8] sm:$0xff] %v1609
    %1626 = vst [vmem:[#allocation4 + $0x10] sm:$0xff] %v1610
    %1627 = vst [vmem:[#allocation4 + $0x18] sm:$0xff] %v1611
    %1628 = vst [vmem:[#allocation4 + $0x20] sm:$0xff] %v1612
    %1629 = vst [vmem:[#allocation4 + $0x28] sm:$0xff] %v1613
    %1630 = vst [vmem:[#allocation4 + $0x30] sm:$0xff] %v1614
    %1631 = vst [vmem:[#allocation4 + $0x38] sm:$0xff] %v1615
    %1632 = vst [vmem:[#allocation4 + $0x40] sm:$0xff] %v1616
    %1633 = vst [vmem:[#allocation4 + $0x48] sm:$0xff] %v1617
    %1634 = vst [vmem:[#allocation4 + $0x50] sm:$0xff] %v1618
    %1635 = vst [vmem:[#allocation4 + $0x58] sm:$0xff] %v1619
    %1636 = vst [vmem:[#allocation4 + $0x60] sm:$0xff] %v1620
    %1637 = vst [vmem:[#allocation4 + $0x68] sm:$0xff] %v1621
    %1638 = vst [vmem:[#allocation4 + $0x70] sm:$0xff] %v1622
    %1639 = vst [vmem:[#allocation4 + $0x78] sm:$0xff] %v1623
    %v1640 = vld [vmem:[%s17] sm:$0xf]
    %v1642 = vlaneseq
    %v1643 = vshrl.u32 %v1642, 7
    %v1644 = vsub.s32 0, %v1643
    %v1645 = vrot.slane %v1640, %v1644
    %v1646 = vlaneseq
    %v1647 = vshrl.u32 %v1646, 7
    %v1648 = vsub.s32 1, %v1647
    %v1649 = vrot.slane %v1640, %v1648
    %v1650 = vlaneseq
    %v1651 = vshrl.u32 %v1650, 7
    %v1652 = vsub.s32 2, %v1651
    %v1653 = vrot.slane %v1640, %v1652
    %v1654 = vlaneseq
    %v1655 = vshrl.u32 %v1654, 7
    %v1656 = vsub.s32 3, %v1655
    %v1657 = vrot.slane %v1640, %v1656
    %v1662 = vadd.f32 %v1645, 0.0
    %v1663 = vadd.f32 %v1649, 0.0
    %v1664 = vadd.f32 %v1653, 0.0
    %v1665 = vadd.f32 %v1657, 0.0
    %v1666 = vld [vmem:[#allocation15] sm:$0xff]
    %v1667 = vld [vmem:[#allocation15 + $0x8] sm:$0xff]
    %v1668 = vld [vmem:[#allocation15 + $0x10] sm:$0xff]
    %v1669 = vld [vmem:[#allocation15 + $0x18] sm:$0xff]
    %v1670 = vld [vmem:[#allocation15 + $0x20] sm:$0xff]
    %v1671 = vld [vmem:[#allocation15 + $0x28] sm:$0xff]
    %v1672 = vld [vmem:[#allocation15 + $0x30] sm:$0xff]
    %v1673 = vld [vmem:[#allocation15 + $0x38] sm:$0xff]
    %v1674 = vld [vmem:[#allocation15 + $0x40] sm:$0xff]
    %v1675 = vld [vmem:[#allocation15 + $0x48] sm:$0xff]
    %v1676 = vld [vmem:[#allocation15 + $0x50] sm:$0xff]
    %v1677 = vld [vmem:[#allocation15 + $0x58] sm:$0xff]
    %v1678 = vld [vmem:[#allocation15 + $0x60] sm:$0xff]
    %v1679 = vld [vmem:[#allocation15 + $0x68] sm:$0xff]
    %v1680 = vld [vmem:[#allocation15 + $0x70] sm:$0xff]
    %v1681 = vld [vmem:[#allocation15 + $0x78] sm:$0xff]
    %v1682 = vld [vmem:[#allocation15 + $0x80] sm:$0xff]
    %v1683 = vld [vmem:[#allocation15 + $0x88] sm:$0xff]
    %v1684 = vld [vmem:[#allocation15 + $0x90] sm:$0xff]
    %v1685 = vld [vmem:[#allocation15 + $0x98] sm:$0xff]
    %v1686 = vld [vmem:[#allocation15 + $0xa0] sm:$0xff]
    %v1687 = vld [vmem:[#allocation15 + $0xa8] sm:$0xff]
    %v1688 = vld [vmem:[#allocation15 + $0xb0] sm:$0xff]
    %v1689 = vld [vmem:[#allocation15 + $0xb8] sm:$0xff]
    %v1690 = vld [vmem:[#allocation15 + $0xc0] sm:$0xff]
    %v1691 = vld [vmem:[#allocation15 + $0xc8] sm:$0xff]
    %v1692 = vld [vmem:[#allocation15 + $0xd0] sm:$0xff]
    %v1693 = vld [vmem:[#allocation15 + $0xd8] sm:$0xff]
    %v1694 = vld [vmem:[#allocation15 + $0xe0] sm:$0xff]
    %v1695 = vld [vmem:[#allocation15 + $0xe8] sm:$0xff]
    %v1696 = vld [vmem:[#allocation15 + $0xf0] sm:$0xff]
    %v1697 = vld [vmem:[#allocation15 + $0xf8] sm:$0xff]
    %v1698 = vld [vmem:[#allocation15 + $0x100] sm:$0xff]
    %v1699 = vld [vmem:[#allocation15 + $0x108] sm:$0xff]
    %v1700 = vld [vmem:[#allocation15 + $0x110] sm:$0xff]
    %v1701 = vld [vmem:[#allocation15 + $0x118] sm:$0xff]
    %v1702 = vld [vmem:[#allocation15 + $0x120] sm:$0xff]
    %v1703 = vld [vmem:[#allocation15 + $0x128] sm:$0xff]
    %v1704 = vld [vmem:[#allocation15 + $0x130] sm:$0xff]
    %v1705 = vld [vmem:[#allocation15 + $0x138] sm:$0xff]
    %v1706 = vld [vmem:[#allocation15 + $0x140] sm:$0xff]
    %v1707 = vld [vmem:[#allocation15 + $0x148] sm:$0xff]
    %v1708 = vld [vmem:[#allocation15 + $0x150] sm:$0xff]
    %v1709 = vld [vmem:[#allocation15 + $0x158] sm:$0xff]
    %v1710 = vld [vmem:[#allocation15 + $0x160] sm:$0xff]
    %v1711 = vld [vmem:[#allocation15 + $0x168] sm:$0xff]
    %v1712 = vld [vmem:[#allocation15 + $0x170] sm:$0xff]
    %v1713 = vld [vmem:[#allocation15 + $0x178] sm:$0xff]
    %v1714 = vld [vmem:[#allocation15 + $0x180] sm:$0xff]
    %v1715 = vld [vmem:[#allocation15 + $0x188] sm:$0xff]
    %v1716 = vld [vmem:[#allocation15 + $0x190] sm:$0xff]
    %v1717 = vld [vmem:[#allocation15 + $0x198] sm:$0xff]
    %v1718 = vld [vmem:[#allocation15 + $0x1a0] sm:$0xff]
    %v1719 = vld [vmem:[#allocation15 + $0x1a8] sm:$0xff]
    %v1720 = vld [vmem:[#allocation15 + $0x1b0] sm:$0xff]
    %v1721 = vld [vmem:[#allocation15 + $0x1b8] sm:$0xff]
    %v1722 = vld [vmem:[#allocation15 + $0x1c0] sm:$0xff]
    %v1723 = vld [vmem:[#allocation15 + $0x1c8] sm:$0xff]
    %v1724 = vld [vmem:[#allocation15 + $0x1d0] sm:$0xff]
    %v1725 = vld [vmem:[#allocation15 + $0x1d8] sm:$0xff]
    %v1726 = vld [vmem:[#allocation15 + $0x1e0] sm:$0xff]
    %v1727 = vld [vmem:[#allocation15 + $0x1e8] sm:$0xff]
    %v1728 = vld [vmem:[#allocation15 + $0x1f0] sm:$0xff]
    %v1729 = vld [vmem:[#allocation15 + $0x1f8] sm:$0xff]
    %1730 = vmatprep.subr.mxu0 %v1667
    %1731 = vmatpush1.msra.mxu0 %v1666
    %1732 = vmatprep.subr.mxu0 %v1671
    %1733 = vmatpush1.msra.mxu0 %v1670
    %1734 = vmatprep.subr.mxu0 %v1675
    %1735 = vmatpush1.msra.mxu0 %v1674
    %1736 = vmatprep.subr.mxu0 %v1679
    %1737 = vmatpush1.msra.mxu0 %v1678
    %1738 = vmatprep.subr.mxu0 %v1683
    %1739 = vmatpush1.msra.mxu0 %v1682
    %1740 = vmatprep.subr.mxu0 %v1687
    %1741 = vmatpush1.msra.mxu0 %v1686
    %1742 = vmatprep.subr.mxu0 %v1691
    %1743 = vmatpush1.msra.mxu0 %v1690
    %1744 = vmatprep.subr.mxu0 %v1695
    %1745 = vmatpush1.msra.mxu0 %v1694
    %1746 = vmatprep.subr.mxu0 %v1699
    %1747 = vmatpush1.msra.mxu0 %v1698
    %1748 = vmatprep.subr.mxu0 %v1703
    %1749 = vmatpush1.msra.mxu0 %v1702
    %1750 = vmatprep.subr.mxu0 %v1707
    %1751 = vmatpush1.msra.mxu0 %v1706
    %1752 = vmatprep.subr.mxu0 %v1711
    %1753 = vmatpush1.msra.mxu0 %v1710
    %1754 = vmatprep.subr.mxu0 %v1715
    %1755 = vmatpush1.msra.mxu0 %v1714
    %1756 = vmatprep.subr.mxu0 %v1719
    %1757 = vmatpush1.msra.mxu0 %v1718
    %1758 = vmatprep.subr.mxu0 %v1723
    %1759 = vmatpush1.msra.mxu0 %v1722
    %1760 = vmatprep.subr.mxu0 %v1727
    %1761 = vmatpush1.msra.mxu0 %v1726
    %1762 = vmatprep.subr.mxu0 0.0
    %1763 = vmatpush1.msra.mxu0 0.0
    %1764 = vmatprep.subr.mxu0 0.0
    %1765 = vmatpush1.msra.mxu0 0.0
    %1766 = vmatprep.subr.mxu0 0.0
    %1767 = vmatpush1.msra.mxu0 0.0
    %1768 = vmatprep.subr.mxu0 0.0
    %1769 = vmatpush1.msra.mxu0 0.0
    %1770 = vmatprep.subr.mxu0 0.0
    %1771 = vmatpush1.msra.mxu0 0.0
    %1772 = vmatprep.subr.mxu0 0.0
    %1773 = vmatpush1.msra.mxu0 0.0
    %1774 = vmatprep.subr.mxu0 0.0
    %1775 = vmatpush1.msra.mxu0 0.0
    %1776 = vmatprep.subr.mxu0 0.0
    %1777 = vmatpush1.msra.mxu0 0.0
    %1778 = vmatprep.subr.mxu0 0.0
    %1779 = vmatpush1.msra.mxu0 0.0
    %1780 = vmatprep.subr.mxu0 0.0
    %1781 = vmatpush1.msra.mxu0 0.0
    %1782 = vmatprep.subr.mxu0 0.0
    %1783 = vmatpush1.msra.mxu0 0.0
    %1784 = vmatprep.subr.mxu0 0.0
    %1785 = vmatpush1.msra.mxu0 0.0
    %1786 = vmatprep.subr.mxu0 0.0
    %1787 = vmatpush1.msra.mxu0 0.0
    %1788 = vmatprep.subr.mxu0 0.0
    %1789 = vmatpush1.msra.mxu0 0.0
    %1790 = vmatprep.subr.mxu0 0.0
    %1791 = vmatpush1.msra.mxu0 0.0
    %1792 = vmatprep.subr.mxu0 0.0
    %1793 = vmatpush1.msra.mxu0 0.0
    %1794 = vmatprep.mubr.f32.mxu0 0.0
    %1795 = vmatmul.mubr.f32.gmra.mrb[0].mxu0 %v1336
    %v1796 = vpop.f32.mrb[0].mxu0
    %v1797 = vadd.f32 0.0, %v1796
    %v1798 = vpop.f32.mrb[0].mxu0
    %v1799 = vadd.f32 0.0, %v1798
    %1800 = vmatprep.mubr.f32.mxu0 0.0
    %1801 = vmatmul.mubr.f32.gmra.mrb[0].mxu0 %v1337
    %v1802 = vpop.f32.mrb[0].mxu0
    %v1803 = vadd.f32 0.0, %v1802
    %v1804 = vpop.f32.mrb[0].mxu0
    %v1805 = vadd.f32 0.0, %v1804
    %1806 = vmatprep.mubr.f32.mxu0 0.0
    %1807 = vmatmul.mubr.f32.gmra.mrb[0].mxu0 %v1338
    %v1808 = vpop.f32.mrb[0].mxu0
    %v1809 = vadd.f32 0.0, %v1808
    %v1810 = vpop.f32.mrb[0].mxu0
    %v1811 = vadd.f32 0.0, %v1810
    %1812 = vmatprep.mubr.f32.mxu0 0.0
    %1813 = vmatmul.mubr.f32.gmra.mrb[0].mxu0 %v1339
    %v1814 = vpop.f32.mrb[0].mxu0
    %v1815 = vadd.f32 0.0, %v1814
    %v1816 = vpop.f32.mrb[0].mxu0
    %v1817 = vadd.f32 0.0, %v1816
    %1818 = vdwg.mxu0
    %1819 = vmatprep.subr.mxu0 %v1669
    %1820 = vmatpush1.msra.mxu0 %v1668
    %1821 = vmatprep.subr.mxu0 %v1673
    %1822 = vmatpush1.msra.mxu0 %v1672
    %1823 = vmatprep.subr.mxu0 %v1677
    %1824 = vmatpush1.msra.mxu0 %v1676
    %1825 = vmatprep.subr.mxu0 %v1681
    %1826 = vmatpush1.msra.mxu0 %v1680
    %1827 = vmatprep.subr.mxu0 %v1685
    %1828 = vmatpush1.msra.mxu0 %v1684
    %1829 = vmatprep.subr.mxu0 %v1689
    %1830 = vmatpush1.msra.mxu0 %v1688
    %1831 = vmatprep.subr.mxu0 %v1693
    %1832 = vmatpush1.msra.mxu0 %v1692
    %1833 = vmatprep.subr.mxu0 %v1697
    %1834 = vmatpush1.msra.mxu0 %v1696
    %1835 = vmatprep.subr.mxu0 %v1701
    %1836 = vmatpush1.msra.mxu0 %v1700
    %1837 = vmatprep.subr.mxu0 %v1705
    %1838 = vmatpush1.msra.mxu0 %v1704
    %1839 = vmatprep.subr.mxu0 %v1709
    %1840 = vmatpush1.msra.mxu0 %v1708
    %1841 = vmatprep.subr.mxu0 %v1713
    %1842 = vmatpush1.msra.mxu0 %v1712
    %1843 = vmatprep.subr.mxu0 %v1717
    %1844 = vmatpush1.msra.mxu0 %v1716
    %1845 = vmatprep.subr.mxu0 %v1721
    %1846 = vmatpush1.msra.mxu0 %v1720
    %1847 = vmatprep.subr.mxu0 %v1725
    %1848 = vmatpush1.msra.mxu0 %v1724
    %1849 = vmatprep.subr.mxu0 %v1729
    %1850 = vmatpush1.msra.mxu0 %v1728
    %1851 = vmatprep.subr.mxu0 0.0
    %1852 = vmatpush1.msra.mxu0 0.0
    %1853 = vmatprep.subr.mxu0 0.0
    %1854 = vmatpush1.msra.mxu0 0.0
    %1855 = vmatprep.subr.mxu0 0.0
    %1856 = vmatpush1.msra.mxu0 0.0
    %1857 = vmatprep.subr.mxu0 0.0
    %1858 = vmatpush1.msra.mxu0 0.0
    %1859 = vmatprep.subr.mxu0 0.0
    %1860 = vmatpush1.msra.mxu0 0.0
    %1861 = vmatprep.subr.mxu0 0.0
    %1862 = vmatpush1.msra.mxu0 0.0
    %1863 = vmatprep.subr.mxu0 0.0
    %1864 = vmatpush1.msra.mxu0 0.0
    %1865 = vmatprep.subr.mxu0 0.0
    %1866 = vmatpush1.msra.mxu0 0.0
    %1867 = vmatprep.subr.mxu0 0.0
    %1868 = vmatpush1.msra.mxu0 0.0
    %1869 = vmatprep.subr.mxu0 0.0
    %1870 = vmatpush1.msra.mxu0 0.0
    %1871 = vmatprep.subr.mxu0 0.0
    %1872 = vmatpush1.msra.mxu0 0.0
    %1873 = vmatprep.subr.mxu0 0.0
    %1874 = vmatpush1.msra.mxu0 0.0
    %1875 = vmatprep.subr.mxu0 0.0
    %1876 = vmatpush1.msra.mxu0 0.0
    %1877 = vmatprep.subr.mxu0 0.0
    %1878 = vmatpush1.msra.mxu0 0.0
    %1879 = vmatprep.subr.mxu0 0.0
    %1880 = vmatpush1.msra.mxu0 0.0
    %1881 = vmatprep.subr.mxu0 0.0
    %1882 = vmatpush1.msra.mxu0 0.0
    %1883 = vmatprep.mubr.f32.mxu0 0.0
    %1884 = vmatmul.mubr.f32.gmra.mrb[0].mxu0 %v1336
    %v1885 = vpop.f32.mrb[0].mxu0
    %v1886 = vadd.f32 0.0, %v1885
    %v1887 = vpop.f32.mrb[0].mxu0
    %v1888 = vadd.f32 0.0, %v1887
    %1889 = vmatprep.mubr.f32.mxu0 0.0
    %1890 = vmatmul.mubr.f32.gmra.mrb[0].mxu0 %v1337
    %v1891 = vpop.f32.mrb[0].mxu0
    %v1892 = vadd.f32 0.0, %v1891
    %v1893 = vpop.f32.mrb[0].mxu0
    %v1894 = vadd.f32 0.0, %v1893
    %1895 = vmatprep.mubr.f32.mxu0 0.0
    %1896 = vmatmul.mubr.f32.gmra.mrb[0].mxu0 %v1338
    %v1897 = vpop.f32.mrb[0].mxu0
    %v1898 = vadd.f32 0.0, %v1897
    %v1899 = vpop.f32.mrb[0].mxu0
    %v1900 = vadd.f32 0.0, %v1899
    %1901 = vmatprep.mubr.f32.mxu0 0.0
    %1902 = vmatmul.mubr.f32.gmra.mrb[0].mxu0 %v1339
    %v1903 = vpop.f32.mrb[0].mxu0
    %v1904 = vadd.f32 0.0, %v1903
    %v1905 = vpop.f32.mrb[0].mxu0
    %v1906 = vadd.f32 0.0, %v1905
    %1907 = vdwg.mxu0
    %v1908 = vadd.f32 %v1662, %v1797
    %v1909 = vadd.f32 %v1663, %v1799
    %v1910 = vadd.f32 %v1664, %v1886
    %v1911 = vadd.f32 %v1665, %v1888
    %v1912 = vadd.f32 %v1662, %v1803
    %v1913 = vadd.f32 %v1663, %v1805
    %v1914 = vadd.f32 %v1664, %v1892
    %v1915 = vadd.f32 %v1665, %v1894
    %v1916 = vadd.f32 %v1662, %v1809
    %v1917 = vadd.f32 %v1663, %v1811
    %v1918 = vadd.f32 %v1664, %v1898
    %v1919 = vadd.f32 %v1665, %v1900
    %v1920 = vadd.f32 %v1662, %v1815
    %v1921 = vadd.f32 %v1663, %v1817
    %v1922 = vadd.f32 %v1664, %v1904
    %v1923 = vadd.f32 %v1665, %v1906
    %1924 = vst [vmem:[#allocation5] sm:$0xff] %v1908
    %1925 = vst [vmem:[#allocation5 + $0x8] sm:$0xff] %v1909
    %1926 = vst [vmem:[#allocation5 + $0x10] sm:$0xff] %v1910
    %1927 = vst [vmem:[#allocation5 + $0x18] sm:$0xff] %v1911
    %1928 = vst [vmem:[#allocation5 + $0x20] sm:$0xff] %v1912
    %1929 = vst [vmem:[#allocation5 + $0x28] sm:$0xff] %v1913
    %1930 = vst [vmem:[#allocation5 + $0x30] sm:$0xff] %v1914
    %1931 = vst [vmem:[#allocation5 + $0x38] sm:$0xff] %v1915
    %1932 = vst [vmem:[#allocation5 + $0x40] sm:$0xff] %v1916
    %1933 = vst [vmem:[#allocation5 + $0x48] sm:$0xff] %v1917
    %1934 = vst [vmem:[#allocation5 + $0x50] sm:$0xff] %v1918
    %1935 = vst [vmem:[#allocation5 + $0x58] sm:$0xff] %v1919
    %1936 = vst [vmem:[#allocation5 + $0x60] sm:$0xff] %v1920
    %1937 = vst [vmem:[#allocation5 + $0x68] sm:$0xff] %v1921
    %1938 = vst [vmem:[#allocation5 + $0x70] sm:$0xff] %v1922
    %1939 = vst [vmem:[#allocation5 + $0x78] sm:$0xff] %v1923
    loop: start=0, step=1, limit=16
    $region126: #{forward.1} parent=1 // loop_pre_header
      _
    $region127: #{forward.1} parent=1 // loop_header
      %s1941 = sphi 0, %s1945
      %p1942 = scmp.ge.s32.totalorder %s1941, 16
      %v1946 = vphi 0.0, %v2290
      %v1947 = vphi 0.0, %v2291
      %v1948 = vphi 0.0, %v2286
      %v1949 = vphi 0.0, %v2287
      %v1950 = vphi 0.0, %v2632
      %v1951 = vphi 0.0, %v2633
      %v1952 = vphi 0.0, %v2628
      %v1953 = vphi 0.0, %v2629
    $region128: #{forward.1} parent=1 // loop_header_branch
      %1944 = sbr.rel (%p1942) target = $region132
    $region129: #{forward.1} parent=1 // loop_body
      %s1954 = sshra.s32 %s1941, 3
      %s1955 = sand.u32 %s1941, 7
      %s1956 = sshra.s32 %s1941, 3
      %s1957 = sand.u32 %s1941, 7
      %s1958 = smul.u32 %s1954, 4
      %s1959 = smul.u32 %s1958, 8
      %s1960 = sadd.s32 %s1959, %s1957
      %s1961 = scalar_lea.vmem [#allocation4], %s1960
      %v1962 = vld [vmem:[%s1961] ss:$8 sm:$0xf]
      %s1963 = sadd.s32 64, %s1960
      %s1964 = scalar_lea.vmem [#allocation4], %s1963
      %v1965 = vld [vmem:[%s1964] ss:$8 sm:$0xf]
      %v1966 = vld [vmem:[#allocation14] sm:$0xff]
      %v1967 = vld [vmem:[#allocation14 + $0x8] sm:$0xff]
      %v1968 = vld [vmem:[#allocation14 + $0x10] sm:$0xff]
      %v1969 = vld [vmem:[#allocation14 + $0x18] sm:$0xff]
      %v1970 = vld [vmem:[#allocation14 + $0x20] sm:$0xff]
      %v1971 = vld [vmem:[#allocation14 + $0x28] sm:$0xff]
      %v1972 = vld [vmem:[#allocation14 + $0x30] sm:$0xff]
      %v1973 = vld [vmem:[#allocation14 + $0x38] sm:$0xff]
      %v1974 = vld [vmem:[#allocation14 + $0x40] sm:$0xff]
      %v1975 = vld [vmem:[#allocation14 + $0x48] sm:$0xff]
      %v1976 = vld [vmem:[#allocation14 + $0x50] sm:$0xff]
      %v1977 = vld [vmem:[#allocation14 + $0x58] sm:$0xff]
      %v1978 = vld [vmem:[#allocation14 + $0x60] sm:$0xff]
      %v1979 = vld [vmem:[#allocation14 + $0x68] sm:$0xff]
      %v1980 = vld [vmem:[#allocation14 + $0x70] sm:$0xff]
      %v1981 = vld [vmem:[#allocation14 + $0x78] sm:$0xff]
      %v1982 = vld [vmem:[#allocation14 + $0x80] sm:$0xff]
      %v1983 = vld [vmem:[#allocation14 + $0x88] sm:$0xff]
      %v1984 = vld [vmem:[#allocation14 + $0x90] sm:$0xff]
      %v1985 = vld [vmem:[#allocation14 + $0x98] sm:$0xff]
      %v1986 = vld [vmem:[#allocation14 + $0xa0] sm:$0xff]
      %v1987 = vld [vmem:[#allocation14 + $0xa8] sm:$0xff]
      %v1988 = vld [vmem:[#allocation14 + $0xb0] sm:$0xff]
      %v1989 = vld [vmem:[#allocation14 + $0xb8] sm:$0xff]
      %v1990 = vld [vmem:[#allocation14 + $0xc0] sm:$0xff]
      %v1991 = vld [vmem:[#allocation14 + $0xc8] sm:$0xff]
      %v1992 = vld [vmem:[#allocation14 + $0xd0] sm:$0xff]
      %v1993 = vld [vmem:[#allocation14 + $0xd8] sm:$0xff]
      %v1994 = vld [vmem:[#allocation14 + $0xe0] sm:$0xff]
      %v1995 = vld [vmem:[#allocation14 + $0xe8] sm:$0xff]
      %v1996 = vld [vmem:[#allocation14 + $0xf0] sm:$0xff]
      %v1997 = vld [vmem:[#allocation14 + $0xf8] sm:$0xff]
      %v1998 = vld [vmem:[#allocation14 + $0x100] sm:$0xff]
      %v1999 = vld [vmem:[#allocation14 + $0x108] sm:$0xff]
      %v2000 = vld [vmem:[#allocation14 + $0x110] sm:$0xff]
      %v2001 = vld [vmem:[#allocation14 + $0x118] sm:$0xff]
      %v2002 = vld [vmem:[#allocation14 + $0x120] sm:$0xff]
      %v2003 = vld [vmem:[#allocation14 + $0x128] sm:$0xff]
      %v2004 = vld [vmem:[#allocation14 + $0x130] sm:$0xff]
      %v2005 = vld [vmem:[#allocation14 + $0x138] sm:$0xff]
      %v2006 = vld [vmem:[#allocation14 + $0x140] sm:$0xff]
      %v2007 = vld [vmem:[#allocation14 + $0x148] sm:$0xff]
      %v2008 = vld [vmem:[#allocation14 + $0x150] sm:$0xff]
      %v2009 = vld [vmem:[#allocation14 + $0x158] sm:$0xff]
      %v2010 = vld [vmem:[#allocation14 + $0x160] sm:$0xff]
      %v2011 = vld [vmem:[#allocation14 + $0x168] sm:$0xff]
      %v2012 = vld [vmem:[#allocation14 + $0x170] sm:$0xff]
      %v2013 = vld [vmem:[#allocation14 + $0x178] sm:$0xff]
      %v2014 = vld [vmem:[#allocation14 + $0x180] sm:$0xff]
      %v2015 = vld [vmem:[#allocation14 + $0x188] sm:$0xff]
      %v2016 = vld [vmem:[#allocation14 + $0x190] sm:$0xff]
      %v2017 = vld [vmem:[#allocation14 + $0x198] sm:$0xff]
      %v2018 = vld [vmem:[#allocation14 + $0x1a0] sm:$0xff]
      %v2019 = vld [vmem:[#allocation14 + $0x1a8] sm:$0xff]
      %v2020 = vld [vmem:[#allocation14 + $0x1b0] sm:$0xff]
      %v2021 = vld [vmem:[#allocation14 + $0x1b8] sm:$0xff]
      %v2022 = vld [vmem:[#allocation14 + $0x1c0] sm:$0xff]
      %v2023 = vld [vmem:[#allocation14 + $0x1c8] sm:$0xff]
      %v2024 = vld [vmem:[#allocation14 + $0x1d0] sm:$0xff]
      %v2025 = vld [vmem:[#allocation14 + $0x1d8] sm:$0xff]
      %v2026 = vld [vmem:[#allocation14 + $0x1e0] sm:$0xff]
      %v2027 = vld [vmem:[#allocation14 + $0x1e8] sm:$0xff]
      %v2028 = vld [vmem:[#allocation14 + $0x1f0] sm:$0xff]
      %v2029 = vld [vmem:[#allocation14 + $0x1f8] sm:$0xff]
      %v2032 = vcombine.low %v1946, %v1947
      %v2034 = vunpack.c.l.s4 1966171168
      %v2035 = vunpack.c.0.s8 %v2034
      %v2036 = vlaneseq
      %v2037 = vshrl.u32 %v2036, 7
      %v2038 = vsub.s32 %v2035, %v2037
      %v2039 = vrot.slane %v2032, %v2038
      %v2041 = vunpack.c.l.s4 1966171168
      %v2042 = vunpack.c.0.s8 %v2041
      %v2043 = vlaneseq
      %v2044 = vshrl.u32 %v2043, 7
      %v2045 = vsub.s32 %v2042, %v2044
      %v2046 = vrot.slane %v2039, %v2045
      %2048 = vmatprep.subr.mxu0 %v1967
      %2049 = vmatpush1.msra.mxu0 %v1966
      %2050 = vmatprep.subr.mxu0 %v1971
      %2051 = vmatpush1.msra.mxu0 %v1970
      %2052 = vmatprep.subr.mxu0 %v1975
      %2053 = vmatpush1.msra.mxu0 %v1974
      %2054 = vmatprep.subr.mxu0 %v1979
      %2055 = vmatpush1.msra.mxu0 %v1978
      %2056 = vmatprep.subr.mxu0 %v1983
      %2057 = vmatpush1.msra.mxu0 %v1982
      %2058 = vmatprep.subr.mxu0 %v1987
      %2059 = vmatpush1.msra.mxu0 %v1986
      %2060 = vmatprep.subr.mxu0 %v1991
      %2061 = vmatpush1.msra.mxu0 %v1990
      %2062 = vmatprep.subr.mxu0 %v1995
      %2063 = vmatpush1.msra.mxu0 %v1994
      %2064 = vmatprep.subr.mxu0 %v1999
      %2065 = vmatpush1.msra.mxu0 %v1998
      %2066 = vmatprep.subr.mxu0 %v2003
      %2067 = vmatpush1.msra.mxu0 %v2002
      %2068 = vmatprep.subr.mxu0 %v2007
      %2069 = vmatpush1.msra.mxu0 %v2006
      %2070 = vmatprep.subr.mxu0 %v2011
      %2071 = vmatpush1.msra.mxu0 %v2010
      %2072 = vmatprep.subr.mxu0 %v2015
      %2073 = vmatpush1.msra.mxu0 %v2014
      %2074 = vmatprep.subr.mxu0 %v2019
      %2075 = vmatpush1.msra.mxu0 %v2018
      %2076 = vmatprep.subr.mxu0 %v2023
      %2077 = vmatpush1.msra.mxu0 %v2022
      %2078 = vmatprep.subr.mxu0 %v2027
      %2079 = vmatpush1.msra.mxu0 %v2026
      %2080 = vmatprep.subr.mxu0 0.0
      %2081 = vmatpush1.msra.mxu0 0.0
      %2082 = vmatprep.subr.mxu0 0.0
      %2083 = vmatpush1.msra.mxu0 0.0
      %2084 = vmatprep.subr.mxu0 0.0
      %2085 = vmatpush1.msra.mxu0 0.0
      %2086 = vmatprep.subr.mxu0 0.0
      %2087 = vmatpush1.msra.mxu0 0.0
      %2088 = vmatprep.subr.mxu0 0.0
      %2089 = vmatpush1.msra.mxu0 0.0
      %2090 = vmatprep.subr.mxu0 0.0
      %2091 = vmatpush1.msra.mxu0 0.0
      %2092 = vmatprep.subr.mxu0 0.0
      %2093 = vmatpush1.msra.mxu0 0.0
      %2094 = vmatprep.subr.mxu0 0.0
      %2095 = vmatpush1.msra.mxu0 0.0
      %2096 = vmatprep.subr.mxu0 0.0
      %2097 = vmatpush1.msra.mxu0 0.0
      %2098 = vmatprep.subr.mxu0 0.0
      %2099 = vmatpush1.msra.mxu0 0.0
      %2100 = vmatprep.subr.mxu0 0.0
      %2101 = vmatpush1.msra.mxu0 0.0
      %2102 = vmatprep.subr.mxu0 0.0
      %2103 = vmatpush1.msra.mxu0 0.0
      %2104 = vmatprep.subr.mxu0 0.0
      %2105 = vmatpush1.msra.mxu0 0.0
      %2106 = vmatprep.subr.mxu0 0.0
      %2107 = vmatpush1.msra.mxu0 0.0
      %2108 = vmatprep.subr.mxu0 0.0
      %2109 = vmatpush1.msra.mxu0 0.0
      %2110 = vmatprep.subr.mxu0 0.0
      %2111 = vmatpush1.msra.mxu0 0.0
      %2112 = vmatprep.mubr.f32.mxu0 0.0
      %2113 = vmatmul.mubr.f32.gmra.mrb[0].mxu0 %v2046
      %v2114 = vpop.f32.mrb[0].mxu0
      %v2115 = vadd.f32 0.0, %v2114
      %v2116 = vpop.f32.mrb[0].mxu0
      %v2117 = vadd.f32 0.0, %v2116
      %2118 = vdwg.mxu0
      %2119 = vmatprep.subr.mxu0 %v1969
      %2120 = vmatpush1.msra.mxu0 %v1968
      %2121 = vmatprep.subr.mxu0 %v1973
      %2122 = vmatpush1.msra.mxu0 %v1972
      %2123 = vmatprep.subr.mxu0 %v1977
      %2124 = vmatpush1.msra.mxu0 %v1976
      %2125 = vmatprep.subr.mxu0 %v1981
      %2126 = vmatpush1.msra.mxu0 %v1980
      %2127 = vmatprep.subr.mxu0 %v1985
      %2128 = vmatpush1.msra.mxu0 %v1984
      %2129 = vmatprep.subr.mxu0 %v1989
      %2130 = vmatpush1.msra.mxu0 %v1988
      %2131 = vmatprep.subr.mxu0 %v1993
      %2132 = vmatpush1.msra.mxu0 %v1992
      %2133 = vmatprep.subr.mxu0 %v1997
      %2134 = vmatpush1.msra.mxu0 %v1996
      %2135 = vmatprep.subr.mxu0 %v2001
      %2136 = vmatpush1.msra.mxu0 %v2000
      %2137 = vmatprep.subr.mxu0 %v2005
      %2138 = vmatpush1.msra.mxu0 %v2004
      %2139 = vmatprep.subr.mxu0 %v2009
      %2140 = vmatpush1.msra.mxu0 %v2008
      %2141 = vmatprep.subr.mxu0 %v2013
      %2142 = vmatpush1.msra.mxu0 %v2012
      %2143 = vmatprep.subr.mxu0 %v2017
      %2144 = vmatpush1.msra.mxu0 %v2016
      %2145 = vmatprep.subr.mxu0 %v2021
      %2146 = vmatpush1.msra.mxu0 %v2020
      %2147 = vmatprep.subr.mxu0 %v2025
      %2148 = vmatpush1.msra.mxu0 %v2024
      %2149 = vmatprep.subr.mxu0 %v2029
      %2150 = vmatpush1.msra.mxu0 %v2028
      %2151 = vmatprep.subr.mxu0 0.0
      %2152 = vmatpush1.msra.mxu0 0.0
      %2153 = vmatprep.subr.mxu0 0.0
      %2154 = vmatpush1.msra.mxu0 0.0
      %2155 = vmatprep.subr.mxu0 0.0
      %2156 = vmatpush1.msra.mxu0 0.0
      %2157 = vmatprep.subr.mxu0 0.0
      %2158 = vmatpush1.msra.mxu0 0.0
      %2159 = vmatprep.subr.mxu0 0.0
      %2160 = vmatpush1.msra.mxu0 0.0
      %2161 = vmatprep.subr.mxu0 0.0
      %2162 = vmatpush1.msra.mxu0 0.0
      %2163 = vmatprep.subr.mxu0 0.0
      %2164 = vmatpush1.msra.mxu0 0.0
      %2165 = vmatprep.subr.mxu0 0.0
      %2166 = vmatpush1.msra.mxu0 0.0
      %2167 = vmatprep.subr.mxu0 0.0
      %2168 = vmatpush1.msra.mxu0 0.0
      %2169 = vmatprep.subr.mxu0 0.0
      %2170 = vmatpush1.msra.mxu0 0.0
      %2171 = vmatprep.subr.mxu0 0.0
      %2172 = vmatpush1.msra.mxu0 0.0
      %2173 = vmatprep.subr.mxu0 0.0
      %2174 = vmatpush1.msra.mxu0 0.0
      %2175 = vmatprep.subr.mxu0 0.0
      %2176 = vmatpush1.msra.mxu0 0.0
      %2177 = vmatprep.subr.mxu0 0.0
      %2178 = vmatpush1.msra.mxu0 0.0
      %2179 = vmatprep.subr.mxu0 0.0
      %2180 = vmatpush1.msra.mxu0 0.0
      %2181 = vmatprep.subr.mxu0 0.0
      %2182 = vmatpush1.msra.mxu0 0.0
      %2183 = vmatprep.mubr.f32.mxu0 0.0
      %2184 = vmatmul.mubr.f32.gmra.mrb[0].mxu0 %v2046
      %v2185 = vpop.f32.mrb[0].mxu0
      %v2186 = vadd.f32 0.0, %v2185
      %v2187 = vpop.f32.mrb[0].mxu0
      %v2188 = vadd.f32 0.0, %v2187
      %2189 = vdwg.mxu0
      %v2194 = vcombine.low %v2115, %v2117
      %v2195 = vcombine.low %v2186, %v2188
      %v2197 = vunpack.c.l.s4 1966171168
      %v2198 = vunpack.c.0.s8 %v2197
      %v2199 = vlaneseq
      %v2200 = vshrl.u32 %v2199, 7
      %v2201 = vsub.s32 %v2198, %v2200
      %v2202 = vrot.slane %v2194, %v2201
      %v2204 = vunpack.c.l.s4 1966171168
      %v2205 = vunpack.c.0.s8 %v2204
      %v2206 = vlaneseq
      %v2207 = vshrl.u32 %v2206, 7
      %v2208 = vsub.s32 %v2205, %v2207
      %v2209 = vrot.slane %v2195, %v2208
      %v2210 = vcombine.low %v2202, %v2209
      %v2211 = vcombine.high %v2202, %v2209
      %v2213 = vunpack.c.l.s4 1966171168
      %v2214 = vunpack.c.0.s8 %v2213
      %v2215 = vlaneseq
      %v2216 = vshrl.u32 %v2215, 7
      %v2217 = vsub.s32 %v2214, %v2216
      %v2218 = vrot.slane %v2210, %v2217
      %v2220 = vunpack.c.l.s4 1966171168
      %v2221 = vunpack.c.0.s8 %v2220
      %v2222 = vlaneseq
      %v2223 = vshrl.u32 %v2222, 7
      %v2224 = vsub.s32 %v2221, %v2223
      %v2225 = vrot.slane %v2211, %v2224
      %v2228 = vadd.f32 %v1962, %v2218
      %v2229 = vadd.f32 %v1965, %v2225
      %v2230 = vxor.u32 %v2228, 2147483648
      %v2231 = vxor.u32 %v2229, 2147483648
      %v2232 = vmul.f32 %v2230, 1.442695
      %v2233 = vpow.pop %v2232
      %v2234 = vmul.f32 %v2231, 1.442695
      %v2235 = vpow.pop %v2234
      %v2236 = vadd.f32 %v2233, 1.0
      %v2237 = vadd.f32 %v2235, 1.0
      %v2238 = vrcp.pop %v2236
      %v2239 = vmul.f32 1.0, %v2238
      %v2240 = vrcp.pop %v2237
      %v2241 = vmul.f32 1.0, %v2240
      %v2244 = vrot.slane %v2228, 1
      %v2245 = vrot.slane %v2229, 1
      %v2248 = vxor.u32 %v2244, 2147483648
      %v2249 = vxor.u32 %v2245, 2147483648
      %v2250 = vmul.f32 %v2248, 1.442695
      %v2251 = vpow.pop %v2250
      %v2252 = vmul.f32 %v2249, 1.442695
      %v2253 = vpow.pop %v2252
      %v2254 = vadd.f32 %v2251, 1.0
      %v2255 = vadd.f32 %v2253, 1.0
      %v2256 = vrcp.pop %v2254
      %v2257 = vmul.f32 1.0, %v2256
      %v2258 = vrcp.pop %v2255
      %v2259 = vmul.f32 1.0, %v2258
      %v2260 = vrot.slane %v2228, 2
      %v2261 = vrot.slane %v2229, 2
      %v2264 = vtanh.pop %v2260
      %v2265 = vtanh.pop %v2261
      %v2266 = vrot.slane %v2228, 3
      %v2267 = vrot.slane %v2229, 3
      %v2270 = vxor.u32 %v2266, 2147483648
      %v2271 = vxor.u32 %v2267, 2147483648
      %v2272 = vmul.f32 %v2270, 1.442695
      %v2273 = vpow.pop %v2272
      %v2274 = vmul.f32 %v2271, 1.442695
      %v2275 = vpow.pop %v2274
      %v2276 = vadd.f32 %v2273, 1.0
      %v2277 = vadd.f32 %v2275, 1.0
      %v2278 = vrcp.pop %v2276
      %v2279 = vmul.f32 1.0, %v2278
      %v2280 = vrcp.pop %v2277
      %v2281 = vmul.f32 1.0, %v2280
      %v2282 = vmul.f32 %v2257, %v1948
      %v2283 = vmul.f32 %v2259, %v1949
      %v2284 = vmul.f32 %v2239, %v2264
      %v2285 = vmul.f32 %v2241, %v2265
      %v2286 = vadd.f32 %v2282, %v2284
      %v2287 = vadd.f32 %v2283, %v2285
      %v2288 = vtanh.pop %v2286
      %v2289 = vtanh.pop %v2287
      %v2290 = vmul.f32 %v2279, %v2288
      %v2291 = vmul.f32 %v2281, %v2289
      %s2292 = scalar_lea.vmem [#allocation6], %s1941
      %2293 = vst [vmem:[%s2292] sm:$0x1] %v2290
      %2294 = vst [vmem:[%s2292 + $0x10] sm:$0x1] %v2291
      %s2295 = ssub.s32 15, %s1941
      %s2296 = sshra.s32 %s2295, 3
      %s2297 = sand.u32 %s2295, 7
      %s2298 = sshra.s32 %s2295, 3
      %s2299 = sand.u32 %s2295, 7
      %s2300 = smul.u32 %s2296, 4
      %s2301 = smul.u32 %s2300, 8
      %s2302 = sadd.s32 %s2301, %s2299
      %s2303 = scalar_lea.vmem [#allocation5], %s2302
      %v2304 = vld [vmem:[%s2303] ss:$8 sm:$0xf]
      %s2305 = sadd.s32 64, %s2302
      %s2306 = scalar_lea.vmem [#allocation5], %s2305
      %v2307 = vld [vmem:[%s2306] ss:$8 sm:$0xf]
      %v2308 = vld [vmem:[#allocation17] sm:$0xff]
      %v2309 = vld [vmem:[#allocation17 + $0x8] sm:$0xff]
      %v2310 = vld [vmem:[#allocation17 + $0x10] sm:$0xff]
      %v2311 = vld [vmem:[#allocation17 + $0x18] sm:$0xff]
      %v2312 = vld [vmem:[#allocation17 + $0x20] sm:$0xff]
      %v2313 = vld [vmem:[#allocation17 + $0x28] sm:$0xff]
      %v2314 = vld [vmem:[#allocation17 + $0x30] sm:$0xff]
      %v2315 = vld [vmem:[#allocation17 + $0x38] sm:$0xff]
      %v2316 = vld [vmem:[#allocation17 + $0x40] sm:$0xff]
      %v2317 = vld [vmem:[#allocation17 + $0x48] sm:$0xff]
      %v2318 = vld [vmem:[#allocation17 + $0x50] sm:$0xff]
      %v2319 = vld [vmem:[#allocation17 + $0x58] sm:$0xff]
      %v2320 = vld [vmem:[#allocation17 + $0x60] sm:$0xff]
      %v2321 = vld [vmem:[#allocation17 + $0x68] sm:$0xff]
      %v2322 = vld [vmem:[#allocation17 + $0x70] sm:$0xff]
      %v2323 = vld [vmem:[#allocation17 + $0x78] sm:$0xff]
      %v2324 = vld [vmem:[#allocation17 + $0x80] sm:$0xff]
      %v2325 = vld [vmem:[#allocation17 + $0x88] sm:$0xff]
      %v2326 = vld [vmem:[#allocation17 + $0x90] sm:$0xff]
      %v2327 = vld [vmem:[#allocation17 + $0x98] sm:$0xff]
      %v2328 = vld [vmem:[#allocation17 + $0xa0] sm:$0xff]
      %v2329 = vld [vmem:[#allocation17 + $0xa8] sm:$0xff]
      %v2330 = vld [vmem:[#allocation17 + $0xb0] sm:$0xff]
      %v2331 = vld [vmem:[#allocation17 + $0xb8] sm:$0xff]
      %v2332 = vld [vmem:[#allocation17 + $0xc0] sm:$0xff]
      %v2333 = vld [vmem:[#allocation17 + $0xc8] sm:$0xff]
      %v2334 = vld [vmem:[#allocation17 + $0xd0] sm:$0xff]
      %v2335 = vld [vmem:[#allocation17 + $0xd8] sm:$0xff]
      %v2336 = vld [vmem:[#allocation17 + $0xe0] sm:$0xff]
      %v2337 = vld [vmem:[#allocation17 + $0xe8] sm:$0xff]
      %v2338 = vld [vmem:[#allocation17 + $0xf0] sm:$0xff]
      %v2339 = vld [vmem:[#allocation17 + $0xf8] sm:$0xff]
      %v2340 = vld [vmem:[#allocation17 + $0x100] sm:$0xff]
      %v2341 = vld [vmem:[#allocation17 + $0x108] sm:$0xff]
      %v2342 = vld [vmem:[#allocation17 + $0x110] sm:$0xff]
      %v2343 = vld [vmem:[#allocation17 + $0x118] sm:$0xff]
      %v2344 = vld [vmem:[#allocation17 + $0x120] sm:$0xff]
      %v2345 = vld [vmem:[#allocation17 + $0x128] sm:$0xff]
      %v2346 = vld [vmem:[#allocation17 + $0x130] sm:$0xff]
      %v2347 = vld [vmem:[#allocation17 + $0x138] sm:$0xff]
      %v2348 = vld [vmem:[#allocation17 + $0x140] sm:$0xff]
      %v2349 = vld [vmem:[#allocation17 + $0x148] sm:$0xff]
      %v2350 = vld [vmem:[#allocation17 + $0x150] sm:$0xff]
      %v2351 = vld [vmem:[#allocation17 + $0x158] sm:$0xff]
      %v2352 = vld [vmem:[#allocation17 + $0x160] sm:$0xff]
      %v2353 = vld [vmem:[#allocation17 + $0x168] sm:$0xff]
      %v2354 = vld [vmem:[#allocation17 + $0x170] sm:$0xff]
      %v2355 = vld [vmem:[#allocation17 + $0x178] sm:$0xff]
      %v2356 = vld [vmem:[#allocation17 + $0x180] sm:$0xff]
      %v2357 = vld [vmem:[#allocation17 + $0x188] sm:$0xff]
      %v2358 = vld [vmem:[#allocation17 + $0x190] sm:$0xff]
      %v2359 = vld [vmem:[#allocation17 + $0x198] sm:$0xff]
      %v2360 = vld [vmem:[#allocation17 + $0x1a0] sm:$0xff]
      %v2361 = vld [vmem:[#allocation17 + $0x1a8] sm:$0xff]
      %v2362 = vld [vmem:[#allocation17 + $0x1b0] sm:$0xff]
      %v2363 = vld [vmem:[#allocation17 + $0x1b8] sm:$0xff]
      %v2364 = vld [vmem:[#allocation17 + $0x1c0] sm:$0xff]
      %v2365 = vld [vmem:[#allocation17 + $0x1c8] sm:$0xff]
      %v2366 = vld [vmem:[#allocation17 + $0x1d0] sm:$0xff]
      %v2367 = vld [vmem:[#allocation17 + $0x1d8] sm:$0xff]
      %v2368 = vld [vmem:[#allocation17 + $0x1e0] sm:$0xff]
      %v2369 = vld [vmem:[#allocation17 + $0x1e8] sm:$0xff]
      %v2370 = vld [vmem:[#allocation17 + $0x1f0] sm:$0xff]
      %v2371 = vld [vmem:[#allocation17 + $0x1f8] sm:$0xff]
      %v2374 = vcombine.low %v1950, %v1951
      %v2376 = vunpack.c.l.s4 1966171168
      %v2377 = vunpack.c.0.s8 %v2376
      %v2378 = vlaneseq
      %v2379 = vshrl.u32 %v2378, 7
      %v2380 = vsub.s32 %v2377, %v2379
      %v2381 = vrot.slane %v2374, %v2380
      %v2383 = vunpack.c.l.s4 1966171168
      %v2384 = vunpack.c.0.s8 %v2383
      %v2385 = vlaneseq
      %v2386 = vshrl.u32 %v2385, 7
      %v2387 = vsub.s32 %v2384, %v2386
      %v2388 = vrot.slane %v2381, %v2387
      %2390 = vmatprep.subr.mxu0 %v2309
      %2391 = vmatpush1.msra.mxu0 %v2308
      %2392 = vmatprep.subr.mxu0 %v2313
      %2393 = vmatpush1.msra.mxu0 %v2312
      %2394 = vmatprep.subr.mxu0 %v2317
      %2395 = vmatpush1.msra.mxu0 %v2316
      %2396 = vmatprep.subr.mxu0 %v2321
      %2397 = vmatpush1.msra.mxu0 %v2320
      %2398 = vmatprep.subr.mxu0 %v2325
      %2399 = vmatpush1.msra.mxu0 %v2324
      %2400 = vmatprep.subr.mxu0 %v2329
      %2401 = vmatpush1.msra.mxu0 %v2328
      %2402 = vmatprep.subr.mxu0 %v2333
      %2403 = vmatpush1.msra.mxu0 %v2332
      %2404 = vmatprep.subr.mxu0 %v2337
      %2405 = vmatpush1.msra.mxu0 %v2336
      %2406 = vmatprep.subr.mxu0 %v2341
      %2407 = vmatpush1.msra.mxu0 %v2340
      %2408 = vmatprep.subr.mxu0 %v2345
      %2409 = vmatpush1.msra.mxu0 %v2344
      %2410 = vmatprep.subr.mxu0 %v2349
      %2411 = vmatpush1.msra.mxu0 %v2348
      %2412 = vmatprep.subr.mxu0 %v2353
      %2413 = vmatpush1.msra.mxu0 %v2352
      %2414 = vmatprep.subr.mxu0 %v2357
      %2415 = vmatpush1.msra.mxu0 %v2356
      %2416 = vmatprep.subr.mxu0 %v2361
      %2417 = vmatpush1.msra.mxu0 %v2360
      %2418 = vmatprep.subr.mxu0 %v2365
      %2419 = vmatpush1.msra.mxu0 %v2364
      %2420 = vmatprep.subr.mxu0 %v2369
      %2421 = vmatpush1.msra.mxu0 %v2368
      %2422 = vmatprep.subr.mxu0 0.0
      %2423 = vmatpush1.msra.mxu0 0.0
      %2424 = vmatprep.subr.mxu0 0.0
      %2425 = vmatpush1.msra.mxu0 0.0
      %2426 = vmatprep.subr.mxu0 0.0
      %2427 = vmatpush1.msra.mxu0 0.0
      %2428 = vmatprep.subr.mxu0 0.0
      %2429 = vmatpush1.msra.mxu0 0.0
      %2430 = vmatprep.subr.mxu0 0.0
      %2431 = vmatpush1.msra.mxu0 0.0
      %2432 = vmatprep.subr.mxu0 0.0
      %2433 = vmatpush1.msra.mxu0 0.0
      %2434 = vmatprep.subr.mxu0 0.0
      %2435 = vmatpush1.msra.mxu0 0.0
      %2436 = vmatprep.subr.mxu0 0.0
      %2437 = vmatpush1.msra.mxu0 0.0
      %2438 = vmatprep.subr.mxu0 0.0
      %2439 = vmatpush1.msra.mxu0 0.0
      %2440 = vmatprep.subr.mxu0 0.0
      %2441 = vmatpush1.msra.mxu0 0.0
      %2442 = vmatprep.subr.mxu0 0.0
      %2443 = vmatpush1.msra.mxu0 0.0
      %2444 = vmatprep.subr.mxu0 0.0
      %2445 = vmatpush1.msra.mxu0 0.0
      %2446 = vmatprep.subr.mxu0 0.0
      %2447 = vmatpush1.msra.mxu0 0.0
      %2448 = vmatprep.subr.mxu0 0.0
      %2449 = vmatpush1.msra.mxu0 0.0
      %2450 = vmatprep.subr.mxu0 0.0
      %2451 = vmatpush1.msra.mxu0 0.0
      %2452 = vmatprep.subr.mxu0 0.0
      %2453 = vmatpush1.msra.mxu0 0.0
      %2454 = vmatprep.mubr.f32.mxu0 0.0
      %2455 = vmatmul.mubr.f32.gmra.mrb[0].mxu0 %v2388
      %v2456 = vpop.f32.mrb[0].mxu0
      %v2457 = vadd.f32 0.0, %v2456
      %v2458 = vpop.f32.mrb[0].mxu0
      %v2459 = vadd.f32 0.0, %v2458
      %2460 = vdwg.mxu0
      %2461 = vmatprep.subr.mxu0 %v2311
      %2462 = vmatpush1.msra.mxu0 %v2310
      %2463 = vmatprep.subr.mxu0 %v2315
      %2464 = vmatpush1.msra.mxu0 %v2314
      %2465 = vmatprep.subr.mxu0 %v2319
      %2466 = vmatpush1.msra.mxu0 %v2318
      %2467 = vmatprep.subr.mxu0 %v2323
      %2468 = vmatpush1.msra.mxu0 %v2322
      %2469 = vmatprep.subr.mxu0 %v2327
      %2470 = vmatpush1.msra.mxu0 %v2326
      %2471 = vmatprep.subr.mxu0 %v2331
      %2472 = vmatpush1.msra.mxu0 %v2330
      %2473 = vmatprep.subr.mxu0 %v2335
      %2474 = vmatpush1.msra.mxu0 %v2334
      %2475 = vmatprep.subr.mxu0 %v2339
      %2476 = vmatpush1.msra.mxu0 %v2338
      %2477 = vmatprep.subr.mxu0 %v2343
      %2478 = vmatpush1.msra.mxu0 %v2342
      %2479 = vmatprep.subr.mxu0 %v2347
      %2480 = vmatpush1.msra.mxu0 %v2346
      %2481 = vmatprep.subr.mxu0 %v2351
      %2482 = vmatpush1.msra.mxu0 %v2350
      %2483 = vmatprep.subr.mxu0 %v2355
      %2484 = vmatpush1.msra.mxu0 %v2354
      %2485 = vmatprep.subr.mxu0 %v2359
      %2486 = vmatpush1.msra.mxu0 %v2358
      %2487 = vmatprep.subr.mxu0 %v2363
      %2488 = vmatpush1.msra.mxu0 %v2362
      %2489 = vmatprep.subr.mxu0 %v2367
      %2490 = vmatpush1.msra.mxu0 %v2366
      %2491 = vmatprep.subr.mxu0 %v2371
      %2492 = vmatpush1.msra.mxu0 %v2370
      %2493 = vmatprep.subr.mxu0 0.0
      %2494 = vmatpush1.msra.mxu0 0.0
      %2495 = vmatprep.subr.mxu0 0.0
      %2496 = vmatpush1.msra.mxu0 0.0
      %2497 = vmatprep.subr.mxu0 0.0
      %2498 = vmatpush1.msra.mxu0 0.0
      %2499 = vmatprep.subr.mxu0 0.0
      %2500 = vmatpush1.msra.mxu0 0.0
      %2501 = vmatprep.subr.mxu0 0.0
      %2502 = vmatpush1.msra.mxu0 0.0
      %2503 = vmatprep.subr.mxu0 0.0
      %2504 = vmatpush1.msra.mxu0 0.0
      %2505 = vmatprep.subr.mxu0 0.0
      %2506 = vmatpush1.msra.mxu0 0.0
      %2507 = vmatprep.subr.mxu0 0.0
      %2508 = vmatpush1.msra.mxu0 0.0
      %2509 = vmatprep.subr.mxu0 0.0
      %2510 = vmatpush1.msra.mxu0 0.0
      %2511 = vmatprep.subr.mxu0 0.0
      %2512 = vmatpush1.msra.mxu0 0.0
      %2513 = vmatprep.subr.mxu0 0.0
      %2514 = vmatpush1.msra.mxu0 0.0
      %2515 = vmatprep.subr.mxu0 0.0
      %2516 = vmatpush1.msra.mxu0 0.0
      %2517 = vmatprep.subr.mxu0 0.0
      %2518 = vmatpush1.msra.mxu0 0.0
      %2519 = vmatprep.subr.mxu0 0.0
      %2520 = vmatpush1.msra.mxu0 0.0
      %2521 = vmatprep.subr.mxu0 0.0
      %2522 = vmatpush1.msra.mxu0 0.0
      %2523 = vmatprep.subr.mxu0 0.0
      %2524 = vmatpush1.msra.mxu0 0.0
      %2525 = vmatprep.mubr.f32.mxu0 0.0
      %2526 = vmatmul.mubr.f32.gmra.mrb[0].mxu0 %v2388
      %v2527 = vpop.f32.mrb[0].mxu0
      %v2528 = vadd.f32 0.0, %v2527
      %v2529 = vpop.f32.mrb[0].mxu0
      %v2530 = vadd.f32 0.0, %v2529
      %2531 = vdwg.mxu0
      %v2536 = vcombine.low %v2457, %v2459
      %v2537 = vcombine.low %v2528, %v2530
      %v2539 = vunpack.c.l.s4 1966171168
      %v2540 = vunpack.c.0.s8 %v2539
      %v2541 = vlaneseq
      %v2542 = vshrl.u32 %v2541, 7
      %v2543 = vsub.s32 %v2540, %v2542
      %v2544 = vrot.slane %v2536, %v2543
      %v2546 = vunpack.c.l.s4 1966171168
      %v2547 = vunpack.c.0.s8 %v2546
      %v2548 = vlaneseq
      %v2549 = vshrl.u32 %v2548, 7
      %v2550 = vsub.s32 %v2547, %v2549
      %v2551 = vrot.slane %v2537, %v2550
      %v2552 = vcombine.low %v2544, %v2551
      %v2553 = vcombine.high %v2544, %v2551
      %v2555 = vunpack.c.l.s4 1966171168
      %v2556 = vunpack.c.0.s8 %v2555
      %v2557 = vlaneseq
      %v2558 = vshrl.u32 %v2557, 7
      %v2559 = vsub.s32 %v2556, %v2558
      %v2560 = vrot.slane %v2552, %v2559
      %v2562 = vunpack.c.l.s4 1966171168
      %v2563 = vunpack.c.0.s8 %v2562
      %v2564 = vlaneseq
      %v2565 = vshrl.u32 %v2564, 7
      %v2566 = vsub.s32 %v2563, %v2565
      %v2567 = vrot.slane %v2553, %v2566
      %v2570 = vadd.f32 %v2304, %v2560
      %v2571 = vadd.f32 %v2307, %v2567
      %v2572 = vxor.u32 %v2570, 2147483648
      %v2573 = vxor.u32 %v2571, 2147483648
      %v2574 = vmul.f32 %v2572, 1.442695
      %v2575 = vpow.pop %v2574
      %v2576 = vmul.f32 %v2573, 1.442695
      %v2577 = vpow.pop %v2576
      %v2578 = vadd.f32 %v2575, 1.0
      %v2579 = vadd.f32 %v2577, 1.0
      %v2580 = vrcp.pop %v2578
      %v2581 = vmul.f32 1.0, %v2580
      %v2582 = vrcp.pop %v2579
      %v2583 = vmul.f32 1.0, %v2582
      %v2586 = vrot.slane %v2570, 1
      %v2587 = vrot.slane %v2571, 1
      %v2590 = vxor.u32 %v2586, 2147483648
      %v2591 = vxor.u32 %v2587, 2147483648
      %v2592 = vmul.f32 %v2590, 1.442695
      %v2593 = vpow.pop %v2592
      %v2594 = vmul.f32 %v2591, 1.442695
      %v2595 = vpow.pop %v2594
      %v2596 = vadd.f32 %v2593, 1.0
      %v2597 = vadd.f32 %v2595, 1.0
      %v2598 = vrcp.pop %v2596
      %v2599 = vmul.f32 1.0, %v2598
      %v2600 = vrcp.pop %v2597
      %v2601 = vmul.f32 1.0, %v2600
      %v2602 = vrot.slane %v2570, 2
      %v2603 = vrot.slane %v2571, 2
      %v2606 = vtanh.pop %v2602
      %v2607 = vtanh.pop %v2603
      %v2608 = vrot.slane %v2570, 3
      %v2609 = vrot.slane %v2571, 3
      %v2612 = vxor.u32 %v2608, 2147483648
      %v2613 = vxor.u32 %v2609, 2147483648
      %v2614 = vmul.f32 %v2612, 1.442695
      %v2615 = vpow.pop %v2614
      %v2616 = vmul.f32 %v2613, 1.442695
      %v2617 = vpow.pop %v2616
      %v2618 = vadd.f32 %v2615, 1.0
      %v2619 = vadd.f32 %v2617, 1.0
      %v2620 = vrcp.pop %v2618
      %v2621 = vmul.f32 1.0, %v2620
      %v2622 = vrcp.pop %v2619
      %v2623 = vmul.f32 1.0, %v2622
      %v2624 = vmul.f32 %v2599, %v1952
      %v2625 = vmul.f32 %v2601, %v1953
      %v2626 = vmul.f32 %v2581, %v2606
      %v2627 = vmul.f32 %v2583, %v2607
      %v2628 = vadd.f32 %v2624, %v2626
      %v2629 = vadd.f32 %v2625, %v2627
      %v2630 = vtanh.pop %v2628
      %v2631 = vtanh.pop %v2629
      %v2632 = vmul.f32 %v2621, %v2630
      %v2633 = vmul.f32 %v2623, %v2631
      %s2634 = scalar_lea.vmem [#allocation7], %s2295
      %2635 = vst [vmem:[%s2634] sm:$0x1] %v2632
      %2636 = vst [vmem:[%s2634 + $0x10] sm:$0x1] %v2633
    $region130: #{forward.1} parent=1 // loop_footer
      %s1945 = sadd.s32 1, %s1941
    $region131: #{forward.1} parent=1 // loop_footer_branch
      %1940 = sbr.rel target = $region127
    $region132: #{forward.1} parent=1 // loop_exit
      _
    %v2637 = vld [vmem:[#allocation6] sm:$0xff]
    %v2638 = vld [vmem:[#allocation6 + $0x8] sm:$0xff]
    %v2639 = vld [vmem:[#allocation6 + $0x10] sm:$0xff]
    %v2640 = vld [vmem:[#allocation6 + $0x18] sm:$0xff]
    %v2641 = vld [vmem:[#allocation7] sm:$0xff]
    %v2642 = vld [vmem:[#allocation7 + $0x8] sm:$0xff]
    %v2643 = vld [vmem:[#allocation7 + $0x10] sm:$0xff]
    %v2644 = vld [vmem:[#allocation7 + $0x18] sm:$0xff]
    %v2645 = vld [vmem:[%s1] sm:$0xff]
    %v2646 = vld [vmem:[%s1 + $0x8] sm:$0xff]
    %v2647 = vld [vmem:[%s1 + $0x10] sm:$0xff]
    %v2648 = vld [vmem:[%s1 + $0x18] sm:$0xff]
    %v2649 = vld [vmem:[%s21] sm:$0x1]
    %v2651 = vlaneseq
    %v2652 = vshrl.u32 %v2651, 7
    %v2653 = vsub.s32 0, %v2652
    %v2654 = vrot.slane %v2649, %v2653
    %v2656 = vadd.f32 %v2654, 0.0
    %v2657 = vld [vmem:[%s18] sm:$0xff]
    %v2658 = vld [vmem:[%s18 + $0x8] sm:$0xff]
    %v2659 = vld [vmem:[%s18 + $0x10] sm:$0xff]
    %v2660 = vld [vmem:[%s18 + $0x18] sm:$0xff]
    %v2661 = vld [vmem:[%s18 + $0x20] sm:$0xff]
    %v2662 = vld [vmem:[%s18 + $0x28] sm:$0xff]
    %v2663 = vld [vmem:[%s18 + $0x30] sm:$0xff]
    %v2664 = vld [vmem:[%s18 + $0x38] sm:$0xff]
    %v2665 = vld [vmem:[%s18 + $0x40] sm:$0xff]
    %v2666 = vld [vmem:[%s18 + $0x48] sm:$0xff]
    %v2667 = vld [vmem:[%s18 + $0x50] sm:$0xff]
    %v2668 = vld [vmem:[%s18 + $0x58] sm:$0xff]
    %v2669 = vld [vmem:[%s18 + $0x60] sm:$0xff]
    %v2670 = vld [vmem:[%s18 + $0x68] sm:$0xff]
    %v2671 = vld [vmem:[%s18 + $0x70] sm:$0xff]
    %v2672 = vld [vmem:[%s18 + $0x78] sm:$0xff]
    %2673 = vmatprep.subr.mxu0 0.0
    %2674 = vmatpush1.msra.mxu0 %v2657
    %2675 = vmatprep.subr.mxu0 0.0
    %2676 = vmatpush1.msra.mxu0 %v2658
    %2677 = vmatprep.subr.mxu0 0.0
    %2678 = vmatpush1.msra.mxu0 %v2659
    %2679 = vmatprep.subr.mxu0 0.0
    %2680 = vmatpush1.msra.mxu0 %v2660
    %2681 = vmatprep.subr.mxu0 0.0
    %2682 = vmatpush1.msra.mxu0 %v2661
    %2683 = vmatprep.subr.mxu0 0.0
    %2684 = vmatpush1.msra.mxu0 %v2662
    %2685 = vmatprep.subr.mxu0 0.0
    %2686 = vmatpush1.msra.mxu0 %v2663
    %2687 = vmatprep.subr.mxu0 0.0
    %2688 = vmatpush1.msra.mxu0 %v2664
    %2689 = vmatprep.subr.mxu0 0.0
    %2690 = vmatpush1.msra.mxu0 %v2665
    %2691 = vmatprep.subr.mxu0 0.0
    %2692 = vmatpush1.msra.mxu0 %v2666
    %2693 = vmatprep.subr.mxu0 0.0
    %2694 = vmatpush1.msra.mxu0 %v2667
    %2695 = vmatprep.subr.mxu0 0.0
    %2696 = vmatpush1.msra.mxu0 %v2668
    %2697 = vmatprep.subr.mxu0 0.0
    %2698 = vmatpush1.msra.mxu0 %v2669
    %2699 = vmatprep.subr.mxu0 0.0
    %2700 = vmatpush1.msra.mxu0 %v2670
    %2701 = vmatprep.subr.mxu0 0.0
    %2702 = vmatpush1.msra.mxu0 %v2671
    %2703 = vmatprep.subr.mxu0 0.0
    %2704 = vmatpush1.msra.mxu0 %v2672
    %2705 = vmatprep.subr.mxu0 0.0
    %2706 = vmatpush1.msra.mxu0 0.0
    %2707 = vmatprep.subr.mxu0 0.0
    %2708 = vmatpush1.msra.mxu0 0.0
    %2709 = vmatprep.subr.mxu0 0.0
    %2710 = vmatpush1.msra.mxu0 0.0
    %2711 = vmatprep.subr.mxu0 0.0
    %2712 = vmatpush1.msra.mxu0 0.0
    %2713 = vmatprep.subr.mxu0 0.0
    %2714 = vmatpush1.msra.mxu0 0.0
    %2715 = vmatprep.subr.mxu0 0.0
    %2716 = vmatpush1.msra.mxu0 0.0
    %2717 = vmatprep.subr.mxu0 0.0
    %2718 = vmatpush1.msra.mxu0 0.0
    %2719 = vmatprep.subr.mxu0 0.0
    %2720 = vmatpush1.msra.mxu0 0.0
    %2721 = vmatprep.subr.mxu0 0.0
    %2722 = vmatpush1.msra.mxu0 0.0
    %2723 = vmatprep.subr.mxu0 0.0
    %2724 = vmatpush1.msra.mxu0 0.0
    %2725 = vmatprep.subr.mxu0 0.0
    %2726 = vmatpush1.msra.mxu0 0.0
    %2727 = vmatprep.subr.mxu0 0.0
    %2728 = vmatpush1.msra.mxu0 0.0
    %2729 = vmatprep.subr.mxu0 0.0
    %2730 = vmatpush1.msra.mxu0 0.0
    %2731 = vmatprep.subr.mxu0 0.0
    %2732 = vmatpush1.msra.mxu0 0.0
    %2733 = vmatprep.subr.mxu0 0.0
    %2734 = vmatpush1.msra.mxu0 0.0
    %2735 = vmatprep.subr.mxu0 0.0
    %2736 = vmatpush1.msra.mxu0 0.0
    %2737 = vmatprep.mubr.f32.mxu0 0.0
    %2738 = vmatmul.mubr.f32.gmra.mrb[0].mxu0 %v2637
    %v2739 = vpop.f32.mrb[0].mxu0
    %v2740 = vadd.f32 0.0, %v2739
    %v2741 = vpop.f32.mrb[0].mxu0
    %2742 = vmatprep.mubr.f32.mxu0 0.0
    %2743 = vmatmul.mubr.f32.gmra.mrb[0].mxu0 %v2638
    %v2744 = vpop.f32.mrb[0].mxu0
    %v2745 = vadd.f32 0.0, %v2744
    %v2746 = vpop.f32.mrb[0].mxu0
    %2747 = vmatprep.mubr.f32.mxu0 0.0
    %2748 = vmatmul.mubr.f32.gmra.mrb[0].mxu0 %v2639
    %v2749 = vpop.f32.mrb[0].mxu0
    %v2750 = vadd.f32 0.0, %v2749
    %v2751 = vpop.f32.mrb[0].mxu0
    %2752 = vmatprep.mubr.f32.mxu0 0.0
    %2753 = vmatmul.mubr.f32.gmra.mrb[0].mxu0 %v2640
    %v2754 = vpop.f32.mrb[0].mxu0
    %v2755 = vadd.f32 0.0, %v2754
    %v2756 = vpop.f32.mrb[0].mxu0
    %2757 = vdwg.mxu0
    %v2758 = vadd.f32 %v2656, %v2740
    %v2759 = vadd.f32 %v2656, %v2745
    %v2760 = vadd.f32 %v2656, %v2750
    %v2761 = vadd.f32 %v2656, %v2755
    %v2762 = vld [vmem:[%s19] sm:$0xff]
    %v2763 = vld [vmem:[%s19 + $0x8] sm:$0xff]
    %v2764 = vld [vmem:[%s19 + $0x10] sm:$0xff]
    %v2765 = vld [vmem:[%s19 + $0x18] sm:$0xff]
    %v2766 = vld [vmem:[%s19 + $0x20] sm:$0xff]
    %v2767 = vld [vmem:[%s19 + $0x28] sm:$0xff]
    %v2768 = vld [vmem:[%s19 + $0x30] sm:$0xff]
    %v2769 = vld [vmem:[%s19 + $0x38] sm:$0xff]
    %v2770 = vld [vmem:[%s19 + $0x40] sm:$0xff]
    %v2771 = vld [vmem:[%s19 + $0x48] sm:$0xff]
    %v2772 = vld [vmem:[%s19 + $0x50] sm:$0xff]
    %v2773 = vld [vmem:[%s19 + $0x58] sm:$0xff]
    %v2774 = vld [vmem:[%s19 + $0x60] sm:$0xff]
    %v2775 = vld [vmem:[%s19 + $0x68] sm:$0xff]
    %v2776 = vld [vmem:[%s19 + $0x70] sm:$0xff]
    %v2777 = vld [vmem:[%s19 + $0x78] sm:$0xff]
    %2778 = vmatprep.subr.mxu0 0.0
    %2779 = vmatpush1.msra.mxu0 %v2762
    %2780 = vmatprep.subr.mxu0 0.0
    %2781 = vmatpush1.msra.mxu0 %v2763
    %2782 = vmatprep.subr.mxu0 0.0
    %2783 = vmatpush1.msra.mxu0 %v2764
    %2784 = vmatprep.subr.mxu0 0.0
    %2785 = vmatpush1.msra.mxu0 %v2765
    %2786 = vmatprep.subr.mxu0 0.0
    %2787 = vmatpush1.msra.mxu0 %v2766
    %2788 = vmatprep.subr.mxu0 0.0
    %2789 = vmatpush1.msra.mxu0 %v2767
    %2790 = vmatprep.subr.mxu0 0.0
    %2791 = vmatpush1.msra.mxu0 %v2768
    %2792 = vmatprep.subr.mxu0 0.0
    %2793 = vmatpush1.msra.mxu0 %v2769
    %2794 = vmatprep.subr.mxu0 0.0
    %2795 = vmatpush1.msra.mxu0 %v2770
    %2796 = vmatprep.subr.mxu0 0.0
    %2797 = vmatpush1.msra.mxu0 %v2771
    %2798 = vmatprep.subr.mxu0 0.0
    %2799 = vmatpush1.msra.mxu0 %v2772
    %2800 = vmatprep.subr.mxu0 0.0
    %2801 = vmatpush1.msra.mxu0 %v2773
    %2802 = vmatprep.subr.mxu0 0.0
    %2803 = vmatpush1.msra.mxu0 %v2774
    %2804 = vmatprep.subr.mxu0 0.0
    %2805 = vmatpush1.msra.mxu0 %v2775
    %2806 = vmatprep.subr.mxu0 0.0
    %2807 = vmatpush1.msra.mxu0 %v2776
    %2808 = vmatprep.subr.mxu0 0.0
    %2809 = vmatpush1.msra.mxu0 %v2777
    %2810 = vmatprep.subr.mxu0 0.0
    %2811 = vmatpush1.msra.mxu0 0.0
    %2812 = vmatprep.subr.mxu0 0.0
    %2813 = vmatpush1.msra.mxu0 0.0
    %2814 = vmatprep.subr.mxu0 0.0
    %2815 = vmatpush1.msra.mxu0 0.0
    %2816 = vmatprep.subr.mxu0 0.0
    %2817 = vmatpush1.msra.mxu0 0.0
    %2818 = vmatprep.subr.mxu0 0.0
    %2819 = vmatpush1.msra.mxu0 0.0
    %2820 = vmatprep.subr.mxu0 0.0
    %2821 = vmatpush1.msra.mxu0 0.0
    %2822 = vmatprep.subr.mxu0 0.0
    %2823 = vmatpush1.msra.mxu0 0.0
    %2824 = vmatprep.subr.mxu0 0.0
    %2825 = vmatpush1.msra.mxu0 0.0
    %2826 = vmatprep.subr.mxu0 0.0
    %2827 = vmatpush1.msra.mxu0 0.0
    %2828 = vmatprep.subr.mxu0 0.0
    %2829 = vmatpush1.msra.mxu0 0.0
    %2830 = vmatprep.subr.mxu0 0.0
    %2831 = vmatpush1.msra.mxu0 0.0
    %2832 = vmatprep.subr.mxu0 0.0
    %2833 = vmatpush1.msra.mxu0 0.0
    %2834 = vmatprep.subr.mxu0 0.0
    %2835 = vmatpush1.msra.mxu0 0.0
    %2836 = vmatprep.subr.mxu0 0.0
    %2837 = vmatpush1.msra.mxu0 0.0
    %2838 = vmatprep.subr.mxu0 0.0
    %2839 = vmatpush1.msra.mxu0 0.0
    %2840 = vmatprep.subr.mxu0 0.0
    %2841 = vmatpush1.msra.mxu0 0.0
    %2842 = vmatprep.mubr.f32.mxu0 0.0
    %2843 = vmatmul.mubr.f32.gmra.mrb[0].mxu0 %v2641
    %v2844 = vpop.f32.mrb[0].mxu0
    %v2845 = vadd.f32 0.0, %v2844
    %v2846 = vpop.f32.mrb[0].mxu0
    %2847 = vmatprep.mubr.f32.mxu0 0.0
    %2848 = vmatmul.mubr.f32.gmra.mrb[0].mxu0 %v2642
    %v2849 = vpop.f32.mrb[0].mxu0
    %v2850 = vadd.f32 0.0, %v2849
    %v2851 = vpop.f32.mrb[0].mxu0
    %2852 = vmatprep.mubr.f32.mxu0 0.0
    %2853 = vmatmul.mubr.f32.gmra.mrb[0].mxu0 %v2643
    %v2854 = vpop.f32.mrb[0].mxu0
    %v2855 = vadd.f32 0.0, %v2854
    %v2856 = vpop.f32.mrb[0].mxu0
    %2857 = vmatprep.mubr.f32.mxu0 0.0
    %2858 = vmatmul.mubr.f32.gmra.mrb[0].mxu0 %v2644
    %v2859 = vpop.f32.mrb[0].mxu0
    %v2860 = vadd.f32 0.0, %v2859
    %v2861 = vpop.f32.mrb[0].mxu0
    %2862 = vdwg.mxu0
    %v2863 = vadd.f32 %v2758, %v2845
    %v2864 = vadd.f32 %v2759, %v2850
    %v2865 = vadd.f32 %v2760, %v2855
    %v2866 = vadd.f32 %v2761, %v2860
    %v2867 = vld [vmem:[%s20] sm:$0x7f]
    %vm2868 = vcmask 56320
    %v2870 = vsel %vm2868, %v2645, 0
    %v2873 = vsel %vm2868, %v2646, 0
    %v2876 = vsel %vm2868, %v2647, 0
    %v2879 = vsel %vm2868, %v2648, 0
    %vm2881 = vcmask 1046528
    %v2883 = vsel %vm2881, %v2867, 0
    %2885 = vmatprep.subr.mxu0 0.0
    %2886 = vmatpush1.msra.mxu0 %v2883
    %2887 = vmatprep.subr.mxu0 0.0
    %2888 = vmatpush1.msra.mxu0 0.0
    %2889 = vmatprep.subr.mxu0 0.0
    %2890 = vmatpush1.msra.mxu0 0.0
    %2891 = vmatprep.subr.mxu0 0.0
    %2892 = vmatpush1.msra.mxu0 0.0
    %2893 = vmatprep.subr.mxu0 0.0
    %2894 = vmatpush1.msra.mxu0 0.0
    %2895 = vmatprep.subr.mxu0 0.0
    %2896 = vmatpush1.msra.mxu0 0.0
    %2897 = vmatprep.subr.mxu0 0.0
    %2898 = vmatpush1.msra.mxu0 0.0
    %2899 = vmatprep.subr.mxu0 0.0
    %2900 = vmatpush1.msra.mxu0 0.0
    %2901 = vmatprep.subr.mxu0 0.0
    %2902 = vmatpush1.msra.mxu0 0.0
    %2903 = vmatprep.subr.mxu0 0.0
    %2904 = vmatpush1.msra.mxu0 0.0
    %2905 = vmatprep.subr.mxu0 0.0
    %2906 = vmatpush1.msra.mxu0 0.0
    %2907 = vmatprep.subr.mxu0 0.0
    %2908 = vmatpush1.msra.mxu0 0.0
    %2909 = vmatprep.subr.mxu0 0.0
    %2910 = vmatpush1.msra.mxu0 0.0
    %2911 = vmatprep.subr.mxu0 0.0
    %2912 = vmatpush1.msra.mxu0 0.0
    %2913 = vmatprep.subr.mxu0 0.0
    %2914 = vmatpush1.msra.mxu0 0.0
    %2915 = vmatprep.subr.mxu0 0.0
    %2916 = vmatpush1.msra.mxu0 0.0
    %2917 = vmatprep.subr.mxu0 0.0
    %2918 = vmatpush1.msra.mxu0 0.0
    %2919 = vmatprep.subr.mxu0 0.0
    %2920 = vmatpush1.msra.mxu0 0.0
    %2921 = vmatprep.subr.mxu0 0.0
    %2922 = vmatpush1.msra.mxu0 0.0
    %2923 = vmatprep.subr.mxu0 0.0
    %2924 = vmatpush1.msra.mxu0 0.0
    %2925 = vmatprep.subr.mxu0 0.0
    %2926 = vmatpush1.msra.mxu0 0.0
    %2927 = vmatprep.subr.mxu0 0.0
    %2928 = vmatpush1.msra.mxu0 0.0
    %2929 = vmatprep.subr.mxu0 0.0
    %2930 = vmatpush1.msra.mxu0 0.0
    %2931 = vmatprep.subr.mxu0 0.0
    %2932 = vmatpush1.msra.mxu0 0.0
    %2933 = vmatprep.subr.mxu0 0.0
    %2934 = vmatpush1.msra.mxu0 0.0
    %2935 = vmatprep.subr.mxu0 0.0
    %2936 = vmatpush1.msra.mxu0 0.0
    %2937 = vmatprep.subr.mxu0 0.0
    %2938 = vmatpush1.msra.mxu0 0.0
    %2939 = vmatprep.subr.mxu0 0.0
    %2940 = vmatpush1.msra.mxu0 0.0
    %2941 = vmatprep.subr.mxu0 0.0
    %2942 = vmatpush1.msra.mxu0 0.0
    %2943 = vmatprep.subr.mxu0 0.0
    %2944 = vmatpush1.msra.mxu0 0.0
    %2945 = vmatprep.subr.mxu0 0.0
    %2946 = vmatpush1.msra.mxu0 0.0
    %2947 = vmatprep.subr.mxu0 0.0
    %2948 = vmatpush1.msra.mxu0 0.0
    %2949 = vmatprep.mubr.f32.mxu0 0.0
    %2950 = vmatmul.mubr.f32.gmra.mrb[0].mxu0 %v2870
    %v2951 = vpop.f32.mrb[0].mxu0
    %v2952 = vadd.f32 0.0, %v2951
    %v2953 = vpop.f32.mrb[0].mxu0
    %2954 = vmatprep.mubr.f32.mxu0 0.0
    %2955 = vmatmul.mubr.f32.gmra.mrb[0].mxu0 %v2873
    %v2956 = vpop.f32.mrb[0].mxu0
    %v2957 = vadd.f32 0.0, %v2956
    %v2958 = vpop.f32.mrb[0].mxu0
    %2959 = vmatprep.mubr.f32.mxu0 0.0
    %2960 = vmatmul.mubr.f32.gmra.mrb[0].mxu0 %v2876
    %v2961 = vpop.f32.mrb[0].mxu0
    %v2962 = vadd.f32 0.0, %v2961
    %v2963 = vpop.f32.mrb[0].mxu0
    %2964 = vmatprep.mubr.f32.mxu0 0.0
    %2965 = vmatmul.mubr.f32.gmra.mrb[0].mxu0 %v2879
    %v2966 = vpop.f32.mrb[0].mxu0
    %v2967 = vadd.f32 0.0, %v2966
    %v2968 = vpop.f32.mrb[0].mxu0
    %2969 = vdwg.mxu0
    %v2970 = vadd.f32 %v2863, %v2952
    %v2971 = vadd.f32 %v2864, %v2957
    %v2972 = vadd.f32 %v2865, %v2962
    %v2973 = vadd.f32 %v2866, %v2967
    %v2974 = vld [vmem:[%s22] sm:$0xff]
    %v2975 = vld [vmem:[%s22 + $0x8] sm:$0xff]
    %v2976 = vld [vmem:[%s22 + $0x10] sm:$0xff]
    %v2977 = vld [vmem:[#allocation8] sm:$0x1]
    %v2979 = vlaneseq
    %v2980 = vshrl.u32 %v2979, 7
    %v2981 = vsub.s32 0, %v2980
    %v2982 = vrot.slane %v2977, %v2981
    %vm2984 = vcmask 195584
    %v2986 = vsel %vm2984, %v2970, 0
    %v2989 = vsel %vm2984, %v2971, 0
    %v2992 = vsel %vm2984, %v2972, 0
    %v2995 = vsel %vm2984, %v2973, 0
    %2997 = vmatprep.subr.mxu0 0.0
    %2998 = vmatpush1.msra.mxu0 %v2974
    %2999 = vmatprep.subr.mxu0 0.0
    %3000 = vmatpush1.msra.mxu0 %v2975
    %3001 = vmatprep.subr.mxu0 0.0
    %3002 = vmatpush1.msra.mxu0 %v2976
    %3003 = vmatprep.subr.mxu0 0.0
    %3004 = vmatpush1.msra.mxu0 0.0
    %3005 = vmatprep.subr.mxu0 0.0
    %3006 = vmatpush1.msra.mxu0 0.0
    %3007 = vmatprep.subr.mxu0 0.0
    %3008 = vmatpush1.msra.mxu0 0.0
    %3009 = vmatprep.subr.mxu0 0.0
    %3010 = vmatpush1.msra.mxu0 0.0
    %3011 = vmatprep.subr.mxu0 0.0
    %3012 = vmatpush1.msra.mxu0 0.0
    %3013 = vmatprep.subr.mxu0 0.0
    %3014 = vmatpush1.msra.mxu0 0.0
    %3015 = vmatprep.subr.mxu0 0.0
    %3016 = vmatpush1.msra.mxu0 0.0
    %3017 = vmatprep.subr.mxu0 0.0
    %3018 = vmatpush1.msra.mxu0 0.0
    %3019 = vmatprep.subr.mxu0 0.0
    %3020 = vmatpush1.msra.mxu0 0.0
    %3021 = vmatprep.subr.mxu0 0.0
    %3022 = vmatpush1.msra.mxu0 0.0
    %3023 = vmatprep.subr.mxu0 0.0
    %3024 = vmatpush1.msra.mxu0 0.0
    %3025 = vmatprep.subr.mxu0 0.0
    %3026 = vmatpush1.msra.mxu0 0.0
    %3027 = vmatprep.subr.mxu0 0.0
    %3028 = vmatpush1.msra.mxu0 0.0
    %3029 = vmatprep.subr.mxu0 0.0
    %3030 = vmatpush1.msra.mxu0 0.0
    %3031 = vmatprep.subr.mxu0 0.0
    %3032 = vmatpush1.msra.mxu0 0.0
    %3033 = vmatprep.subr.mxu0 0.0
    %3034 = vmatpush1.msra.mxu0 0.0
    %3035 = vmatprep.subr.mxu0 0.0
    %3036 = vmatpush1.msra.mxu0 0.0
    %3037 = vmatprep.subr.mxu0 0.0
    %3038 = vmatpush1.msra.mxu0 0.0
    %3039 = vmatprep.subr.mxu0 0.0
    %3040 = vmatpush1.msra.mxu0 0.0
    %3041 = vmatprep.subr.mxu0 0.0
    %3042 = vmatpush1.msra.mxu0 0.0
    %3043 = vmatprep.subr.mxu0 0.0
    %3044 = vmatpush1.msra.mxu0 0.0
    %3045 = vmatprep.subr.mxu0 0.0
    %3046 = vmatpush1.msra.mxu0 0.0
    %3047 = vmatprep.subr.mxu0 0.0
    %3048 = vmatpush1.msra.mxu0 0.0
    %3049 = vmatprep.subr.mxu0 0.0
    %3050 = vmatpush1.msra.mxu0 0.0
    %3051 = vmatprep.subr.mxu0 0.0
    %3052 = vmatpush1.msra.mxu0 0.0
    %3053 = vmatprep.subr.mxu0 0.0
    %3054 = vmatpush1.msra.mxu0 0.0
    %3055 = vmatprep.subr.mxu0 0.0
    %3056 = vmatpush1.msra.mxu0 0.0
    %3057 = vmatprep.subr.mxu0 0.0
    %3058 = vmatpush1.msra.mxu0 0.0
    %3059 = vmatprep.subr.mxu0 0.0
    %3060 = vmatpush1.msra.mxu0 0.0
    %3061 = vmatprep.mubr.f32.mxu0 0.0
    %3062 = vmatmul.mubr.f32.gmra.mrb[0].mxu0 %v2986
    %v3063 = vpop.f32.mrb[0].mxu0
    %v3064 = vadd.f32 %v2982, %v3063
    %v3065 = vpop.f32.mrb[0].mxu0
    %3066 = vmatprep.mubr.f32.mxu0 0.0
    %3067 = vmatmul.mubr.f32.gmra.mrb[0].mxu0 %v2989
    %v3068 = vpop.f32.mrb[0].mxu0
    %v3069 = vadd.f32 %v2982, %v3068
    %v3070 = vpop.f32.mrb[0].mxu0
    %3071 = vmatprep.mubr.f32.mxu0 0.0
    %3072 = vmatmul.mubr.f32.gmra.mrb[0].mxu0 %v2992
    %v3073 = vpop.f32.mrb[0].mxu0
    %v3074 = vadd.f32 %v2982, %v3073
    %v3075 = vpop.f32.mrb[0].mxu0
    %3076 = vmatprep.mubr.f32.mxu0 0.0
    %3077 = vmatmul.mubr.f32.gmra.mrb[0].mxu0 %v2995
    %v3078 = vpop.f32.mrb[0].mxu0
    %v3079 = vadd.f32 %v2982, %v3078
    %v3080 = vpop.f32.mrb[0].mxu0
    %3081 = vdwg.mxu0
    %v3082 = vld [vmem:[%s24] sm:$0xff]
    %v3083 = vld [vmem:[%s24 + $0x8] sm:$0xff]
    %3085 = vset.pattern.permute.xlu0 0
    %3086 = vperm.xlu0 %3085, %v3064
    %v3087 = vpop.permute.xlu0 %3086
    %3090 = vset.pattern.permute.xlu0 0
    %3091 = vperm.xlu0 %3090, %v3069
    %v3092 = vpop.permute.xlu0 %3091
    %v3094 = vmul.f32 %v3087, %v3082
    %v3095 = vmul.f32 %v3092, %v3083
    %vm3096 = vcmask 64512
    %v3097 = vsel %vm3096, %v3094, 0.0
    %v3098 = vsel %vm3096, %v3095, 0.0
    %v3099 = vadd.f32 %v3097, %v3098
    %v3100 = vrot.slane %v3099, 4
    %v3101 = vadd.f32 %v3099, %v3100
    %v3102 = vrot.slane %v3101, 2
    %v3103 = vadd.f32 %v3101, %v3102
    %v3104 = vrot.slane %v3103, 1
    %v3105 = vadd.f32 %v3103, %v3104
    %v3106 = vld [vmem:[%s25] sm:$0x1]
    %v3107 = vadd.f32 %v3105, %v3106
    %vm3108 = vcmask 57344
    %3109 = vst.msk [vmem:[#allocation18] sm:$0x1] %vm3108, %v3107
    %v3110 = vld [vmem:[%s24] sm:$0xff]
    %v3111 = vld [vmem:[%s24 + $0x8] sm:$0xff]
    %3113 = vset.pattern.permute.xlu0 0
    %3114 = vperm.xlu0 %3113, %v3074
    %v3115 = vpop.permute.xlu0 %3114
    %3118 = vset.pattern.permute.xlu0 0
    %3119 = vperm.xlu0 %3118, %v3079
    %v3120 = vpop.permute.xlu0 %3119
    %v3122 = vmul.f32 %v3115, %v3110
    %v3123 = vmul.f32 %v3120, %v3111
    %v3124 = vsel %vm3096, %v3122, 0.0
    %v3125 = vsel %vm3096, %v3123, 0.0
    %v3126 = vadd.f32 %v3124, %v3125
    %v3127 = vrot.slane %v3126, 4
    %v3128 = vadd.f32 %v3126, %v3127
    %v3129 = vrot.slane %v3128, 2
    %v3130 = vadd.f32 %v3128, %v3129
    %v3131 = vrot.slane %v3130, 1
    %v3132 = vadd.f32 %v3130, %v3131
    %v3133 = vld [vmem:[%s25] sm:$0x1]
    %v3134 = vadd.f32 %v3132, %v3133
    %3135 = vst.msk [vmem:[#allocation18 + $0x1] sm:$0x1] %vm3108, %v3134
    // Predicated region
    $region133: #{forward.1} parent=1 // pred_check
      _
    $region134: #{forward.1} parent=1 // pred_check_branch
      %3137 = sbr.rel (0) target = $region136
    $region135: #{forward.1} parent=1 // pred_region
      %s3139 = ssub.s32 32, 32
      %3140 = vsyncadd [#allocation11], %s3139
      %s3142 = sshll.u32 [#allocation18], 4
      %s3143 = int_to_ptr.vmem [resolvable:$true] %s3142
      %3145 = dma.vmem_to_hbm [thread:$0]  %s3143, 32, %s26, [#allocation11]
    $region136: #{forward.1} parent=1 // pred_fallthru
      _
    // Predicated region
    $region137: #{forward.1} parent=1 // pred_check
      _
    $region138: #{forward.1} parent=1 // pred_check_branch
      %3147 = sbr.rel (0) target = $region140
    $region139: #{forward.1} parent=1 // pred_region
      %3148 = dma.done [#allocation11], 32
    $region140: #{forward.1} parent=1 // pred_fallthru
      _
    %3149 = vsyncpa [#allocation10], 1
    %3150 = vsyncpa [#allocation13], 1
    %3151 = vsyncpa [#allocation16], 1
    %3152 = vsyncpa [#allocation11], 1

</llo_original>
